<compile_context>
chip_gen: v7x
topology: tpu7x:2x2x1
jax: 0.10.0
libtpu: 0.0.40
codegen_flags: <defaults>
</compile_context>

<pallas_src>
import functools

import jax
import jax.numpy as jnp
from jax import lax
from jax.experimental import pallas as pl
from jax.experimental.pallas import tpu as pltpu

EPS = 1e-5  # torch.nn.LayerNorm default


def _reattention_kernel(x_ref, wqkv_ref, rw_ref, ln_g_ref, ln_b_ref,
                        wout_ref, bout_ref, o_ref, *, heads, dim_head, scale):
    H, DH = heads, dim_head
    I = H * DH

    x = x_ref[0]  # (N, D)

    # --- fused qkv projection (one big MXU matmul, f32 accumulation) ---
    qkv = jnp.dot(x, wqkv_ref[...], preferred_element_type=jnp.float32)  # (N, 3I)

    # --- per-head scaled dot-product attention, softmax in f32 ---
    attn = []
    vs = []
    for h in range(H):
        q_h = qkv[:, h * DH:(h + 1) * DH]                # (N, DH)
        k_h = qkv[:, I + h * DH: I + (h + 1) * DH]       # (N, DH)
        v_h = qkv[:, 2 * I + h * DH: 2 * I + (h + 1) * DH]
        dots = lax.dot_general(q_h, k_h, (((1,), (1,)), ((), ())),
                               preferred_element_type=jnp.float32) * scale  # (N, N)
        dots = dots - jnp.max(dots, axis=-1, keepdims=True)
        e = jnp.exp(dots)
        attn.append(e / jnp.sum(e, axis=-1, keepdims=True))
        vs.append(v_h)

    # --- re-attention head mixing: attn2[g] = sum_h attn[h] * rw[h, g] ---
    # rw is tiny (H, H) and lives in SMEM -> cheap scalar reads, VPU FMAs.
    attn2 = []
    for g in range(H):
        acc = attn[0] * rw_ref[0, g]
        for h in range(1, H):
            acc = acc + attn[h] * rw_ref[h, g]
        attn2.append(acc)

    # --- LayerNorm across the head axis (biased variance, eps inside rsqrt) ---
    mean = attn2[0]
    for g in range(1, H):
        mean = mean + attn2[g]
    mean = mean * (1.0 / H)
    var = (attn2[0] - mean) * (attn2[0] - mean)
    for g in range(1, H):
        d = attn2[g] - mean
        var = var + d * d
    var = var * (1.0 / H)
    inv = lax.rsqrt(var + EPS)

    # --- (attn @ v) folded into the output projection, accumulated per head:
    #     concat_h(out_h) @ W_out == sum_h out_h @ W_out[h*DH:(h+1)*DH, :]
    y = None
    for g in range(H):
        a3 = (attn2[g] - mean) * inv * ln_g_ref[g] + ln_b_ref[g]         # (N, N)
        out_h = jnp.dot(a3, vs[g], preferred_element_type=jnp.float32)   # (N, DH)
        w_slice = wout_ref[g * DH:(g + 1) * DH, :]                       # (DH, D)
        contrib = jnp.dot(out_h, w_slice, preferred_element_type=jnp.float32)
        y = contrib if y is None else y + contrib
    y = y + bout_ref[...].astype(jnp.float32)

    o_ref[0] = y.astype(o_ref.dtype)


def reattention(x, w_qkv, reattn_w, ln_gamma, ln_beta, w_out, b_out,
                *, heads, dim_head):
    """x: (B, N, D) -> (B, N, D). Fused Re-Attention forward."""
    B, N, D = x.shape
    I = heads * dim_head
    assert w_qkv.shape == (D, 3 * I)
    assert w_out.shape == (I, D)
    scale = float(dim_head) ** -0.5
    bout2 = b_out.reshape(1, D)

    kernel = functools.partial(_reattention_kernel,
                               heads=heads, dim_head=dim_head, scale=scale)

    # Advisory cost estimate so XLA schedules around the custom call sensibly.
    flops = (2 * B * N * D * 3 * I            # qkv projection
             + 2 * B * heads * N * N * dim_head   # q @ k^T
             + 2 * B * heads * heads * N * N      # re-attention head mixing
             + 2 * B * heads * N * N * dim_head   # attn @ v
             + 2 * B * N * I * D)                 # output projection
    transcendentals = B * heads * N * N + B * N * N     # exp + rsqrt
    bytes_accessed = 4 * (2 * B * N * D + D * 3 * I + I * D + D
                          + heads * heads + 2 * heads)

    out = pl.pallas_call(
        kernel,
        out_shape=jax.ShapeDtypeStruct((B, N, D), x.dtype),
        grid_spec=pltpu.PrefetchScalarGridSpec(
            num_scalar_prefetch=0,
            grid=(B,),
            in_specs=[
                pl.BlockSpec((1, N, D), lambda b: (b, 0, 0)),        # x (per batch)
                pl.BlockSpec((D, 3 * I), lambda b: (0, 0)),          # W_qkv (resident)
                pl.BlockSpec(memory_space=pltpu.MemorySpace.SMEM),   # reattn_weights
                pl.BlockSpec(memory_space=pltpu.MemorySpace.SMEM),   # LN gamma
                pl.BlockSpec(memory_space=pltpu.MemorySpace.SMEM),   # LN beta
                pl.BlockSpec((I, D), lambda b: (0, 0)),              # W_out (resident)
                pl.BlockSpec((1, D), lambda b: (0, 0)),              # b_out (resident)
            ],
            out_specs=pl.BlockSpec((1, N, D), lambda b: (b, 0, 0)),
        ),
        compiler_params=pltpu.CompilerParams(
            dimension_semantics=("parallel",)),
        cost_estimate=pl.CostEstimate(flops=flops,
                                      transcendentals=transcendentals,
                                      bytes_accessed=bytes_accessed),
    )(x, w_qkv, reattn_w, ln_gamma, ln_beta, w_out, bout2)
    return out


def _reference(x, w_qkv, rw, gamma, beta, w_out, b_out, *, heads, dim_head):
    B, N, D = x.shape
    I = heads * dim_head
    scale = float(dim_head) ** -0.5
    qkv = x @ w_qkv
    q, k, v = jnp.split(qkv, 3, axis=-1)
    sh = lambda t: t.reshape(B, N, heads, dim_head).transpose(0, 2, 1, 3)
    q, k, v = sh(q), sh(k), sh(v)
    dots = jnp.einsum('bhid,bhjd->bhij', q, k) * scale
    attn = jax.nn.softmax(dots, axis=-1)
    attn = jnp.einsum('bhij,hg->bgij', attn, rw)
    a = attn.transpose(0, 2, 3, 1)                       # b i j h
    mean = a.mean(-1, keepdims=True)
    var = ((a - mean) ** 2).mean(-1, keepdims=True)
    a = (a - mean) / jnp.sqrt(var + EPS) * gamma + beta
    attn = a.transpose(0, 3, 1, 2)                       # b h i j
    out = jnp.einsum('bhij,bhjd->bhid', attn, v)
    out = out.transpose(0, 2, 1, 3).reshape(B, N, I)
    return out @ w_out + b_out


if __name__ == "__main__":
    B, N, D = 2, 8, 32          # batch, seq, dim
    heads, dim_head = 8, 16     # inner_dim = 128 (lane-dense)
    I = heads * dim_head

    key = jax.random.PRNGKey(0)
    kx, kqkv, krw, kwo, kbo = jax.random.split(key, 5)

    x = jax.random.normal(kx, (B, N, D), dtype=jnp.float32)
    w_qkv = jax.random.normal(kqkv, (D, 3 * I), dtype=jnp.float32) * 0.05
    reattn_w = jax.random.normal(krw, (heads, heads), dtype=jnp.float32)
    ln_gamma = jnp.ones((heads,), dtype=jnp.float32)    # LayerNorm default init
    ln_beta = jnp.zeros((heads,), dtype=jnp.float32)
    w_out = jax.random.normal(kwo, (I, D), dtype=jnp.float32) * 0.05
    b_out = jax.random.normal(kbo, (D,), dtype=jnp.float32) * 0.05

    out = reattention(x, w_qkv, reattn_w, ln_gamma, ln_beta, w_out, b_out,
                      heads=heads, dim_head=dim_head)
    jax.block_until_ready(out)

    ref = _reference(x, w_qkv, reattn_w, ln_gamma, ln_beta, w_out, b_out,
                     heads=heads, dim_head=dim_head)
    assert out.shape == (B, N, D)
    assert bool(jnp.all(jnp.isfinite(out)))
    assert jnp.allclose(out, ref, atol=2e-2, rtol=2e-2), \
        f"mismatch vs reference: {float(jnp.max(jnp.abs(out - ref)))}"

    print("KERNEL_OK")
</pallas_src>

<mosaic_0001>
module attributes {stable_mosaic.version = 11 : i64} {
  func.func @_reattention_kernel(%arg0: i32, %arg1: memref<1x8x32xf32, #tpu.memory_space<vmem>>, %arg2: memref<32x384xf32, #tpu.memory_space<vmem>>, %arg3: memref<8x8xf32, #tpu.memory_space<smem>>, %arg4: memref<8xf32, #tpu.memory_space<smem>>, %arg5: memref<8xf32, #tpu.memory_space<smem>>, %arg6: memref<128x32xf32, #tpu.memory_space<vmem>>, %arg7: memref<1x32xf32, #tpu.memory_space<vmem>>, %arg8: memref<1x8x32xf32, #tpu.memory_space<vmem>>) attributes {dimension_semantics = [#tpu.dimension_semantics<parallel>], iteration_bounds = array<i64: 2>, scalar_prefetch = 0 : i64, scratch_operands = 0 : i64, tpu.core_type = #tpu.core_type<tc>, window_params = [{transform_indices = @transform_0, window_bounds = array<i64: 1, 8, 32>}, {pipeline_mode = #tpu.pipeline_mode<synchronous>, transform_indices = @transform_1, window_bounds = array<i64: 32, 384>}, {transform_indices = @transform_2, window_bounds = array<i64: 8, 8>}, {transform_indices = @transform_3, window_bounds = array<i64: 8>}, {transform_indices = @transform_4, window_bounds = array<i64: 8>}, {pipeline_mode = #tpu.pipeline_mode<synchronous>, transform_indices = @transform_5, window_bounds = array<i64: 128, 32>}, {pipeline_mode = #tpu.pipeline_mode<synchronous>, transform_indices = @transform_6, window_bounds = array<i64: 1, 32>}, {transform_indices = @transform_7, window_bounds = array<i64: 1, 8, 32>}]} {
    %c0 = arith.constant 0 : index
    %c0_0 = arith.constant 0 : index
    %c0_1 = arith.constant 0 : index
    %0 = vector.load %arg1[%c0, %c0_0, %c0_1] : memref<1x8x32xf32, #tpu.memory_space<vmem>>, vector<1x8x32xf32>
    %1 = vector.shape_cast %0 : vector<1x8x32xf32> to vector<8x32xf32>
    %c0_2 = arith.constant 0 : index
    %c0_3 = arith.constant 0 : index
    %2 = vector.load %arg2[%c0_2, %c0_3] : memref<32x384xf32, #tpu.memory_space<vmem>>, vector<32x384xf32>
    %cst = arith.constant dense<0.000000e+00> : vector<8x384xf32>
    %3 = tpu.matmul %1, %2, %cst {dimension_numbers = #tpu.dot_dimension_numbers<[1], [0], [0], [1], [0, 0, 1, 1], [], []>} : vector<8x32xf32>, vector<32x384xf32>, vector<8x384xf32> -> vector<8x384xf32>
    %4 = vector.extract_strided_slice %3 {offsets = [0, 0], sizes = [8, 16], strides = [1, 1]} : vector<8x384xf32> to vector<8x16xf32>
    %5 = vector.extract_strided_slice %3 {offsets = [0, 128], sizes = [8, 16], strides = [1, 1]} : vector<8x384xf32> to vector<8x16xf32>
    %6 = vector.extract_strided_slice %3 {offsets = [0, 256], sizes = [8, 16], strides = [1, 1]} : vector<8x384xf32> to vector<8x16xf32>
    %cst_4 = arith.constant dense<0.000000e+00> : vector<8x8xf32>
    %7 = tpu.matmul %4, %5, %cst_4 {dimension_numbers = #tpu.dot_dimension_numbers<[1], [1], [0], [0], [0, 0, 1, 0], [], []>} : vector<8x16xf32>, vector<8x16xf32>, vector<8x8xf32> -> vector<8x8xf32>
    %cst_5 = arith.constant 2.500000e-01 : f32
    %8 = vector.broadcast %cst_5 : f32 to vector<8x8xf32>
    %9 = arith.mulf %7, %8 : vector<8x8xf32>
    %cst_6 = arith.constant dense<0xFF800000> : vector<8xf32>
    %10 = vector.multi_reduction <maximumf>, %9, %cst_6 [1] : vector<8x8xf32> to vector<8xf32>
    %11 = vector.shape_cast %10 : vector<8xf32> to vector<8x1xf32>
    %12 = vector.broadcast %11 : vector<8x1xf32> to vector<8x8xf32>
    %13 = arith.subf %9, %12 : vector<8x8xf32>
    %14 = math.exp %13 : vector<8x8xf32>
    %cst_7 = arith.constant dense<0.000000e+00> : vector<8xf32>
    %15 = vector.multi_reduction <add>, %14, %cst_7 [1] : vector<8x8xf32> to vector<8xf32>
    %16 = vector.shape_cast %15 : vector<8xf32> to vector<8x1xf32>
    %17 = vector.broadcast %16 : vector<8x1xf32> to vector<8x8xf32>
    %18 = arith.divf %14, %17 : vector<8x8xf32>
    %19 = vector.extract_strided_slice %3 {offsets = [0, 16], sizes = [8, 16], strides = [1, 1]} : vector<8x384xf32> to vector<8x16xf32>
    %20 = vector.extract_strided_slice %3 {offsets = [0, 144], sizes = [8, 16], strides = [1, 1]} : vector<8x384xf32> to vector<8x16xf32>
    %21 = vector.extract_strided_slice %3 {offsets = [0, 272], sizes = [8, 16], strides = [1, 1]} : vector<8x384xf32> to vector<8x16xf32>
    %cst_8 = arith.constant dense<0.000000e+00> : vector<8x8xf32>
    %22 = tpu.matmul %19, %20, %cst_8 {dimension_numbers = #tpu.dot_dimension_numbers<[1], [1], [0], [0], [0, 0, 1, 0], [], []>} : vector<8x16xf32>, vector<8x16xf32>, vector<8x8xf32> -> vector<8x8xf32>
    %cst_9 = arith.constant 2.500000e-01 : f32
    %23 = vector.broadcast %cst_9 : f32 to vector<8x8xf32>
    %24 = arith.mulf %22, %23 : vector<8x8xf32>
    %cst_10 = arith.constant dense<0xFF800000> : vector<8xf32>
    %25 = vector.multi_reduction <maximumf>, %24, %cst_10 [1] : vector<8x8xf32> to vector<8xf32>
    %26 = vector.shape_cast %25 : vector<8xf32> to vector<8x1xf32>
    %27 = vector.broadcast %26 : vector<8x1xf32> to vector<8x8xf32>
    %28 = arith.subf %24, %27 : vector<8x8xf32>
    %29 = math.exp %28 : vector<8x8xf32>
    %cst_11 = arith.constant dense<0.000000e+00> : vector<8xf32>
    %30 = vector.multi_reduction <add>, %29, %cst_11 [1] : vector<8x8xf32> to vector<8xf32>
    %31 = vector.shape_cast %30 : vector<8xf32> to vector<8x1xf32>
    %32 = vector.broadcast %31 : vector<8x1xf32> to vector<8x8xf32>
    %33 = arith.divf %29, %32 : vector<8x8xf32>
    %34 = vector.extract_strided_slice %3 {offsets = [0, 32], sizes = [8, 16], strides = [1, 1]} : vector<8x384xf32> to vector<8x16xf32>
    %35 = vector.extract_strided_slice %3 {offsets = [0, 160], sizes = [8, 16], strides = [1, 1]} : vector<8x384xf32> to vector<8x16xf32>
    %36 = vector.extract_strided_slice %3 {offsets = [0, 288], sizes = [8, 16], strides = [1, 1]} : vector<8x384xf32> to vector<8x16xf32>
    %cst_12 = arith.constant dense<0.000000e+00> : vector<8x8xf32>
    %37 = tpu.matmul %34, %35, %cst_12 {dimension_numbers = #tpu.dot_dimension_numbers<[1], [1], [0], [0], [0, 0, 1, 0], [], []>} : vector<8x16xf32>, vector<8x16xf32>, vector<8x8xf32> -> vector<8x8xf32>
    %cst_13 = arith.constant 2.500000e-01 : f32
    %38 = vector.broadcast %cst_13 : f32 to vector<8x8xf32>
    %39 = arith.mulf %37, %38 : vector<8x8xf32>
    %cst_14 = arith.constant dense<0xFF800000> : vector<8xf32>
    %40 = vector.multi_reduction <maximumf>, %39, %cst_14 [1] : vector<8x8xf32> to vector<8xf32>
    %41 = vector.shape_cast %40 : vector<8xf32> to vector<8x1xf32>
    %42 = vector.broadcast %41 : vector<8x1xf32> to vector<8x8xf32>
    %43 = arith.subf %39, %42 : vector<8x8xf32>
    %44 = math.exp %43 : vector<8x8xf32>
    %cst_15 = arith.constant dense<0.000000e+00> : vector<8xf32>
    %45 = vector.multi_reduction <add>, %44, %cst_15 [1] : vector<8x8xf32> to vector<8xf32>
    %46 = vector.shape_cast %45 : vector<8xf32> to vector<8x1xf32>
    %47 = vector.broadcast %46 : vector<8x1xf32> to vector<8x8xf32>
    %48 = arith.divf %44, %47 : vector<8x8xf32>
    %49 = vector.extract_strided_slice %3 {offsets = [0, 48], sizes = [8, 16], strides = [1, 1]} : vector<8x384xf32> to vector<8x16xf32>
    %50 = vector.extract_strided_slice %3 {offsets = [0, 176], sizes = [8, 16], strides = [1, 1]} : vector<8x384xf32> to vector<8x16xf32>
    %51 = vector.extract_strided_slice %3 {offsets = [0, 304], sizes = [8, 16], strides = [1, 1]} : vector<8x384xf32> to vector<8x16xf32>
    %cst_16 = arith.constant dense<0.000000e+00> : vector<8x8xf32>
    %52 = tpu.matmul %49, %50, %cst_16 {dimension_numbers = #tpu.dot_dimension_numbers<[1], [1], [0], [0], [0, 0, 1, 0], [], []>} : vector<8x16xf32>, vector<8x16xf32>, vector<8x8xf32> -> vector<8x8xf32>
    %cst_17 = arith.constant 2.500000e-01 : f32
    %53 = vector.broadcast %cst_17 : f32 to vector<8x8xf32>
    %54 = arith.mulf %52, %53 : vector<8x8xf32>
    %cst_18 = arith.constant dense<0xFF800000> : vector<8xf32>
    %55 = vector.multi_reduction <maximumf>, %54, %cst_18 [1] : vector<8x8xf32> to vector<8xf32>
    %56 = vector.shape_cast %55 : vector<8xf32> to vector<8x1xf32>
    %57 = vector.broadcast %56 : vector<8x1xf32> to vector<8x8xf32>
    %58 = arith.subf %54, %57 : vector<8x8xf32>
    %59 = math.exp %58 : vector<8x8xf32>
    %cst_19 = arith.constant dense<0.000000e+00> : vector<8xf32>
    %60 = vector.multi_reduction <add>, %59, %cst_19 [1] : vector<8x8xf32> to vector<8xf32>
    %61 = vector.shape_cast %60 : vector<8xf32> to vector<8x1xf32>
    %62 = vector.broadcast %61 : vector<8x1xf32> to vector<8x8xf32>
    %63 = arith.divf %59, %62 : vector<8x8xf32>
    %64 = vector.extract_strided_slice %3 {offsets = [0, 64], sizes = [8, 16], strides = [1, 1]} : vector<8x384xf32> to vector<8x16xf32>
    %65 = vector.extract_strided_slice %3 {offsets = [0, 192], sizes = [8, 16], strides = [1, 1]} : vector<8x384xf32> to vector<8x16xf32>
    %66 = vector.extract_strided_slice %3 {offsets = [0, 320], sizes = [8, 16], strides = [1, 1]} : vector<8x384xf32> to vector<8x16xf32>
    %cst_20 = arith.constant dense<0.000000e+00> : vector<8x8xf32>
    %67 = tpu.matmul %64, %65, %cst_20 {dimension_numbers = #tpu.dot_dimension_numbers<[1], [1], [0], [0], [0, 0, 1, 0], [], []>} : vector<8x16xf32>, vector<8x16xf32>, vector<8x8xf32> -> vector<8x8xf32>
    %cst_21 = arith.constant 2.500000e-01 : f32
    %68 = vector.broadcast %cst_21 : f32 to vector<8x8xf32>
    %69 = arith.mulf %67, %68 : vector<8x8xf32>
    %cst_22 = arith.constant dense<0xFF800000> : vector<8xf32>
    %70 = vector.multi_reduction <maximumf>, %69, %cst_22 [1] : vector<8x8xf32> to vector<8xf32>
    %71 = vector.shape_cast %70 : vector<8xf32> to vector<8x1xf32>
    %72 = vector.broadcast %71 : vector<8x1xf32> to vector<8x8xf32>
    %73 = arith.subf %69, %72 : vector<8x8xf32>
    %74 = math.exp %73 : vector<8x8xf32>
    %cst_23 = arith.constant dense<0.000000e+00> : vector<8xf32>
    %75 = vector.multi_reduction <add>, %74, %cst_23 [1] : vector<8x8xf32> to vector<8xf32>
    %76 = vector.shape_cast %75 : vector<8xf32> to vector<8x1xf32>
    %77 = vector.broadcast %76 : vector<8x1xf32> to vector<8x8xf32>
    %78 = arith.divf %74, %77 : vector<8x8xf32>
    %79 = vector.extract_strided_slice %3 {offsets = [0, 80], sizes = [8, 16], strides = [1, 1]} : vector<8x384xf32> to vector<8x16xf32>
    %80 = vector.extract_strided_slice %3 {offsets = [0, 208], sizes = [8, 16], strides = [1, 1]} : vector<8x384xf32> to vector<8x16xf32>
    %81 = vector.extract_strided_slice %3 {offsets = [0, 336], sizes = [8, 16], strides = [1, 1]} : vector<8x384xf32> to vector<8x16xf32>
    %cst_24 = arith.constant dense<0.000000e+00> : vector<8x8xf32>
    %82 = tpu.matmul %79, %80, %cst_24 {dimension_numbers = #tpu.dot_dimension_numbers<[1], [1], [0], [0], [0, 0, 1, 0], [], []>} : vector<8x16xf32>, vector<8x16xf32>, vector<8x8xf32> -> vector<8x8xf32>
    %cst_25 = arith.constant 2.500000e-01 : f32
    %83 = vector.broadcast %cst_25 : f32 to vector<8x8xf32>
    %84 = arith.mulf %82, %83 : vector<8x8xf32>
    %cst_26 = arith.constant dense<0xFF800000> : vector<8xf32>
    %85 = vector.multi_reduction <maximumf>, %84, %cst_26 [1] : vector<8x8xf32> to vector<8xf32>
    %86 = vector.shape_cast %85 : vector<8xf32> to vector<8x1xf32>
    %87 = vector.broadcast %86 : vector<8x1xf32> to vector<8x8xf32>
    %88 = arith.subf %84, %87 : vector<8x8xf32>
    %89 = math.exp %88 : vector<8x8xf32>
    %cst_27 = arith.constant dense<0.000000e+00> : vector<8xf32>
    %90 = vector.multi_reduction <add>, %89, %cst_27 [1] : vector<8x8xf32> to vector<8xf32>
    %91 = vector.shape_cast %90 : vector<8xf32> to vector<8x1xf32>
    %92 = vector.broadcast %91 : vector<8x1xf32> to vector<8x8xf32>
    %93 = arith.divf %89, %92 : vector<8x8xf32>
    %94 = vector.extract_strided_slice %3 {offsets = [0, 96], sizes = [8, 16], strides = [1, 1]} : vector<8x384xf32> to vector<8x16xf32>
    %95 = vector.extract_strided_slice %3 {offsets = [0, 224], sizes = [8, 16], strides = [1, 1]} : vector<8x384xf32> to vector<8x16xf32>
    %96 = vector.extract_strided_slice %3 {offsets = [0, 352], sizes = [8, 16], strides = [1, 1]} : vector<8x384xf32> to vector<8x16xf32>
    %cst_28 = arith.constant dense<0.000000e+00> : vector<8x8xf32>
    %97 = tpu.matmul %94, %95, %cst_28 {dimension_numbers = #tpu.dot_dimension_numbers<[1], [1], [0], [0], [0, 0, 1, 0], [], []>} : vector<8x16xf32>, vector<8x16xf32>, vector<8x8xf32> -> vector<8x8xf32>
    %cst_29 = arith.constant 2.500000e-01 : f32
    %98 = vector.broadcast %cst_29 : f32 to vector<8x8xf32>
    %99 = arith.mulf %97, %98 : vector<8x8xf32>
    %cst_30 = arith.constant dense<0xFF800000> : vector<8xf32>
    %100 = vector.multi_reduction <maximumf>, %99, %cst_30 [1] : vector<8x8xf32> to vector<8xf32>
    %101 = vector.shape_cast %100 : vector<8xf32> to vector<8x1xf32>
    %102 = vector.broadcast %101 : vector<8x1xf32> to vector<8x8xf32>
    %103 = arith.subf %99, %102 : vector<8x8xf32>
    %104 = math.exp %103 : vector<8x8xf32>
    %cst_31 = arith.constant dense<0.000000e+00> : vector<8xf32>
    %105 = vector.multi_reduction <add>, %104, %cst_31 [1] : vector<8x8xf32> to vector<8xf32>
    %106 = vector.shape_cast %105 : vector<8xf32> to vector<8x1xf32>
    %107 = vector.broadcast %106 : vector<8x1xf32> to vector<8x8xf32>
    %108 = arith.divf %104, %107 : vector<8x8xf32>
    %109 = vector.extract_strided_slice %3 {offsets = [0, 112], sizes = [8, 16], strides = [1, 1]} : vector<8x384xf32> to vector<8x16xf32>
    %110 = vector.extract_strided_slice %3 {offsets = [0, 240], sizes = [8, 16], strides = [1, 1]} : vector<8x384xf32> to vector<8x16xf32>
    %111 = vector.extract_strided_slice %3 {offsets = [0, 368], sizes = [8, 16], strides = [1, 1]} : vector<8x384xf32> to vector<8x16xf32>
    %cst_32 = arith.constant dense<0.000000e+00> : vector<8x8xf32>
    %112 = tpu.matmul %109, %110, %cst_32 {dimension_numbers = #tpu.dot_dimension_numbers<[1], [1], [0], [0], [0, 0, 1, 0], [], []>} : vector<8x16xf32>, vector<8x16xf32>, vector<8x8xf32> -> vector<8x8xf32>
    %cst_33 = arith.constant 2.500000e-01 : f32
    %113 = vector.broadcast %cst_33 : f32 to vector<8x8xf32>
    %114 = arith.mulf %112, %113 : vector<8x8xf32>
    %cst_34 = arith.constant dense<0xFF800000> : vector<8xf32>
    %115 = vector.multi_reduction <maximumf>, %114, %cst_34 [1] : vector<8x8xf32> to vector<8xf32>
    %116 = vector.shape_cast %115 : vector<8xf32> to vector<8x1xf32>
    %117 = vector.broadcast %116 : vector<8x1xf32> to vector<8x8xf32>
    %118 = arith.subf %114, %117 : vector<8x8xf32>
    %119 = math.exp %118 : vector<8x8xf32>
    %cst_35 = arith.constant dense<0.000000e+00> : vector<8xf32>
    %120 = vector.multi_reduction <add>, %119, %cst_35 [1] : vector<8x8xf32> to vector<8xf32>
    %121 = vector.shape_cast %120 : vector<8xf32> to vector<8x1xf32>
    %122 = vector.broadcast %121 : vector<8x1xf32> to vector<8x8xf32>
    %123 = arith.divf %119, %122 : vector<8x8xf32>
    %c0_36 = arith.constant 0 : index
    %c0_37 = arith.constant 0 : index
    %124 = memref.load %arg3[%c0_36, %c0_37] : memref<8x8xf32, #tpu.memory_space<smem>>
    %125 = vector.broadcast %124 : f32 to vector<8x8xf32>
    %126 = arith.mulf %18, %125 : vector<8x8xf32>
    %c1 = arith.constant 1 : index
    %c0_38 = arith.constant 0 : index
    %127 = memref.load %arg3[%c1, %c0_38] : memref<8x8xf32, #tpu.memory_space<smem>>
    %128 = vector.broadcast %127 : f32 to vector<8x8xf32>
    %129 = arith.mulf %33, %128 : vector<8x8xf32>
    %130 = arith.addf %126, %129 : vector<8x8xf32>
    %c2 = arith.constant 2 : index
    %c0_39 = arith.constant 0 : index
    %131 = memref.load %arg3[%c2, %c0_39] : memref<8x8xf32, #tpu.memory_space<smem>>
    %132 = vector.broadcast %131 : f32 to vector<8x8xf32>
    %133 = arith.mulf %48, %132 : vector<8x8xf32>
    %134 = arith.addf %130, %133 : vector<8x8xf32>
    %c3 = arith.constant 3 : index
    %c0_40 = arith.constant 0 : index
    %135 = memref.load %arg3[%c3, %c0_40] : memref<8x8xf32, #tpu.memory_space<smem>>
    %136 = vector.broadcast %135 : f32 to vector<8x8xf32>
    %137 = arith.mulf %63, %136 : vector<8x8xf32>
    %138 = arith.addf %134, %137 : vector<8x8xf32>
    %c4 = arith.constant 4 : index
    %c0_41 = arith.constant 0 : index
    %139 = memref.load %arg3[%c4, %c0_41] : memref<8x8xf32, #tpu.memory_space<smem>>
    %140 = vector.broadcast %139 : f32 to vector<8x8xf32>
    %141 = arith.mulf %78, %140 : vector<8x8xf32>
    %142 = arith.addf %138, %141 : vector<8x8xf32>
    %c5 = arith.constant 5 : index
    %c0_42 = arith.constant 0 : index
    %143 = memref.load %arg3[%c5, %c0_42] : memref<8x8xf32, #tpu.memory_space<smem>>
    %144 = vector.broadcast %143 : f32 to vector<8x8xf32>
    %145 = arith.mulf %93, %144 : vector<8x8xf32>
    %146 = arith.addf %142, %145 : vector<8x8xf32>
    %c6 = arith.constant 6 : index
    %c0_43 = arith.constant 0 : index
    %147 = memref.load %arg3[%c6, %c0_43] : memref<8x8xf32, #tpu.memory_space<smem>>
    %148 = vector.broadcast %147 : f32 to vector<8x8xf32>
    %149 = arith.mulf %108, %148 : vector<8x8xf32>
    %150 = arith.addf %146, %149 : vector<8x8xf32>
    %c7 = arith.constant 7 : index
    %c0_44 = arith.constant 0 : index
    %151 = memref.load %arg3[%c7, %c0_44] : memref<8x8xf32, #tpu.memory_space<smem>>
    %152 = vector.broadcast %151 : f32 to vector<8x8xf32>
    %153 = arith.mulf %123, %152 : vector<8x8xf32>
    %154 = arith.addf %150, %153 : vector<8x8xf32>
    %c0_45 = arith.constant 0 : index
    %c1_46 = arith.constant 1 : index
    %155 = memref.load %arg3[%c0_45, %c1_46] : memref<8x8xf32, #tpu.memory_space<smem>>
    %156 = vector.broadcast %155 : f32 to vector<8x8xf32>
    %157 = arith.mulf %18, %156 : vector<8x8xf32>
    %c1_47 = arith.constant 1 : index
    %c1_48 = arith.constant 1 : index
    %158 = memref.load %arg3[%c1_47, %c1_48] : memref<8x8xf32, #tpu.memory_space<smem>>
    %159 = vector.broadcast %158 : f32 to vector<8x8xf32>
    %160 = arith.mulf %33, %159 : vector<8x8xf32>
    %161 = arith.addf %157, %160 : vector<8x8xf32>
    %c2_49 = arith.constant 2 : index
    %c1_50 = arith.constant 1 : index
    %162 = memref.load %arg3[%c2_49, %c1_50] : memref<8x8xf32, #tpu.memory_space<smem>>
    %163 = vector.broadcast %162 : f32 to vector<8x8xf32>
    %164 = arith.mulf %48, %163 : vector<8x8xf32>
    %165 = arith.addf %161, %164 : vector<8x8xf32>
    %c3_51 = arith.constant 3 : index
    %c1_52 = arith.constant 1 : index
    %166 = memref.load %arg3[%c3_51, %c1_52] : memref<8x8xf32, #tpu.memory_space<smem>>
    %167 = vector.broadcast %166 : f32 to vector<8x8xf32>
    %168 = arith.mulf %63, %167 : vector<8x8xf32>
    %169 = arith.addf %165, %168 : vector<8x8xf32>
    %c4_53 = arith.constant 4 : index
    %c1_54 = arith.constant 1 : index
    %170 = memref.load %arg3[%c4_53, %c1_54] : memref<8x8xf32, #tpu.memory_space<smem>>
    %171 = vector.broadcast %170 : f32 to vector<8x8xf32>
    %172 = arith.mulf %78, %171 : vector<8x8xf32>
    %173 = arith.addf %169, %172 : vector<8x8xf32>
    %c5_55 = arith.constant 5 : index
    %c1_56 = arith.constant 1 : index
    %174 = memref.load %arg3[%c5_55, %c1_56] : memref<8x8xf32, #tpu.memory_space<smem>>
    %175 = vector.broadcast %174 : f32 to vector<8x8xf32>
    %176 = arith.mulf %93, %175 : vector<8x8xf32>
    %177 = arith.addf %173, %176 : vector<8x8xf32>
    %c6_57 = arith.constant 6 : index
    %c1_58 = arith.constant 1 : index
    %178 = memref.load %arg3[%c6_57, %c1_58] : memref<8x8xf32, #tpu.memory_space<smem>>
    %179 = vector.broadcast %178 : f32 to vector<8x8xf32>
    %180 = arith.mulf %108, %179 : vector<8x8xf32>
    %181 = arith.addf %177, %180 : vector<8x8xf32>
    %c7_59 = arith.constant 7 : index
    %c1_60 = arith.constant 1 : index
    %182 = memref.load %arg3[%c7_59, %c1_60] : memref<8x8xf32, #tpu.memory_space<smem>>
    %183 = vector.broadcast %182 : f32 to vector<8x8xf32>
    %184 = arith.mulf %123, %183 : vector<8x8xf32>
    %185 = arith.addf %181, %184 : vector<8x8xf32>
    %c0_61 = arith.constant 0 : index
    %c2_62 = arith.constant 2 : index
    %186 = memref.load %arg3[%c0_61, %c2_62] : memref<8x8xf32, #tpu.memory_space<smem>>
    %187 = vector.broadcast %186 : f32 to vector<8x8xf32>
    %188 = arith.mulf %18, %187 : vector<8x8xf32>
    %c1_63 = arith.constant 1 : index
    %c2_64 = arith.constant 2 : index
    %189 = memref.load %arg3[%c1_63, %c2_64] : memref<8x8xf32, #tpu.memory_space<smem>>
    %190 = vector.broadcast %189 : f32 to vector<8x8xf32>
    %191 = arith.mulf %33, %190 : vector<8x8xf32>
    %192 = arith.addf %188, %191 : vector<8x8xf32>
    %c2_65 = arith.constant 2 : index
    %c2_66 = arith.constant 2 : index
    %193 = memref.load %arg3[%c2_65, %c2_66] : memref<8x8xf32, #tpu.memory_space<smem>>
    %194 = vector.broadcast %193 : f32 to vector<8x8xf32>
    %195 = arith.mulf %48, %194 : vector<8x8xf32>
    %196 = arith.addf %192, %195 : vector<8x8xf32>
    %c3_67 = arith.constant 3 : index
    %c2_68 = arith.constant 2 : index
    %197 = memref.load %arg3[%c3_67, %c2_68] : memref<8x8xf32, #tpu.memory_space<smem>>
    %198 = vector.broadcast %197 : f32 to vector<8x8xf32>
    %199 = arith.mulf %63, %198 : vector<8x8xf32>
    %200 = arith.addf %196, %199 : vector<8x8xf32>
    %c4_69 = arith.constant 4 : index
    %c2_70 = arith.constant 2 : index
    %201 = memref.load %arg3[%c4_69, %c2_70] : memref<8x8xf32, #tpu.memory_space<smem>>
    %202 = vector.broadcast %201 : f32 to vector<8x8xf32>
    %203 = arith.mulf %78, %202 : vector<8x8xf32>
    %204 = arith.addf %200, %203 : vector<8x8xf32>
    %c5_71 = arith.constant 5 : index
    %c2_72 = arith.constant 2 : index
    %205 = memref.load %arg3[%c5_71, %c2_72] : memref<8x8xf32, #tpu.memory_space<smem>>
    %206 = vector.broadcast %205 : f32 to vector<8x8xf32>
    %207 = arith.mulf %93, %206 : vector<8x8xf32>
    %208 = arith.addf %204, %207 : vector<8x8xf32>
    %c6_73 = arith.constant 6 : index
    %c2_74 = arith.constant 2 : index
    %209 = memref.load %arg3[%c6_73, %c2_74] : memref<8x8xf32, #tpu.memory_space<smem>>
    %210 = vector.broadcast %209 : f32 to vector<8x8xf32>
    %211 = arith.mulf %108, %210 : vector<8x8xf32>
    %212 = arith.addf %208, %211 : vector<8x8xf32>
    %c7_75 = arith.constant 7 : index
    %c2_76 = arith.constant 2 : index
    %213 = memref.load %arg3[%c7_75, %c2_76] : memref<8x8xf32, #tpu.memory_space<smem>>
    %214 = vector.broadcast %213 : f32 to vector<8x8xf32>
    %215 = arith.mulf %123, %214 : vector<8x8xf32>
    %216 = arith.addf %212, %215 : vector<8x8xf32>
    %c0_77 = arith.constant 0 : index
    %c3_78 = arith.constant 3 : index
    %217 = memref.load %arg3[%c0_77, %c3_78] : memref<8x8xf32, #tpu.memory_space<smem>>
    %218 = vector.broadcast %217 : f32 to vector<8x8xf32>
    %219 = arith.mulf %18, %218 : vector<8x8xf32>
    %c1_79 = arith.constant 1 : index
    %c3_80 = arith.constant 3 : index
    %220 = memref.load %arg3[%c1_79, %c3_80] : memref<8x8xf32, #tpu.memory_space<smem>>
    %221 = vector.broadcast %220 : f32 to vector<8x8xf32>
    %222 = arith.mulf %33, %221 : vector<8x8xf32>
    %223 = arith.addf %219, %222 : vector<8x8xf32>
    %c2_81 = arith.constant 2 : index
    %c3_82 = arith.constant 3 : index
    %224 = memref.load %arg3[%c2_81, %c3_82] : memref<8x8xf32, #tpu.memory_space<smem>>
    %225 = vector.broadcast %224 : f32 to vector<8x8xf32>
    %226 = arith.mulf %48, %225 : vector<8x8xf32>
    %227 = arith.addf %223, %226 : vector<8x8xf32>
    %c3_83 = arith.constant 3 : index
    %c3_84 = arith.constant 3 : index
    %228 = memref.load %arg3[%c3_83, %c3_84] : memref<8x8xf32, #tpu.memory_space<smem>>
    %229 = vector.broadcast %228 : f32 to vector<8x8xf32>
    %230 = arith.mulf %63, %229 : vector<8x8xf32>
    %231 = arith.addf %227, %230 : vector<8x8xf32>
    %c4_85 = arith.constant 4 : index
    %c3_86 = arith.constant 3 : index
    %232 = memref.load %arg3[%c4_85, %c3_86] : memref<8x8xf32, #tpu.memory_space<smem>>
    %233 = vector.broadcast %232 : f32 to vector<8x8xf32>
    %234 = arith.mulf %78, %233 : vector<8x8xf32>
    %235 = arith.addf %231, %234 : vector<8x8xf32>
    %c5_87 = arith.constant 5 : index
    %c3_88 = arith.constant 3 : index
    %236 = memref.load %arg3[%c5_87, %c3_88] : memref<8x8xf32, #tpu.memory_space<smem>>
    %237 = vector.broadcast %236 : f32 to vector<8x8xf32>
    %238 = arith.mulf %93, %237 : vector<8x8xf32>
    %239 = arith.addf %235, %238 : vector<8x8xf32>
    %c6_89 = arith.constant 6 : index
    %c3_90 = arith.constant 3 : index
    %240 = memref.load %arg3[%c6_89, %c3_90] : memref<8x8xf32, #tpu.memory_space<smem>>
    %241 = vector.broadcast %240 : f32 to vector<8x8xf32>
    %242 = arith.mulf %108, %241 : vector<8x8xf32>
    %243 = arith.addf %239, %242 : vector<8x8xf32>
    %c7_91 = arith.constant 7 : index
    %c3_92 = arith.constant 3 : index
    %244 = memref.load %arg3[%c7_91, %c3_92] : memref<8x8xf32, #tpu.memory_space<smem>>
    %245 = vector.broadcast %244 : f32 to vector<8x8xf32>
    %246 = arith.mulf %123, %245 : vector<8x8xf32>
    %247 = arith.addf %243, %246 : vector<8x8xf32>
    %c0_93 = arith.constant 0 : index
    %c4_94 = arith.constant 4 : index
    %248 = memref.load %arg3[%c0_93, %c4_94] : memref<8x8xf32, #tpu.memory_space<smem>>
    %249 = vector.broadcast %248 : f32 to vector<8x8xf32>
    %250 = arith.mulf %18, %249 : vector<8x8xf32>
    %c1_95 = arith.constant 1 : index
    %c4_96 = arith.constant 4 : index
    %251 = memref.load %arg3[%c1_95, %c4_96] : memref<8x8xf32, #tpu.memory_space<smem>>
    %252 = vector.broadcast %251 : f32 to vector<8x8xf32>
    %253 = arith.mulf %33, %252 : vector<8x8xf32>
    %254 = arith.addf %250, %253 : vector<8x8xf32>
    %c2_97 = arith.constant 2 : index
    %c4_98 = arith.constant 4 : index
    %255 = memref.load %arg3[%c2_97, %c4_98] : memref<8x8xf32, #tpu.memory_space<smem>>
    %256 = vector.broadcast %255 : f32 to vector<8x8xf32>
    %257 = arith.mulf %48, %256 : vector<8x8xf32>
    %258 = arith.addf %254, %257 : vector<8x8xf32>
    %c3_99 = arith.constant 3 : index
    %c4_100 = arith.constant 4 : index
    %259 = memref.load %arg3[%c3_99, %c4_100] : memref<8x8xf32, #tpu.memory_space<smem>>
    %260 = vector.broadcast %259 : f32 to vector<8x8xf32>
    %261 = arith.mulf %63, %260 : vector<8x8xf32>
    %262 = arith.addf %258, %261 : vector<8x8xf32>
    %c4_101 = arith.constant 4 : index
    %c4_102 = arith.constant 4 : index
    %263 = memref.load %arg3[%c4_101, %c4_102] : memref<8x8xf32, #tpu.memory_space<smem>>
    %264 = vector.broadcast %263 : f32 to vector<8x8xf32>
    %265 = arith.mulf %78, %264 : vector<8x8xf32>
    %266 = arith.addf %262, %265 : vector<8x8xf32>
    %c5_103 = arith.constant 5 : index
    %c4_104 = arith.constant 4 : index
    %267 = memref.load %arg3[%c5_103, %c4_104] : memref<8x8xf32, #tpu.memory_space<smem>>
    %268 = vector.broadcast %267 : f32 to vector<8x8xf32>
    %269 = arith.mulf %93, %268 : vector<8x8xf32>
    %270 = arith.addf %266, %269 : vector<8x8xf32>
    %c6_105 = arith.constant 6 : index
    %c4_106 = arith.constant 4 : index
    %271 = memref.load %arg3[%c6_105, %c4_106] : memref<8x8xf32, #tpu.memory_space<smem>>
    %272 = vector.broadcast %271 : f32 to vector<8x8xf32>
    %273 = arith.mulf %108, %272 : vector<8x8xf32>
    %274 = arith.addf %270, %273 : vector<8x8xf32>
    %c7_107 = arith.constant 7 : index
    %c4_108 = arith.constant 4 : index
    %275 = memref.load %arg3[%c7_107, %c4_108] : memref<8x8xf32, #tpu.memory_space<smem>>
    %276 = vector.broadcast %275 : f32 to vector<8x8xf32>
    %277 = arith.mulf %123, %276 : vector<8x8xf32>
    %278 = arith.addf %274, %277 : vector<8x8xf32>
    %c0_109 = arith.constant 0 : index
    %c5_110 = arith.constant 5 : index
    %279 = memref.load %arg3[%c0_109, %c5_110] : memref<8x8xf32, #tpu.memory_space<smem>>
    %280 = vector.broadcast %279 : f32 to vector<8x8xf32>
    %281 = arith.mulf %18, %280 : vector<8x8xf32>
    %c1_111 = arith.constant 1 : index
    %c5_112 = arith.constant 5 : index
    %282 = memref.load %arg3[%c1_111, %c5_112] : memref<8x8xf32, #tpu.memory_space<smem>>
    %283 = vector.broadcast %282 : f32 to vector<8x8xf32>
    %284 = arith.mulf %33, %283 : vector<8x8xf32>
    %285 = arith.addf %281, %284 : vector<8x8xf32>
    %c2_113 = arith.constant 2 : index
    %c5_114 = arith.constant 5 : index
    %286 = memref.load %arg3[%c2_113, %c5_114] : memref<8x8xf32, #tpu.memory_space<smem>>
    %287 = vector.broadcast %286 : f32 to vector<8x8xf32>
    %288 = arith.mulf %48, %287 : vector<8x8xf32>
    %289 = arith.addf %285, %288 : vector<8x8xf32>
    %c3_115 = arith.constant 3 : index
    %c5_116 = arith.constant 5 : index
    %290 = memref.load %arg3[%c3_115, %c5_116] : memref<8x8xf32, #tpu.memory_space<smem>>
    %291 = vector.broadcast %290 : f32 to vector<8x8xf32>
    %292 = arith.mulf %63, %291 : vector<8x8xf32>
    %293 = arith.addf %289, %292 : vector<8x8xf32>
    %c4_117 = arith.constant 4 : index
    %c5_118 = arith.constant 5 : index
    %294 = memref.load %arg3[%c4_117, %c5_118] : memref<8x8xf32, #tpu.memory_space<smem>>
    %295 = vector.broadcast %294 : f32 to vector<8x8xf32>
    %296 = arith.mulf %78, %295 : vector<8x8xf32>
    %297 = arith.addf %293, %296 : vector<8x8xf32>
    %c5_119 = arith.constant 5 : index
    %c5_120 = arith.constant 5 : index
    %298 = memref.load %arg3[%c5_119, %c5_120] : memref<8x8xf32, #tpu.memory_space<smem>>
    %299 = vector.broadcast %298 : f32 to vector<8x8xf32>
    %300 = arith.mulf %93, %299 : vector<8x8xf32>
    %301 = arith.addf %297, %300 : vector<8x8xf32>
    %c6_121 = arith.constant 6 : index
    %c5_122 = arith.constant 5 : index
    %302 = memref.load %arg3[%c6_121, %c5_122] : memref<8x8xf32, #tpu.memory_space<smem>>
    %303 = vector.broadcast %302 : f32 to vector<8x8xf32>
    %304 = arith.mulf %108, %303 : vector<8x8xf32>
    %305 = arith.addf %301, %304 : vector<8x8xf32>
    %c7_123 = arith.constant 7 : index
    %c5_124 = arith.constant 5 : index
    %306 = memref.load %arg3[%c7_123, %c5_124] : memref<8x8xf32, #tpu.memory_space<smem>>
    %307 = vector.broadcast %306 : f32 to vector<8x8xf32>
    %308 = arith.mulf %123, %307 : vector<8x8xf32>
    %309 = arith.addf %305, %308 : vector<8x8xf32>
    %c0_125 = arith.constant 0 : index
    %c6_126 = arith.constant 6 : index
    %310 = memref.load %arg3[%c0_125, %c6_126] : memref<8x8xf32, #tpu.memory_space<smem>>
    %311 = vector.broadcast %310 : f32 to vector<8x8xf32>
    %312 = arith.mulf %18, %311 : vector<8x8xf32>
    %c1_127 = arith.constant 1 : index
    %c6_128 = arith.constant 6 : index
    %313 = memref.load %arg3[%c1_127, %c6_128] : memref<8x8xf32, #tpu.memory_space<smem>>
    %314 = vector.broadcast %313 : f32 to vector<8x8xf32>
    %315 = arith.mulf %33, %314 : vector<8x8xf32>
    %316 = arith.addf %312, %315 : vector<8x8xf32>
    %c2_129 = arith.constant 2 : index
    %c6_130 = arith.constant 6 : index
    %317 = memref.load %arg3[%c2_129, %c6_130] : memref<8x8xf32, #tpu.memory_space<smem>>
    %318 = vector.broadcast %317 : f32 to vector<8x8xf32>
    %319 = arith.mulf %48, %318 : vector<8x8xf32>
    %320 = arith.addf %316, %319 : vector<8x8xf32>
    %c3_131 = arith.constant 3 : index
    %c6_132 = arith.constant 6 : index
    %321 = memref.load %arg3[%c3_131, %c6_132] : memref<8x8xf32, #tpu.memory_space<smem>>
    %322 = vector.broadcast %321 : f32 to vector<8x8xf32>
    %323 = arith.mulf %63, %322 : vector<8x8xf32>
    %324 = arith.addf %320, %323 : vector<8x8xf32>
    %c4_133 = arith.constant 4 : index
    %c6_134 = arith.constant 6 : index
    %325 = memref.load %arg3[%c4_133, %c6_134] : memref<8x8xf32, #tpu.memory_space<smem>>
    %326 = vector.broadcast %325 : f32 to vector<8x8xf32>
    %327 = arith.mulf %78, %326 : vector<8x8xf32>
    %328 = arith.addf %324, %327 : vector<8x8xf32>
    %c5_135 = arith.constant 5 : index
    %c6_136 = arith.constant 6 : index
    %329 = memref.load %arg3[%c5_135, %c6_136] : memref<8x8xf32, #tpu.memory_space<smem>>
    %330 = vector.broadcast %329 : f32 to vector<8x8xf32>
    %331 = arith.mulf %93, %330 : vector<8x8xf32>
    %332 = arith.addf %328, %331 : vector<8x8xf32>
    %c6_137 = arith.constant 6 : index
    %c6_138 = arith.constant 6 : index
    %333 = memref.load %arg3[%c6_137, %c6_138] : memref<8x8xf32, #tpu.memory_space<smem>>
    %334 = vector.broadcast %333 : f32 to vector<8x8xf32>
    %335 = arith.mulf %108, %334 : vector<8x8xf32>
    %336 = arith.addf %332, %335 : vector<8x8xf32>
    %c7_139 = arith.constant 7 : index
    %c6_140 = arith.constant 6 : index
    %337 = memref.load %arg3[%c7_139, %c6_140] : memref<8x8xf32, #tpu.memory_space<smem>>
    %338 = vector.broadcast %337 : f32 to vector<8x8xf32>
    %339 = arith.mulf %123, %338 : vector<8x8xf32>
    %340 = arith.addf %336, %339 : vector<8x8xf32>
    %c0_141 = arith.constant 0 : index
    %c7_142 = arith.constant 7 : index
    %341 = memref.load %arg3[%c0_141, %c7_142] : memref<8x8xf32, #tpu.memory_space<smem>>
    %342 = vector.broadcast %341 : f32 to vector<8x8xf32>
    %343 = arith.mulf %18, %342 : vector<8x8xf32>
    %c1_143 = arith.constant 1 : index
    %c7_144 = arith.constant 7 : index
    %344 = memref.load %arg3[%c1_143, %c7_144] : memref<8x8xf32, #tpu.memory_space<smem>>
    %345 = vector.broadcast %344 : f32 to vector<8x8xf32>
    %346 = arith.mulf %33, %345 : vector<8x8xf32>
    %347 = arith.addf %343, %346 : vector<8x8xf32>
    %c2_145 = arith.constant 2 : index
    %c7_146 = arith.constant 7 : index
    %348 = memref.load %arg3[%c2_145, %c7_146] : memref<8x8xf32, #tpu.memory_space<smem>>
    %349 = vector.broadcast %348 : f32 to vector<8x8xf32>
    %350 = arith.mulf %48, %349 : vector<8x8xf32>
    %351 = arith.addf %347, %350 : vector<8x8xf32>
    %c3_147 = arith.constant 3 : index
    %c7_148 = arith.constant 7 : index
    %352 = memref.load %arg3[%c3_147, %c7_148] : memref<8x8xf32, #tpu.memory_space<smem>>
    %353 = vector.broadcast %352 : f32 to vector<8x8xf32>
    %354 = arith.mulf %63, %353 : vector<8x8xf32>
    %355 = arith.addf %351, %354 : vector<8x8xf32>
    %c4_149 = arith.constant 4 : index
    %c7_150 = arith.constant 7 : index
    %356 = memref.load %arg3[%c4_149, %c7_150] : memref<8x8xf32, #tpu.memory_space<smem>>
    %357 = vector.broadcast %356 : f32 to vector<8x8xf32>
    %358 = arith.mulf %78, %357 : vector<8x8xf32>
    %359 = arith.addf %355, %358 : vector<8x8xf32>
    %c5_151 = arith.constant 5 : index
    %c7_152 = arith.constant 7 : index
    %360 = memref.load %arg3[%c5_151, %c7_152] : memref<8x8xf32, #tpu.memory_space<smem>>
    %361 = vector.broadcast %360 : f32 to vector<8x8xf32>
    %362 = arith.mulf %93, %361 : vector<8x8xf32>
    %363 = arith.addf %359, %362 : vector<8x8xf32>
    %c6_153 = arith.constant 6 : index
    %c7_154 = arith.constant 7 : index
    %364 = memref.load %arg3[%c6_153, %c7_154] : memref<8x8xf32, #tpu.memory_space<smem>>
    %365 = vector.broadcast %364 : f32 to vector<8x8xf32>
    %366 = arith.mulf %108, %365 : vector<8x8xf32>
    %367 = arith.addf %363, %366 : vector<8x8xf32>
    %c7_155 = arith.constant 7 : index
    %c7_156 = arith.constant 7 : index
    %368 = memref.load %arg3[%c7_155, %c7_156] : memref<8x8xf32, #tpu.memory_space<smem>>
    %369 = vector.broadcast %368 : f32 to vector<8x8xf32>
    %370 = arith.mulf %123, %369 : vector<8x8xf32>
    %371 = arith.addf %367, %370 : vector<8x8xf32>
    %372 = arith.addf %154, %185 : vector<8x8xf32>
    %373 = arith.addf %372, %216 : vector<8x8xf32>
    %374 = arith.addf %373, %247 : vector<8x8xf32>
    %375 = arith.addf %374, %278 : vector<8x8xf32>
    %376 = arith.addf %375, %309 : vector<8x8xf32>
    %377 = arith.addf %376, %340 : vector<8x8xf32>
    %378 = arith.addf %377, %371 : vector<8x8xf32>
    %cst_157 = arith.constant 1.250000e-01 : f32
    %379 = vector.broadcast %cst_157 : f32 to vector<8x8xf32>
    %380 = arith.mulf %378, %379 : vector<8x8xf32>
    %381 = arith.subf %154, %380 : vector<8x8xf32>
    %382 = arith.subf %154, %380 : vector<8x8xf32>
    %383 = arith.mulf %381, %382 : vector<8x8xf32>
    %384 = arith.subf %185, %380 : vector<8x8xf32>
    %385 = arith.mulf %384, %384 : vector<8x8xf32>
    %386 = arith.addf %383, %385 : vector<8x8xf32>
    %387 = arith.subf %216, %380 : vector<8x8xf32>
    %388 = arith.mulf %387, %387 : vector<8x8xf32>
    %389 = arith.addf %386, %388 : vector<8x8xf32>
    %390 = arith.subf %247, %380 : vector<8x8xf32>
    %391 = arith.mulf %390, %390 : vector<8x8xf32>
    %392 = arith.addf %389, %391 : vector<8x8xf32>
    %393 = arith.subf %278, %380 : vector<8x8xf32>
    %394 = arith.mulf %393, %393 : vector<8x8xf32>
    %395 = arith.addf %392, %394 : vector<8x8xf32>
    %396 = arith.subf %309, %380 : vector<8x8xf32>
    %397 = arith.mulf %396, %396 : vector<8x8xf32>
    %398 = arith.addf %395, %397 : vector<8x8xf32>
    %399 = arith.subf %340, %380 : vector<8x8xf32>
    %400 = arith.mulf %399, %399 : vector<8x8xf32>
    %401 = arith.addf %398, %400 : vector<8x8xf32>
    %402 = arith.subf %371, %380 : vector<8x8xf32>
    %403 = arith.mulf %402, %402 : vector<8x8xf32>
    %404 = arith.addf %401, %403 : vector<8x8xf32>
    %cst_158 = arith.constant 1.250000e-01 : f32
    %405 = vector.broadcast %cst_158 : f32 to vector<8x8xf32>
    %406 = arith.mulf %404, %405 : vector<8x8xf32>
    %cst_159 = arith.constant 9.99999974E-6 : f32
    %407 = vector.broadcast %cst_159 : f32 to vector<8x8xf32>
    %408 = arith.addf %406, %407 : vector<8x8xf32>
    %409 = math.rsqrt %408 : vector<8x8xf32>
    %410 = arith.subf %154, %380 : vector<8x8xf32>
    %411 = arith.mulf %410, %409 : vector<8x8xf32>
    %c0_160 = arith.constant 0 : index
    %412 = memref.load %arg4[%c0_160] : memref<8xf32, #tpu.memory_space<smem>>
    %413 = vector.broadcast %412 : f32 to vector<8x8xf32>
    %414 = arith.mulf %411, %413 : vector<8x8xf32>
    %c0_161 = arith.constant 0 : index
    %415 = memref.load %arg5[%c0_161] : memref<8xf32, #tpu.memory_space<smem>>
    %416 = vector.broadcast %415 : f32 to vector<8x8xf32>
    %417 = arith.addf %414, %416 : vector<8x8xf32>
    %cst_162 = arith.constant dense<0.000000e+00> : vector<8x16xf32>
    %418 = tpu.matmul %417, %6, %cst_162 {dimension_numbers = #tpu.dot_dimension_numbers<[1], [0], [0], [1], [0, 0, 1, 1], [], []>} : vector<8x8xf32>, vector<8x16xf32>, vector<8x16xf32> -> vector<8x16xf32>
    %c0_163 = arith.constant 0 : index
    %c0_164 = arith.constant 0 : index
    %419 = vector.load %arg6[%c0_163, %c0_164] : memref<128x32xf32, #tpu.memory_space<vmem>>, vector<16x32xf32>
    %cst_165 = arith.constant dense<0.000000e+00> : vector<8x32xf32>
    %420 = tpu.matmul %418, %419, %cst_165 {dimension_numbers = #tpu.dot_dimension_numbers<[1], [0], [0], [1], [0, 0, 1, 1], [], []>} : vector<8x16xf32>, vector<16x32xf32>, vector<8x32xf32> -> vector<8x32xf32>
    %421 = arith.subf %185, %380 : vector<8x8xf32>
    %422 = arith.mulf %421, %409 : vector<8x8xf32>
    %c1_166 = arith.constant 1 : index
    %423 = memref.load %arg4[%c1_166] : memref<8xf32, #tpu.memory_space<smem>>
    %424 = vector.broadcast %423 : f32 to vector<8x8xf32>
    %425 = arith.mulf %422, %424 : vector<8x8xf32>
    %c1_167 = arith.constant 1 : index
    %426 = memref.load %arg5[%c1_167] : memref<8xf32, #tpu.memory_space<smem>>
    %427 = vector.broadcast %426 : f32 to vector<8x8xf32>
    %428 = arith.addf %425, %427 : vector<8x8xf32>
    %cst_168 = arith.constant dense<0.000000e+00> : vector<8x16xf32>
    %429 = tpu.matmul %428, %21, %cst_168 {dimension_numbers = #tpu.dot_dimension_numbers<[1], [0], [0], [1], [0, 0, 1, 1], [], []>} : vector<8x8xf32>, vector<8x16xf32>, vector<8x16xf32> -> vector<8x16xf32>
    %c16 = arith.constant 16 : index
    %c0_169 = arith.constant 0 : index
    %430 = vector.load %arg6[%c16, %c0_169] : memref<128x32xf32, #tpu.memory_space<vmem>>, vector<16x32xf32>
    %cst_170 = arith.constant dense<0.000000e+00> : vector<8x32xf32>
    %431 = tpu.matmul %429, %430, %cst_170 {dimension_numbers = #tpu.dot_dimension_numbers<[1], [0], [0], [1], [0, 0, 1, 1], [], []>} : vector<8x16xf32>, vector<16x32xf32>, vector<8x32xf32> -> vector<8x32xf32>
    %432 = arith.addf %420, %431 : vector<8x32xf32>
    %433 = arith.subf %216, %380 : vector<8x8xf32>
    %434 = arith.mulf %433, %409 : vector<8x8xf32>
    %c2_171 = arith.constant 2 : index
    %435 = memref.load %arg4[%c2_171] : memref<8xf32, #tpu.memory_space<smem>>
    %436 = vector.broadcast %435 : f32 to vector<8x8xf32>
    %437 = arith.mulf %434, %436 : vector<8x8xf32>
    %c2_172 = arith.constant 2 : index
    %438 = memref.load %arg5[%c2_172] : memref<8xf32, #tpu.memory_space<smem>>
    %439 = vector.broadcast %438 : f32 to vector<8x8xf32>
    %440 = arith.addf %437, %439 : vector<8x8xf32>
    %cst_173 = arith.constant dense<0.000000e+00> : vector<8x16xf32>
    %441 = tpu.matmul %440, %36, %cst_173 {dimension_numbers = #tpu.dot_dimension_numbers<[1], [0], [0], [1], [0, 0, 1, 1], [], []>} : vector<8x8xf32>, vector<8x16xf32>, vector<8x16xf32> -> vector<8x16xf32>
    %c32 = arith.constant 32 : index
    %c0_174 = arith.constant 0 : index
    %442 = vector.load %arg6[%c32, %c0_174] : memref<128x32xf32, #tpu.memory_space<vmem>>, vector<16x32xf32>
    %cst_175 = arith.constant dense<0.000000e+00> : vector<8x32xf32>
    %443 = tpu.matmul %441, %442, %cst_175 {dimension_numbers = #tpu.dot_dimension_numbers<[1], [0], [0], [1], [0, 0, 1, 1], [], []>} : vector<8x16xf32>, vector<16x32xf32>, vector<8x32xf32> -> vector<8x32xf32>
    %444 = arith.addf %432, %443 : vector<8x32xf32>
    %445 = arith.subf %247, %380 : vector<8x8xf32>
    %446 = arith.mulf %445, %409 : vector<8x8xf32>
    %c3_176 = arith.constant 3 : index
    %447 = memref.load %arg4[%c3_176] : memref<8xf32, #tpu.memory_space<smem>>
    %448 = vector.broadcast %447 : f32 to vector<8x8xf32>
    %449 = arith.mulf %446, %448 : vector<8x8xf32>
    %c3_177 = arith.constant 3 : index
    %450 = memref.load %arg5[%c3_177] : memref<8xf32, #tpu.memory_space<smem>>
    %451 = vector.broadcast %450 : f32 to vector<8x8xf32>
    %452 = arith.addf %449, %451 : vector<8x8xf32>
    %cst_178 = arith.constant dense<0.000000e+00> : vector<8x16xf32>
    %453 = tpu.matmul %452, %51, %cst_178 {dimension_numbers = #tpu.dot_dimension_numbers<[1], [0], [0], [1], [0, 0, 1, 1], [], []>} : vector<8x8xf32>, vector<8x16xf32>, vector<8x16xf32> -> vector<8x16xf32>
    %c48 = arith.constant 48 : index
    %c0_179 = arith.constant 0 : index
    %454 = vector.load %arg6[%c48, %c0_179] : memref<128x32xf32, #tpu.memory_space<vmem>>, vector<16x32xf32>
    %cst_180 = arith.constant dense<0.000000e+00> : vector<8x32xf32>
    %455 = tpu.matmul %453, %454, %cst_180 {dimension_numbers = #tpu.dot_dimension_numbers<[1], [0], [0], [1], [0, 0, 1, 1], [], []>} : vector<8x16xf32>, vector<16x32xf32>, vector<8x32xf32> -> vector<8x32xf32>
    %456 = arith.addf %444, %455 : vector<8x32xf32>
    %457 = arith.subf %278, %380 : vector<8x8xf32>
    %458 = arith.mulf %457, %409 : vector<8x8xf32>
    %c4_181 = arith.constant 4 : index
    %459 = memref.load %arg4[%c4_181] : memref<8xf32, #tpu.memory_space<smem>>
    %460 = vector.broadcast %459 : f32 to vector<8x8xf32>
    %461 = arith.mulf %458, %460 : vector<8x8xf32>
    %c4_182 = arith.constant 4 : index
    %462 = memref.load %arg5[%c4_182] : memref<8xf32, #tpu.memory_space<smem>>
    %463 = vector.broadcast %462 : f32 to vector<8x8xf32>
    %464 = arith.addf %461, %463 : vector<8x8xf32>
    %cst_183 = arith.constant dense<0.000000e+00> : vector<8x16xf32>
    %465 = tpu.matmul %464, %66, %cst_183 {dimension_numbers = #tpu.dot_dimension_numbers<[1], [0], [0], [1], [0, 0, 1, 1], [], []>} : vector<8x8xf32>, vector<8x16xf32>, vector<8x16xf32> -> vector<8x16xf32>
    %c64 = arith.constant 64 : index
    %c0_184 = arith.constant 0 : index
    %466 = vector.load %arg6[%c64, %c0_184] : memref<128x32xf32, #tpu.memory_space<vmem>>, vector<16x32xf32>
    %cst_185 = arith.constant dense<0.000000e+00> : vector<8x32xf32>
    %467 = tpu.matmul %465, %466, %cst_185 {dimension_numbers = #tpu.dot_dimension_numbers<[1], [0], [0], [1], [0, 0, 1, 1], [], []>} : vector<8x16xf32>, vector<16x32xf32>, vector<8x32xf32> -> vector<8x32xf32>
    %468 = arith.addf %456, %467 : vector<8x32xf32>
    %469 = arith.subf %309, %380 : vector<8x8xf32>
    %470 = arith.mulf %469, %409 : vector<8x8xf32>
    %c5_186 = arith.constant 5 : index
    %471 = memref.load %arg4[%c5_186] : memref<8xf32, #tpu.memory_space<smem>>
    %472 = vector.broadcast %471 : f32 to vector<8x8xf32>
    %473 = arith.mulf %470, %472 : vector<8x8xf32>
    %c5_187 = arith.constant 5 : index
    %474 = memref.load %arg5[%c5_187] : memref<8xf32, #tpu.memory_space<smem>>
    %475 = vector.broadcast %474 : f32 to vector<8x8xf32>
    %476 = arith.addf %473, %475 : vector<8x8xf32>
    %cst_188 = arith.constant dense<0.000000e+00> : vector<8x16xf32>
    %477 = tpu.matmul %476, %81, %cst_188 {dimension_numbers = #tpu.dot_dimension_numbers<[1], [0], [0], [1], [0, 0, 1, 1], [], []>} : vector<8x8xf32>, vector<8x16xf32>, vector<8x16xf32> -> vector<8x16xf32>
    %c80 = arith.constant 80 : index
    %c0_189 = arith.constant 0 : index
    %478 = vector.load %arg6[%c80, %c0_189] : memref<128x32xf32, #tpu.memory_space<vmem>>, vector<16x32xf32>
    %cst_190 = arith.constant dense<0.000000e+00> : vector<8x32xf32>
    %479 = tpu.matmul %477, %478, %cst_190 {dimension_numbers = #tpu.dot_dimension_numbers<[1], [0], [0], [1], [0, 0, 1, 1], [], []>} : vector<8x16xf32>, vector<16x32xf32>, vector<8x32xf32> -> vector<8x32xf32>
    %480 = arith.addf %468, %479 : vector<8x32xf32>
    %481 = arith.subf %340, %380 : vector<8x8xf32>
    %482 = arith.mulf %481, %409 : vector<8x8xf32>
    %c6_191 = arith.constant 6 : index
    %483 = memref.load %arg4[%c6_191] : memref<8xf32, #tpu.memory_space<smem>>
    %484 = vector.broadcast %483 : f32 to vector<8x8xf32>
    %485 = arith.mulf %482, %484 : vector<8x8xf32>
    %c6_192 = arith.constant 6 : index
    %486 = memref.load %arg5[%c6_192] : memref<8xf32, #tpu.memory_space<smem>>
    %487 = vector.broadcast %486 : f32 to vector<8x8xf32>
    %488 = arith.addf %485, %487 : vector<8x8xf32>
    %cst_193 = arith.constant dense<0.000000e+00> : vector<8x16xf32>
    %489 = tpu.matmul %488, %96, %cst_193 {dimension_numbers = #tpu.dot_dimension_numbers<[1], [0], [0], [1], [0, 0, 1, 1], [], []>} : vector<8x8xf32>, vector<8x16xf32>, vector<8x16xf32> -> vector<8x16xf32>
    %c96 = arith.constant 96 : index
    %c0_194 = arith.constant 0 : index
    %490 = vector.load %arg6[%c96, %c0_194] : memref<128x32xf32, #tpu.memory_space<vmem>>, vector<16x32xf32>
    %cst_195 = arith.constant dense<0.000000e+00> : vector<8x32xf32>
    %491 = tpu.matmul %489, %490, %cst_195 {dimension_numbers = #tpu.dot_dimension_numbers<[1], [0], [0], [1], [0, 0, 1, 1], [], []>} : vector<8x16xf32>, vector<16x32xf32>, vector<8x32xf32> -> vector<8x32xf32>
    %492 = arith.addf %480, %491 : vector<8x32xf32>
    %493 = arith.subf %371, %380 : vector<8x8xf32>
    %494 = arith.mulf %493, %409 : vector<8x8xf32>
    %c7_196 = arith.constant 7 : index
    %495 = memref.load %arg4[%c7_196] : memref<8xf32, #tpu.memory_space<smem>>
    %496 = vector.broadcast %495 : f32 to vector<8x8xf32>
    %497 = arith.mulf %494, %496 : vector<8x8xf32>
    %c7_197 = arith.constant 7 : index
    %498 = memref.load %arg5[%c7_197] : memref<8xf32, #tpu.memory_space<smem>>
    %499 = vector.broadcast %498 : f32 to vector<8x8xf32>
    %500 = arith.addf %497, %499 : vector<8x8xf32>
    %cst_198 = arith.constant dense<0.000000e+00> : vector<8x16xf32>
    %501 = tpu.matmul %500, %111, %cst_198 {dimension_numbers = #tpu.dot_dimension_numbers<[1], [0], [0], [1], [0, 0, 1, 1], [], []>} : vector<8x8xf32>, vector<8x16xf32>, vector<8x16xf32> -> vector<8x16xf32>
    %c112 = arith.constant 112 : index
    %c0_199 = arith.constant 0 : index
    %502 = vector.load %arg6[%c112, %c0_199] : memref<128x32xf32, #tpu.memory_space<vmem>>, vector<16x32xf32>
    %cst_200 = arith.constant dense<0.000000e+00> : vector<8x32xf32>
    %503 = tpu.matmul %501, %502, %cst_200 {dimension_numbers = #tpu.dot_dimension_numbers<[1], [0], [0], [1], [0, 0, 1, 1], [], []>} : vector<8x16xf32>, vector<16x32xf32>, vector<8x32xf32> -> vector<8x32xf32>
    %504 = arith.addf %492, %503 : vector<8x32xf32>
    %c0_201 = arith.constant 0 : index
    %c0_202 = arith.constant 0 : index
    %505 = vector.load %arg7[%c0_201, %c0_202] : memref<1x32xf32, #tpu.memory_space<vmem>>, vector<1x32xf32>
    %506 = vector.broadcast %505 : vector<1x32xf32> to vector<8x32xf32>
    %507 = arith.addf %504, %506 : vector<8x32xf32>
    %c0_203 = arith.constant 0 : index
    %c0_204 = arith.constant 0 : index
    %c0_205 = arith.constant 0 : index
    %508 = vector.load %arg8[%c0_203, %c0_204, %c0_205] : memref<1x8x32xf32, #tpu.memory_space<vmem>>, vector<1x8x32xf32>
    %509 = vector.shape_cast %508 : vector<1x8x32xf32> to vector<8x32xf32>
    %510 = vector.shape_cast %507 : vector<8x32xf32> to vector<1x8x32xf32>
    tpu.vector_store %arg8[%c0_203, %c0_204, %c0_205], %510 {strides = array<i32>} : memref<1x8x32xf32, #tpu.memory_space<vmem>>, vector<1x8x32xf32>,
    return
  }
  func.func @transform_0(%arg0: i32) -> (i32, i32, i32) {
    %c0_i32 = arith.constant 0 : i32
    %c0_i32_0 = arith.constant 0 : i32
    %c0_i32_1 = arith.constant 0 : i32
    return %arg0, %c0_i32, %c0_i32_0 : i32, i32, i32
  }
  func.func @transform_1(%arg0: i32) -> (i32, i32) {
    %c0_i32 = arith.constant 0 : i32
    %c0_i32_0 = arith.constant 0 : i32
    %c0_i32_1 = arith.constant 0 : i32
    return %c0_i32, %c0_i32_0 : i32, i32
  }
  func.func @transform_2(%arg0: i32) -> (i32, i32) {
    %c0_i32 = arith.constant 0 : i32
    %c0_i32_0 = arith.constant 0 : i32
    %c0_i32_1 = arith.constant 0 : i32
    return %c0_i32, %c0_i32_0 : i32, i32
  }
  func.func @transform_3(%arg0: i32) -> i32 {
    %c0_i32 = arith.constant 0 : i32
    %c0_i32_0 = arith.constant 0 : i32
    return %c0_i32 : i32
  }
  func.func @transform_4(%arg0: i32) -> i32 {
    %c0_i32 = arith.constant 0 : i32
    %c0_i32_0 = arith.constant 0 : i32
    return %c0_i32 : i32
  }
  func.func @transform_5(%arg0: i32) -> (i32, i32) {
    %c0_i32 = arith.constant 0 : i32
    %c0_i32_0 = arith.constant 0 : i32
    %c0_i32_1 = arith.constant 0 : i32
    return %c0_i32, %c0_i32_0 : i32, i32
  }
  func.func @transform_6(%arg0: i32) -> (i32, i32) {
    %c0_i32 = arith.constant 0 : i32
    %c0_i32_0 = arith.constant 0 : i32
    %c0_i32_1 = arith.constant 0 : i32
    return %c0_i32, %c0_i32_0 : i32, i32
  }
  func.func @transform_7(%arg0: i32) -> (i32, i32, i32) {
    %c0_i32 = arith.constant 0 : i32
    %c0_i32_0 = arith.constant 0 : i32
    %c0_i32_1 = arith.constant 0 : i32
    return %arg0, %c0_i32, %c0_i32_0 : i32, i32, i32
  }
}

</mosaic_0001>

<llo_original>
// kernel: tpu_custom_call.1
$region0: #{tpu_custom_call.1}
  #allocation0 [shape = 'u32[]', space=smem, size = 0x4, offset = 0x4, fixed_abs, tag = 'smem constant byte address 0x4 - core index']
  #allocation1 [shape = 'u32[144,128]{1,0:T(1,128)}', space=vmem, size = 0x12000, scoped, tag = 'internal scratch']
  %s0 = inlined_call_operand.vmem [shape: f32[2,8,32], index: 0, kind: input, shape index: {}]
  %s1 = inlined_call_operand.vmem [shape: f32[32,384], index: 1, kind: input, shape index: {}]
  %s2 = inlined_call_operand.vmem [shape: f32[8,8], index: 2, kind: input, shape index: {}]
  %s3 = inlined_call_operand.vmem [shape: f32[8], index: 3, kind: input, shape index: {}]
  %s4 = inlined_call_operand.vmem [shape: f32[8], index: 4, kind: input, shape index: {}]
  %s5 = inlined_call_operand.vmem [shape: f32[128,32], index: 5, kind: input, shape index: {}]
  %s6 = inlined_call_operand.vmem [shape: f32[1,32], index: 6, kind: input, shape index: {}]
  %s7 = inlined_call_operand.hbm [shape: f32[2,8,32], index: 7, kind: output, shape index: {}]
  %s8 = sld [smem:[#allocation0]]
  $region73: #{tpu_custom_call.1} parent=0
    _
  %s10 = ssub.s32 1, %s8
  %s11 = scalar_select 0, %s10, %s8
  $region1: #{tpu_custom_call.1} parent=0
    #allocation2 [shape = 'u8[4096]{0}', space=smem, size = 0x1000, scoped, tag = 'input window, operand 2, single buffered']
    #allocation3 [shape = 's32[2]{0}', space=sflag, size = 0x8, scoped, tag = 'scoped memory for tpu_custom_call.1']
    #allocation4 [shape = 's32[2]{0}', space=sflag, size = 0x8, scoped, tag = 'scoped memory for tpu_custom_call.1']
    #allocation5 [shape = 'u8[512]{0}', space=smem, size = 0x200, scoped, tag = 'input window, operand 3, single buffered']
    #allocation6 [shape = 's32[1]{0}', space=sflag, size = 0x4, scoped, tag = 'scoped memory for tpu_custom_call.1']
    #allocation7 [shape = 'u8[512]{0}', space=smem, size = 0x200, scoped, tag = 'input window, operand 4, single buffered']
    #allocation8 [shape = 'u8[8192]{0}', space=vmem, size = 0x2000, scoped, tag = 'output window, operand 0']
    %12 = vsyncpa [#allocation4], 0
    %13 = vsyncpa [#allocation6], 0
    %14 = vsyncpa [#allocation3], 0
    %s15 = scalar_lea.sflag [#allocation3], 1
    %16 = vsyncpa %s15, 0
    loop: start=0, step=1, limit=4
    $region2: #{tpu_custom_call.1} parent=1 // loop_pre_header
      _
    $region3: #{tpu_custom_call.1} parent=1 // loop_header
      %s18 = sphi 0, %s22
      %p19 = scmp.ge.s32.totalorder %s18, 4
      %s28 = sphi 0, %s30
      %s31 = sphi 0, %s28
      %s32 = sphi 0, %s31
      %s48 = sphi 0, %s32
      %s52 = sphi 0, %s52
      %s54 = sphi 0, %s52
      %s55 = sphi 0, %s54
      %s69 = sphi 0, %s55
      %s73 = sphi 0, %s73
      %s75 = sphi 0, %s73
      %s76 = sphi 0, %s75
      %s90 = sphi 0, %s76
      %s94 = sphi 0, %s94
      %s96 = sphi 0, %s94
      %s97 = sphi 0, %s96
      %s111 = sphi 0, %s97
      %s115 = sphi 0, %s115
      %s117 = sphi 0, %s115
      %s118 = sphi 0, %s117
      %s132 = sphi 0, %s118
      %s136 = sphi 0, %s136
      %s138 = sphi 0, %s136
      %s139 = sphi 0, %s138
      %s153 = sphi 0, %s139
      %s157 = sphi 0, %s157
      %s159 = sphi 0, %s157
      %s160 = sphi 0, %s159
      %s174 = sphi 0, %s160
      %s180 = sphi 0, %s182
      %s183 = sphi 0, %s180
      %s184 = sphi 0, %s183
      %s200 = sphi 0, %s184
    $region4: #{tpu_custom_call.1} parent=1 // loop_header_branch
      %21 = sbr.rel (%p19) target = $region8
    $region5: #{tpu_custom_call.1} parent=1 // loop_body
      %s23 = ssub.s32 %s18, 1
      %s24 = ssub.s32 %s18, 2
      %s25 = sadd.s32 %s18, 1
      %s26 = ssub.s32 %s18, %s25
      %p27 = scmp.eq.s32.totalorder %s26, 0
      %s29 = sadd.s32 %s28, 1
      %s30 = scalar_select %p27, %s28, %s29
      %p33 = pneg %p27
      %p34 = scmp.eq.s32.totalorder %s18, 1
      %p35 = por %p33, %p34
      %p36 = scmp.ne.s32.totalorder %s28, %s31
      %p37 = scmp.eq.s32.totalorder %s18, 0
      %p38 = por %p36, %p37
      %p39 = scmp.ne.s32.totalorder %s28, %s31
      %p40 = scmp.eq.s32.totalorder %s23, 1
      %p41 = por %p39, %p40
      %p42 = scmp.ne.s32.totalorder %s31, %s32
      %p43 = scmp.eq.s32.totalorder %s23, 0
      %p44 = por %p42, %p43
      %p45 = scmp.ne.s32.totalorder %s31, %s32
      %p46 = scmp.eq.s32.totalorder %s24, 1
      %p47 = por %p45, %p46
      %p49 = scmp.ne.s32.totalorder %s32, %s48
      %p50 = scmp.eq.s32.totalorder %s24, 0
      %p51 = por %p49, %p50
      %s53 = sadd.s32 %s52, 1
      %p56 = scmp.eq.s32.totalorder %s18, 1
      %p57 = scmp.ne.s32.totalorder %s52, %s54
      %p58 = scmp.eq.s32.totalorder %s18, 0
      %p59 = por %p57, %p58
      %p60 = scmp.ne.s32.totalorder %s52, %s54
      %p61 = scmp.eq.s32.totalorder %s23, 1
      %p62 = por %p60, %p61
      %p63 = scmp.ne.s32.totalorder %s54, %s55
      %p64 = scmp.eq.s32.totalorder %s23, 0
      %p65 = por %p63, %p64
      %p66 = scmp.ne.s32.totalorder %s54, %s55
      %p67 = scmp.eq.s32.totalorder %s24, 1
      %p68 = por %p66, %p67
      %p70 = scmp.ne.s32.totalorder %s55, %s69
      %p71 = scmp.eq.s32.totalorder %s24, 0
      %p72 = por %p70, %p71
      %s74 = sadd.s32 %s73, 1
      %p77 = scmp.eq.s32.totalorder %s18, 1
      %p78 = scmp.ne.s32.totalorder %s73, %s75
      %p79 = scmp.eq.s32.totalorder %s18, 0
      %p80 = por %p78, %p79
      %p81 = scmp.ne.s32.totalorder %s73, %s75
      %p82 = scmp.eq.s32.totalorder %s23, 1
      %p83 = por %p81, %p82
      %p84 = scmp.ne.s32.totalorder %s75, %s76
      %p85 = scmp.eq.s32.totalorder %s23, 0
      %p86 = por %p84, %p85
      %p87 = scmp.ne.s32.totalorder %s75, %s76
      %p88 = scmp.eq.s32.totalorder %s24, 1
      %p89 = por %p87, %p88
      %p91 = scmp.ne.s32.totalorder %s76, %s90
      %p92 = scmp.eq.s32.totalorder %s24, 0
      %p93 = por %p91, %p92
      %s95 = sadd.s32 %s94, 1
      %p98 = scmp.eq.s32.totalorder %s18, 1
      %p99 = scmp.ne.s32.totalorder %s94, %s96
      %p100 = scmp.eq.s32.totalorder %s18, 0
      %p101 = por %p99, %p100
      %p102 = scmp.ne.s32.totalorder %s94, %s96
      %p103 = scmp.eq.s32.totalorder %s23, 1
      %p104 = por %p102, %p103
      %p105 = scmp.ne.s32.totalorder %s96, %s97
      %p106 = scmp.eq.s32.totalorder %s23, 0
      %p107 = por %p105, %p106
      %p108 = scmp.ne.s32.totalorder %s96, %s97
      %p109 = scmp.eq.s32.totalorder %s24, 1
      %p110 = por %p108, %p109
      %p112 = scmp.ne.s32.totalorder %s97, %s111
      %p113 = scmp.eq.s32.totalorder %s24, 0
      %p114 = por %p112, %p113
      %s116 = sadd.s32 %s115, 1
      %p119 = scmp.eq.s32.totalorder %s18, 1
      %p120 = scmp.ne.s32.totalorder %s115, %s117
      %p121 = scmp.eq.s32.totalorder %s18, 0
      %p122 = por %p120, %p121
      %p123 = scmp.ne.s32.totalorder %s115, %s117
      %p124 = scmp.eq.s32.totalorder %s23, 1
      %p125 = por %p123, %p124
      %p126 = scmp.ne.s32.totalorder %s117, %s118
      %p127 = scmp.eq.s32.totalorder %s23, 0
      %p128 = por %p126, %p127
      %p129 = scmp.ne.s32.totalorder %s117, %s118
      %p130 = scmp.eq.s32.totalorder %s24, 1
      %p131 = por %p129, %p130
      %p133 = scmp.ne.s32.totalorder %s118, %s132
      %p134 = scmp.eq.s32.totalorder %s24, 0
      %p135 = por %p133, %p134
      %s137 = sadd.s32 %s136, 1
      %p140 = scmp.eq.s32.totalorder %s18, 1
      %p141 = scmp.ne.s32.totalorder %s136, %s138
      %p142 = scmp.eq.s32.totalorder %s18, 0
      %p143 = por %p141, %p142
      %p144 = scmp.ne.s32.totalorder %s136, %s138
      %p145 = scmp.eq.s32.totalorder %s23, 1
      %p146 = por %p144, %p145
      %p147 = scmp.ne.s32.totalorder %s138, %s139
      %p148 = scmp.eq.s32.totalorder %s23, 0
      %p149 = por %p147, %p148
      %p150 = scmp.ne.s32.totalorder %s138, %s139
      %p151 = scmp.eq.s32.totalorder %s24, 1
      %p152 = por %p150, %p151
      %p154 = scmp.ne.s32.totalorder %s139, %s153
      %p155 = scmp.eq.s32.totalorder %s24, 0
      %p156 = por %p154, %p155
      %s158 = sadd.s32 %s157, 1
      %p161 = scmp.eq.s32.totalorder %s18, 1
      %p162 = scmp.ne.s32.totalorder %s157, %s159
      %p163 = scmp.eq.s32.totalorder %s18, 0
      %p164 = por %p162, %p163
      %p165 = scmp.ne.s32.totalorder %s157, %s159
      %p166 = scmp.eq.s32.totalorder %s23, 1
      %p167 = por %p165, %p166
      %p168 = scmp.ne.s32.totalorder %s159, %s160
      %p169 = scmp.eq.s32.totalorder %s23, 0
      %p170 = por %p168, %p169
      %p171 = scmp.ne.s32.totalorder %s159, %s160
      %p172 = scmp.eq.s32.totalorder %s24, 1
      %p173 = por %p171, %p172
      %p175 = scmp.ne.s32.totalorder %s160, %s174
      %p176 = scmp.eq.s32.totalorder %s24, 0
      %p177 = por %p175, %p176
      %s178 = ssub.s32 %s18, %s25
      %p179 = scmp.eq.s32.totalorder %s178, 0
      %s181 = sadd.s32 %s180, 1
      %s182 = scalar_select %p179, %s180, %s181
      %p185 = pneg %p179
      %p186 = scmp.eq.s32.totalorder %s18, 1
      %p187 = por %p185, %p186
      %p188 = scmp.ne.s32.totalorder %s180, %s183
      %p189 = scmp.eq.s32.totalorder %s18, 0
      %p190 = por %p188, %p189
      %p191 = scmp.ne.s32.totalorder %s180, %s183
      %p192 = scmp.eq.s32.totalorder %s23, 1
      %p193 = por %p191, %p192
      %p194 = scmp.ne.s32.totalorder %s183, %s184
      %p195 = scmp.eq.s32.totalorder %s23, 0
      %p196 = por %p194, %p195
      %p197 = scmp.ne.s32.totalorder %s183, %s184
      %p198 = scmp.eq.s32.totalorder %s24, 1
      %p199 = por %p197, %p198
      %p201 = scmp.ne.s32.totalorder %s184, %s200
      %p202 = scmp.eq.s32.totalorder %s24, 0
      %p203 = por %p201, %p202
      %p204 = scmp.le.s32.totalorder 1, %s18
      %p205 = scmp.lt.s32.totalorder %s18, 3
      %p206 = pnand %p204, %p205
      %p207 = pneg %p206
      // Predicated region
      $region9: #{tpu_custom_call.1} parent=5 // pred_check
        _
      $region10: #{tpu_custom_call.1} parent=5 // pred_check_branch
        %209 = sbr.rel (%p206) target = $region12
      $region11: #{tpu_custom_call.1} parent=5 // pred_region
        %s210 = ssub.s32 %s18, 1
        // Predicated region
        $region13: #{tpu_custom_call.1} parent=11 // pred_check
          %p211 = pneg %p65
        $region14: #{tpu_custom_call.1} parent=11 // pred_check_branch
          %213 = sbr.rel (%p211) target = $region16
        $region15: #{tpu_custom_call.1} parent=11 // pred_region
          _
        $region16: #{tpu_custom_call.1} parent=11 // pred_fallthru
          _
        // Predicated region
        $region17: #{tpu_custom_call.1} parent=11 // pred_check
          %p214 = pneg %p86
        $region18: #{tpu_custom_call.1} parent=11 // pred_check_branch
          %216 = sbr.rel (%p214) target = $region20
        $region19: #{tpu_custom_call.1} parent=11 // pred_region
          %s218 = ssub.s32 128, 128
          %219 = vsyncadd [#allocation4], %s218
          %s221 = sshll.u32 %s2, 4
          %s222 = int_to_ptr.vmem [resolvable:$true] %s221
          %224 = dma.vmem_to_smem %s222, 128, [#allocation2], [#allocation4]
        $region20: #{tpu_custom_call.1} parent=11 // pred_fallthru
          _
        // Predicated region
        $region21: #{tpu_custom_call.1} parent=11 // pred_check
          %p225 = pneg %p107
        $region22: #{tpu_custom_call.1} parent=11 // pred_check_branch
          %227 = sbr.rel (%p225) target = $region24
        $region23: #{tpu_custom_call.1} parent=11 // pred_region
          %s229 = ssub.s32 16, 16
          %230 = vsyncadd [#allocation6], %s229
          %s232 = sshll.u32 %s3, 4
          %s233 = int_to_ptr.vmem [resolvable:$true] %s232
          %235 = dma.vmem_to_smem %s233, 16, [#allocation5], [#allocation6]
        $region24: #{tpu_custom_call.1} parent=11 // pred_fallthru
          _
        // Predicated region
        $region25: #{tpu_custom_call.1} parent=11 // pred_check
          %p236 = pneg %p128
        $region26: #{tpu_custom_call.1} parent=11 // pred_check_branch
          %238 = sbr.rel (%p236) target = $region28
        $region27: #{tpu_custom_call.1} parent=11 // pred_region
          %s240 = ssub.s32 16, 16
          %241 = vsyncadd [#allocation6], %s240
          %s243 = sshll.u32 %s4, 4
          %s244 = int_to_ptr.vmem [resolvable:$true] %s243
          %246 = dma.vmem_to_smem %s244, 16, [#allocation7], [#allocation6]
        $region28: #{tpu_custom_call.1} parent=11 // pred_fallthru
          _
        // Predicated region
        $region29: #{tpu_custom_call.1} parent=11 // pred_check
          %p247 = pneg %p149
        $region30: #{tpu_custom_call.1} parent=11 // pred_check_branch
          %249 = sbr.rel (%p247) target = $region32
        $region31: #{tpu_custom_call.1} parent=11 // pred_region
          _
        $region32: #{tpu_custom_call.1} parent=11 // pred_fallthru
          _
        // Predicated region
        $region33: #{tpu_custom_call.1} parent=11 // pred_check
          %p250 = pneg %p170
        $region34: #{tpu_custom_call.1} parent=11 // pred_check_branch
          %252 = sbr.rel (%p250) target = $region36
        $region35: #{tpu_custom_call.1} parent=11 // pred_region
          _
        $region36: #{tpu_custom_call.1} parent=11 // pred_fallthru
          _
      $region12: #{tpu_custom_call.1} parent=5 // pred_fallthru
        _
      %p253 = scmp.lt.s32.totalorder %s18, 2
      // Predicated region
      $region37: #{tpu_custom_call.1} parent=5 // pred_check
        %p254 = pneg %p253
      $region38: #{tpu_custom_call.1} parent=5 // pred_check_branch
        %256 = sbr.rel (%p254) target = $region40
      $region39: #{tpu_custom_call.1} parent=5 // pred_region
        // Predicated region
        $region41: #{tpu_custom_call.1} parent=39 // pred_check
          %p257 = pneg %p38
        $region42: #{tpu_custom_call.1} parent=39 // pred_check_branch
          %259 = sbr.rel (%p257) target = $region44
        $region43: #{tpu_custom_call.1} parent=39 // pred_region
          %p260 = scmp.lt.s32.totalorder %s18, 1
          %s261 = scalar_select %p260, %s18, 1
          %s262 = smul.addr %s261, 8
          %s263 = scalar_lea.vmem %s0, %s262
        $region44: #{tpu_custom_call.1} parent=39 // pred_fallthru
          _
      $region40: #{tpu_custom_call.1} parent=5 // pred_fallthru
        _
      %p264 = scmp.le.s32.totalorder 1, %s18
      %p265 = scmp.lt.s32.totalorder %s18, 3
      %p266 = pnand %p264, %p265
      %p267 = pneg %p266
      // Predicated region
      $region45: #{tpu_custom_call.1} parent=5 // pred_check
        _
      $region46: #{tpu_custom_call.1} parent=5 // pred_check_branch
        %269 = sbr.rel (%p266) target = $region48
      $region47: #{tpu_custom_call.1} parent=5 // pred_region
        %s270 = ssub.s32 %s18, 1
        // Predicated region
        $region49: #{tpu_custom_call.1} parent=47 // pred_check
          %p271 = pneg %p86
        $region50: #{tpu_custom_call.1} parent=47 // pred_check_branch
          %273 = sbr.rel (%p271) target = $region52
        $region51: #{tpu_custom_call.1} parent=47 // pred_region
          %274 = dma.done [#allocation4], 128
        $region52: #{tpu_custom_call.1} parent=47 // pred_fallthru
          _
        // Predicated region
        $region53: #{tpu_custom_call.1} parent=47 // pred_check
          %p275 = pneg %p107
        $region54: #{tpu_custom_call.1} parent=47 // pred_check_branch
          %277 = sbr.rel (%p275) target = $region56
        $region55: #{tpu_custom_call.1} parent=47 // pred_region
          %278 = dma.done [#allocation6], 16
        $region56: #{tpu_custom_call.1} parent=47 // pred_fallthru
          _
        // Predicated region
        $region57: #{tpu_custom_call.1} parent=47 // pred_check
          %p279 = pneg %p128
        $region58: #{tpu_custom_call.1} parent=47 // pred_check_branch
          %281 = sbr.rel (%p279) target = $region60
        $region59: #{tpu_custom_call.1} parent=47 // pred_region
          %282 = dma.done [#allocation6], 16
        $region60: #{tpu_custom_call.1} parent=47 // pred_fallthru
          _
        %283 = sfence
        %p284 = scmp.lt.s32.totalorder %s23, 1
        %s285 = scalar_select %p284, %s23, 1
        %s286 = smul.addr %s285, 8
        %s287 = scalar_lea.vmem %s0, %s286
        %p288 = pneg %p44
        %p289 = pneg %p41
        %p290 = pneg %p65
        %p291 = pneg %p62
        %p292 = pneg %p86
        %p293 = pneg %p83
        %p294 = pneg %p107
        %p295 = pneg %p104
        %p296 = pneg %p128
        %p297 = pneg %p125
        %p298 = pneg %p149
        %p299 = pneg %p146
        %p300 = pneg %p170
        %p301 = pneg %p167
        %p302 = pneg %p196
        %p303 = pneg %p193
        %s304 = sand.u32 %s183, 1
        %s305 = scalar_lea.sflag [#allocation3], %s304
        %s306 = sand.u32 %s183, 1
        %s307 = smul.addr %s306, 8
        %s308 = scalar_lea.vmem [#allocation8], %s307
        %p309 = scmp.lt.s32.totalorder %s23, 1
        %s310 = scalar_select %p309, %s23, 1
        %s311 = smul.addr %s310, 8
        %s312 = scalar_lea.vmem %s0, %s311
        %v313 = vld [vmem:[%s312] sm:$0xff]
        %v314 = vld [vmem:[%s1] sm:$0xff]
        %v315 = vld [vmem:[%s1 + $0x8] sm:$0xff]
        %v316 = vld [vmem:[%s1 + $0x10] sm:$0xff]
        %v317 = vld [vmem:[%s1 + $0x18] sm:$0xff]
        %v318 = vld [vmem:[%s1 + $0x20] sm:$0xff]
        %v319 = vld [vmem:[%s1 + $0x28] sm:$0xff]
        %v320 = vld [vmem:[%s1 + $0x30] sm:$0xff]
        %v321 = vld [vmem:[%s1 + $0x38] sm:$0xff]
        %v322 = vld [vmem:[%s1 + $0x40] sm:$0xff]
        %v323 = vld [vmem:[%s1 + $0x48] sm:$0xff]
        %v324 = vld [vmem:[%s1 + $0x50] sm:$0xff]
        %v325 = vld [vmem:[%s1 + $0x58] sm:$0xff]
        %vm326 = vcmask 261120
        %v328 = vsel %vm326, %v313, 0
        %330 = vmatprep.subr.mxu0 %v315
        %331 = vmatpush1.msra.mxu0 %v314
        %332 = vmatprep.subr.mxu0 %v318
        %333 = vmatpush1.msra.mxu0 %v317
        %334 = vmatprep.subr.mxu0 %v321
        %335 = vmatpush1.msra.mxu0 %v320
        %336 = vmatprep.subr.mxu0 %v324
        %337 = vmatpush1.msra.mxu0 %v323
        %338 = vmatprep.subr.mxu0 0.0
        %339 = vmatpush1.msra.mxu0 0.0
        %340 = vmatprep.subr.mxu0 0.0
        %341 = vmatpush1.msra.mxu0 0.0
        %342 = vmatprep.subr.mxu0 0.0
        %343 = vmatpush1.msra.mxu0 0.0
        %344 = vmatprep.subr.mxu0 0.0
        %345 = vmatpush1.msra.mxu0 0.0
        %346 = vmatprep.subr.mxu0 0.0
        %347 = vmatpush1.msra.mxu0 0.0
        %348 = vmatprep.subr.mxu0 0.0
        %349 = vmatpush1.msra.mxu0 0.0
        %350 = vmatprep.subr.mxu0 0.0
        %351 = vmatpush1.msra.mxu0 0.0
        %352 = vmatprep.subr.mxu0 0.0
        %353 = vmatpush1.msra.mxu0 0.0
        %354 = vmatprep.subr.mxu0 0.0
        %355 = vmatpush1.msra.mxu0 0.0
        %356 = vmatprep.subr.mxu0 0.0
        %357 = vmatpush1.msra.mxu0 0.0
        %358 = vmatprep.subr.mxu0 0.0
        %359 = vmatpush1.msra.mxu0 0.0
        %360 = vmatprep.subr.mxu0 0.0
        %361 = vmatpush1.msra.mxu0 0.0
        %362 = vmatprep.subr.mxu0 0.0
        %363 = vmatpush1.msra.mxu0 0.0
        %364 = vmatprep.subr.mxu0 0.0
        %365 = vmatpush1.msra.mxu0 0.0
        %366 = vmatprep.subr.mxu0 0.0
        %367 = vmatpush1.msra.mxu0 0.0
        %368 = vmatprep.subr.mxu0 0.0
        %369 = vmatpush1.msra.mxu0 0.0
        %370 = vmatprep.subr.mxu0 0.0
        %371 = vmatpush1.msra.mxu0 0.0
        %372 = vmatprep.subr.mxu0 0.0
        %373 = vmatpush1.msra.mxu0 0.0
        %374 = vmatprep.subr.mxu0 0.0
        %375 = vmatpush1.msra.mxu0 0.0
        %376 = vmatprep.subr.mxu0 0.0
        %377 = vmatpush1.msra.mxu0 0.0
        %378 = vmatprep.subr.mxu0 0.0
        %379 = vmatpush1.msra.mxu0 0.0
        %380 = vmatprep.subr.mxu0 0.0
        %381 = vmatpush1.msra.mxu0 0.0
        %382 = vmatprep.subr.mxu0 0.0
        %383 = vmatpush1.msra.mxu0 0.0
        %384 = vmatprep.subr.mxu0 0.0
        %385 = vmatpush1.msra.mxu0 0.0
        %386 = vmatprep.subr.mxu0 0.0
        %387 = vmatpush1.msra.mxu0 0.0
        %388 = vmatprep.subr.mxu0 0.0
        %389 = vmatpush1.msra.mxu0 0.0
        %390 = vmatprep.subr.mxu0 0.0
        %391 = vmatpush1.msra.mxu0 0.0
        %392 = vmatprep.subr.mxu0 0.0
        %393 = vmatpush1.msra.mxu0 0.0
        %394 = vmatprep.mubr.f32.mxu0 0.0
        %395 = vmatmul.mubr.f32.gmra.mrb[0].mxu0 %v328
        %v396 = vpop.f32.mrb[0].mxu0
        %v397 = vadd.f32 0.0, %v396
        %v398 = vpop.f32.mrb[0].mxu0
        %v399 = vadd.f32 0.0, %v398
        %400 = vdwg.mxu0
        %401 = vmatprep.subr.mxu0 0.0
        %402 = vmatpush1.msra.mxu0 %v316
        %403 = vmatprep.subr.mxu0 0.0
        %404 = vmatpush1.msra.mxu0 %v319
        %405 = vmatprep.subr.mxu0 0.0
        %406 = vmatpush1.msra.mxu0 %v322
        %407 = vmatprep.subr.mxu0 0.0
        %408 = vmatpush1.msra.mxu0 %v325
        %409 = vmatprep.subr.mxu0 0.0
        %410 = vmatpush1.msra.mxu0 0.0
        %411 = vmatprep.subr.mxu0 0.0
        %412 = vmatpush1.msra.mxu0 0.0
        %413 = vmatprep.subr.mxu0 0.0
        %414 = vmatpush1.msra.mxu0 0.0
        %415 = vmatprep.subr.mxu0 0.0
        %416 = vmatpush1.msra.mxu0 0.0
        %417 = vmatprep.subr.mxu0 0.0
        %418 = vmatpush1.msra.mxu0 0.0
        %419 = vmatprep.subr.mxu0 0.0
        %420 = vmatpush1.msra.mxu0 0.0
        %421 = vmatprep.subr.mxu0 0.0
        %422 = vmatpush1.msra.mxu0 0.0
        %423 = vmatprep.subr.mxu0 0.0
        %424 = vmatpush1.msra.mxu0 0.0
        %425 = vmatprep.subr.mxu0 0.0
        %426 = vmatpush1.msra.mxu0 0.0
        %427 = vmatprep.subr.mxu0 0.0
        %428 = vmatpush1.msra.mxu0 0.0
        %429 = vmatprep.subr.mxu0 0.0
        %430 = vmatpush1.msra.mxu0 0.0
        %431 = vmatprep.subr.mxu0 0.0
        %432 = vmatpush1.msra.mxu0 0.0
        %433 = vmatprep.subr.mxu0 0.0
        %434 = vmatpush1.msra.mxu0 0.0
        %435 = vmatprep.subr.mxu0 0.0
        %436 = vmatpush1.msra.mxu0 0.0
        %437 = vmatprep.subr.mxu0 0.0
        %438 = vmatpush1.msra.mxu0 0.0
        %439 = vmatprep.subr.mxu0 0.0
        %440 = vmatpush1.msra.mxu0 0.0
        %441 = vmatprep.subr.mxu0 0.0
        %442 = vmatpush1.msra.mxu0 0.0
        %443 = vmatprep.subr.mxu0 0.0
        %444 = vmatpush1.msra.mxu0 0.0
        %445 = vmatprep.subr.mxu0 0.0
        %446 = vmatpush1.msra.mxu0 0.0
        %447 = vmatprep.subr.mxu0 0.0
        %448 = vmatpush1.msra.mxu0 0.0
        %449 = vmatprep.subr.mxu0 0.0
        %450 = vmatpush1.msra.mxu0 0.0
        %451 = vmatprep.subr.mxu0 0.0
        %452 = vmatpush1.msra.mxu0 0.0
        %453 = vmatprep.subr.mxu0 0.0
        %454 = vmatpush1.msra.mxu0 0.0
        %455 = vmatprep.subr.mxu0 0.0
        %456 = vmatpush1.msra.mxu0 0.0
        %457 = vmatprep.subr.mxu0 0.0
        %458 = vmatpush1.msra.mxu0 0.0
        %459 = vmatprep.subr.mxu0 0.0
        %460 = vmatpush1.msra.mxu0 0.0
        %461 = vmatprep.subr.mxu0 0.0
        %462 = vmatpush1.msra.mxu0 0.0
        %463 = vmatprep.subr.mxu0 0.0
        %464 = vmatpush1.msra.mxu0 0.0
        %465 = vmatprep.mubr.f32.mxu0 0.0
        %466 = vmatmul.mubr.f32.gmra.mrb[0].mxu0 %v328
        %v467 = vpop.f32.mrb[0].mxu0
        %v468 = vadd.f32 0.0, %v467
        %v469 = vpop.f32.mrb[0].mxu0
        %470 = vdwg.mxu0
        %vm471 = vcmask 130048
        %v473 = vsel %vm471, %v397, 0
        %v476 = vsel %vm471, %v399, 0
        %478 = vmatprep.subr.mxu0 0.0
        %479 = vmatpush1.xpose.msra.mxu0 %v476
        %480 = vmatprep.subr.mxu0 0.0
        %481 = vmatpush1.xpose.msra.mxu0 0.0
        %482 = vmatprep.subr.mxu0 0.0
        %483 = vmatpush1.xpose.msra.mxu0 0.0
        %484 = vmatprep.subr.mxu0 0.0
        %485 = vmatpush1.xpose.msra.mxu0 0.0
        %486 = vmatprep.subr.mxu0 0.0
        %487 = vmatpush1.xpose.msra.mxu0 0.0
        %488 = vmatprep.subr.mxu0 0.0
        %489 = vmatpush1.xpose.msra.mxu0 0.0
        %490 = vmatprep.subr.mxu0 0.0
        %491 = vmatpush1.xpose.msra.mxu0 0.0
        %492 = vmatprep.subr.mxu0 0.0
        %493 = vmatpush1.xpose.msra.mxu0 0.0
        %494 = vmatprep.subr.mxu0 0.0
        %495 = vmatpush1.xpose.msra.mxu0 0.0
        %496 = vmatprep.subr.mxu0 0.0
        %497 = vmatpush1.xpose.msra.mxu0 0.0
        %498 = vmatprep.subr.mxu0 0.0
        %499 = vmatpush1.xpose.msra.mxu0 0.0
        %500 = vmatprep.subr.mxu0 0.0
        %501 = vmatpush1.xpose.msra.mxu0 0.0
        %502 = vmatprep.subr.mxu0 0.0
        %503 = vmatpush1.xpose.msra.mxu0 0.0
        %504 = vmatprep.subr.mxu0 0.0
        %505 = vmatpush1.xpose.msra.mxu0 0.0
        %506 = vmatprep.subr.mxu0 0.0
        %507 = vmatpush1.xpose.msra.mxu0 0.0
        %508 = vmatprep.subr.mxu0 0.0
        %509 = vmatpush1.xpose.msra.mxu0 0.0
        %510 = vmatprep.subr.mxu0 0.0
        %511 = vmatpush1.xpose.msra.mxu0 0.0
        %512 = vmatprep.subr.mxu0 0.0
        %513 = vmatpush1.xpose.msra.mxu0 0.0
        %514 = vmatprep.subr.mxu0 0.0
        %515 = vmatpush1.xpose.msra.mxu0 0.0
        %516 = vmatprep.subr.mxu0 0.0
        %517 = vmatpush1.xpose.msra.mxu0 0.0
        %518 = vmatprep.subr.mxu0 0.0
        %519 = vmatpush1.xpose.msra.mxu0 0.0
        %520 = vmatprep.subr.mxu0 0.0
        %521 = vmatpush1.xpose.msra.mxu0 0.0
        %522 = vmatprep.subr.mxu0 0.0
        %523 = vmatpush1.xpose.msra.mxu0 0.0
        %524 = vmatprep.subr.mxu0 0.0
        %525 = vmatpush1.xpose.msra.mxu0 0.0
        %526 = vmatprep.subr.mxu0 0.0
        %527 = vmatpush1.xpose.msra.mxu0 0.0
        %528 = vmatprep.subr.mxu0 0.0
        %529 = vmatpush1.xpose.msra.mxu0 0.0
        %530 = vmatprep.subr.mxu0 0.0
        %531 = vmatpush1.xpose.msra.mxu0 0.0
        %532 = vmatprep.subr.mxu0 0.0
        %533 = vmatpush1.xpose.msra.mxu0 0.0
        %534 = vmatprep.subr.mxu0 0.0
        %535 = vmatpush1.xpose.msra.mxu0 0.0
        %536 = vmatprep.subr.mxu0 0.0
        %537 = vmatpush1.xpose.msra.mxu0 0.0
        %538 = vmatprep.subr.mxu0 0.0
        %539 = vmatpush1.xpose.msra.mxu0 0.0
        %540 = vmatprep.subr.mxu0 0.0
        %541 = vmatpush1.xpose.msra.mxu0 0.0
        %542 = vmatprep.mubr.f32.mxu0 0.0
        %543 = vmatmul.mubr.f32.gmra.mrb[0].mxu0 %v473
        %v544 = vpop.f32.mrb[0].mxu0
        %v545 = vadd.f32 0.0, %v544
        %v546 = vpop.f32.mrb[0].mxu0
        %547 = vdwg.mxu0
        %v548 = vmul.f32 %v545, 0.25
        %vm549 = vcmask 64512
        %v550 = vsel %vm549, %v548, -inf
        %551 = vmax.xlane.f32.xlu0 %v550
        %v552 = vpop.xlane.xlu0 %551
        %v553 = vsub.f32 %v548, %v552
        %v554 = vmul.f32 %v553, 1.442695
        %v555 = vpow.pop %v554
        %v556 = vsel %vm549, %v555, 0.0
        %557 = vadd.xlane.f32.xlu0 %v556
        %v558 = vpop.xlane.xlu0 %557
        %v559 = vrcp.pop %v558
        %v560 = vmul.f32 %v555, %v559
        %561 = vrot.lane.b32.xlu0 %v397, 112
        %v562 = vpop.permute.xlu0 %561
        %563 = vrot.lane.b32.xlu0 %v399, 112
        %v564 = vpop.permute.xlu0 %563
        %v565 = vsel %vm471, %v562, 0
        %v567 = vsel %vm471, %v564, 0
        %569 = vmatprep.subr.mxu0 0.0
        %570 = vmatpush1.xpose.msra.mxu0 %v567
        %571 = vmatprep.subr.mxu0 0.0
        %572 = vmatpush1.xpose.msra.mxu0 0.0
        %573 = vmatprep.subr.mxu0 0.0
        %574 = vmatpush1.xpose.msra.mxu0 0.0
        %575 = vmatprep.subr.mxu0 0.0
        %576 = vmatpush1.xpose.msra.mxu0 0.0
        %577 = vmatprep.subr.mxu0 0.0
        %578 = vmatpush1.xpose.msra.mxu0 0.0
        %579 = vmatprep.subr.mxu0 0.0
        %580 = vmatpush1.xpose.msra.mxu0 0.0
        %581 = vmatprep.subr.mxu0 0.0
        %582 = vmatpush1.xpose.msra.mxu0 0.0
        %583 = vmatprep.subr.mxu0 0.0
        %584 = vmatpush1.xpose.msra.mxu0 0.0
        %585 = vmatprep.subr.mxu0 0.0
        %586 = vmatpush1.xpose.msra.mxu0 0.0
        %587 = vmatprep.subr.mxu0 0.0
        %588 = vmatpush1.xpose.msra.mxu0 0.0
        %589 = vmatprep.subr.mxu0 0.0
        %590 = vmatpush1.xpose.msra.mxu0 0.0
        %591 = vmatprep.subr.mxu0 0.0
        %592 = vmatpush1.xpose.msra.mxu0 0.0
        %593 = vmatprep.subr.mxu0 0.0
        %594 = vmatpush1.xpose.msra.mxu0 0.0
        %595 = vmatprep.subr.mxu0 0.0
        %596 = vmatpush1.xpose.msra.mxu0 0.0
        %597 = vmatprep.subr.mxu0 0.0
        %598 = vmatpush1.xpose.msra.mxu0 0.0
        %599 = vmatprep.subr.mxu0 0.0
        %600 = vmatpush1.xpose.msra.mxu0 0.0
        %601 = vmatprep.subr.mxu0 0.0
        %602 = vmatpush1.xpose.msra.mxu0 0.0
        %603 = vmatprep.subr.mxu0 0.0
        %604 = vmatpush1.xpose.msra.mxu0 0.0
        %605 = vmatprep.subr.mxu0 0.0
        %606 = vmatpush1.xpose.msra.mxu0 0.0
        %607 = vmatprep.subr.mxu0 0.0
        %608 = vmatpush1.xpose.msra.mxu0 0.0
        %609 = vmatprep.subr.mxu0 0.0
        %610 = vmatpush1.xpose.msra.mxu0 0.0
        %611 = vmatprep.subr.mxu0 0.0
        %612 = vmatpush1.xpose.msra.mxu0 0.0
        %613 = vmatprep.subr.mxu0 0.0
        %614 = vmatpush1.xpose.msra.mxu0 0.0
        %615 = vmatprep.subr.mxu0 0.0
        %616 = vmatpush1.xpose.msra.mxu0 0.0
        %617 = vmatprep.subr.mxu0 0.0
        %618 = vmatpush1.xpose.msra.mxu0 0.0
        %619 = vmatprep.subr.mxu0 0.0
        %620 = vmatpush1.xpose.msra.mxu0 0.0
        %621 = vmatprep.subr.mxu0 0.0
        %622 = vmatpush1.xpose.msra.mxu0 0.0
        %623 = vmatprep.subr.mxu0 0.0
        %624 = vmatpush1.xpose.msra.mxu0 0.0
        %625 = vmatprep.subr.mxu0 0.0
        %626 = vmatpush1.xpose.msra.mxu0 0.0
        %627 = vmatprep.subr.mxu0 0.0
        %628 = vmatpush1.xpose.msra.mxu0 0.0
        %629 = vmatprep.subr.mxu0 0.0
        %630 = vmatpush1.xpose.msra.mxu0 0.0
        %631 = vmatprep.subr.mxu0 0.0
        %632 = vmatpush1.xpose.msra.mxu0 0.0
        %633 = vmatprep.mubr.f32.mxu0 0.0
        %634 = vmatmul.mubr.f32.gmra.mrb[0].mxu0 %v565
        %v635 = vpop.f32.mrb[0].mxu0
        %v636 = vadd.f32 0.0, %v635
        %v637 = vpop.f32.mrb[0].mxu0
        %638 = vdwg.mxu0
        %v639 = vmul.f32 %v636, 0.25
        %v640 = vsel %vm549, %v639, -inf
        %641 = vmax.xlane.f32.xlu0 %v640
        %v642 = vpop.xlane.xlu0 %641
        %v643 = vsub.f32 %v639, %v642
        %v644 = vmul.f32 %v643, 1.442695
        %v645 = vpow.pop %v644
        %v646 = vsel %vm549, %v645, 0.0
        %647 = vadd.xlane.f32.xlu0 %v646
        %v648 = vpop.xlane.xlu0 %647
        %v649 = vrcp.pop %v648
        %v650 = vmul.f32 %v645, %v649
        %651 = vrot.lane.b32.xlu0 %v397, 96
        %v652 = vpop.permute.xlu0 %651
        %653 = vrot.lane.b32.xlu0 %v399, 96
        %v654 = vpop.permute.xlu0 %653
        %v655 = vsel %vm471, %v652, 0
        %v657 = vsel %vm471, %v654, 0
        %659 = vmatprep.subr.mxu0 0.0
        %660 = vmatpush1.xpose.msra.mxu0 %v657
        %661 = vmatprep.subr.mxu0 0.0
        %662 = vmatpush1.xpose.msra.mxu0 0.0
        %663 = vmatprep.subr.mxu0 0.0
        %664 = vmatpush1.xpose.msra.mxu0 0.0
        %665 = vmatprep.subr.mxu0 0.0
        %666 = vmatpush1.xpose.msra.mxu0 0.0
        %667 = vmatprep.subr.mxu0 0.0
        %668 = vmatpush1.xpose.msra.mxu0 0.0
        %669 = vmatprep.subr.mxu0 0.0
        %670 = vmatpush1.xpose.msra.mxu0 0.0
        %671 = vmatprep.subr.mxu0 0.0
        %672 = vmatpush1.xpose.msra.mxu0 0.0
        %673 = vmatprep.subr.mxu0 0.0
        %674 = vmatpush1.xpose.msra.mxu0 0.0
        %675 = vmatprep.subr.mxu0 0.0
        %676 = vmatpush1.xpose.msra.mxu0 0.0
        %677 = vmatprep.subr.mxu0 0.0
        %678 = vmatpush1.xpose.msra.mxu0 0.0
        %679 = vmatprep.subr.mxu0 0.0
        %680 = vmatpush1.xpose.msra.mxu0 0.0
        %681 = vmatprep.subr.mxu0 0.0
        %682 = vmatpush1.xpose.msra.mxu0 0.0
        %683 = vmatprep.subr.mxu0 0.0
        %684 = vmatpush1.xpose.msra.mxu0 0.0
        %685 = vmatprep.subr.mxu0 0.0
        %686 = vmatpush1.xpose.msra.mxu0 0.0
        %687 = vmatprep.subr.mxu0 0.0
        %688 = vmatpush1.xpose.msra.mxu0 0.0
        %689 = vmatprep.subr.mxu0 0.0
        %690 = vmatpush1.xpose.msra.mxu0 0.0
        %691 = vmatprep.subr.mxu0 0.0
        %692 = vmatpush1.xpose.msra.mxu0 0.0
        %693 = vmatprep.subr.mxu0 0.0
        %694 = vmatpush1.xpose.msra.mxu0 0.0
        %695 = vmatprep.subr.mxu0 0.0
        %696 = vmatpush1.xpose.msra.mxu0 0.0
        %697 = vmatprep.subr.mxu0 0.0
        %698 = vmatpush1.xpose.msra.mxu0 0.0
        %699 = vmatprep.subr.mxu0 0.0
        %700 = vmatpush1.xpose.msra.mxu0 0.0
        %701 = vmatprep.subr.mxu0 0.0
        %702 = vmatpush1.xpose.msra.mxu0 0.0
        %703 = vmatprep.subr.mxu0 0.0
        %704 = vmatpush1.xpose.msra.mxu0 0.0
        %705 = vmatprep.subr.mxu0 0.0
        %706 = vmatpush1.xpose.msra.mxu0 0.0
        %707 = vmatprep.subr.mxu0 0.0
        %708 = vmatpush1.xpose.msra.mxu0 0.0
        %709 = vmatprep.subr.mxu0 0.0
        %710 = vmatpush1.xpose.msra.mxu0 0.0
        %711 = vmatprep.subr.mxu0 0.0
        %712 = vmatpush1.xpose.msra.mxu0 0.0
        %713 = vmatprep.subr.mxu0 0.0
        %714 = vmatpush1.xpose.msra.mxu0 0.0
        %715 = vmatprep.subr.mxu0 0.0
        %716 = vmatpush1.xpose.msra.mxu0 0.0
        %717 = vmatprep.subr.mxu0 0.0
        %718 = vmatpush1.xpose.msra.mxu0 0.0
        %719 = vmatprep.subr.mxu0 0.0
        %720 = vmatpush1.xpose.msra.mxu0 0.0
        %721 = vmatprep.subr.mxu0 0.0
        %722 = vmatpush1.xpose.msra.mxu0 0.0
        %723 = vmatprep.mubr.f32.mxu0 0.0
        %724 = vmatmul.mubr.f32.gmra.mrb[0].mxu0 %v655
        %v725 = vpop.f32.mrb[0].mxu0
        %v726 = vadd.f32 0.0, %v725
        %v727 = vpop.f32.mrb[0].mxu0
        %728 = vdwg.mxu0
        %v729 = vmul.f32 %v726, 0.25
        %v730 = vsel %vm549, %v729, -inf
        %731 = vmax.xlane.f32.xlu0 %v730
        %v732 = vpop.xlane.xlu0 %731
        %v733 = vsub.f32 %v729, %v732
        %v734 = vmul.f32 %v733, 1.442695
        %v735 = vpow.pop %v734
        %v736 = vsel %vm549, %v735, 0.0
        %737 = vadd.xlane.f32.xlu0 %v736
        %v738 = vpop.xlane.xlu0 %737
        %v739 = vrcp.pop %v738
        %v740 = vmul.f32 %v735, %v739
        %741 = vrot.lane.b32.xlu0 %v397, 80
        %v742 = vpop.permute.xlu0 %741
        %743 = vrot.lane.b32.xlu0 %v399, 80
        %v744 = vpop.permute.xlu0 %743
        %v745 = vsel %vm471, %v742, 0
        %v747 = vsel %vm471, %v744, 0
        %749 = vmatprep.subr.mxu0 0.0
        %750 = vmatpush1.xpose.msra.mxu0 %v747
        %751 = vmatprep.subr.mxu0 0.0
        %752 = vmatpush1.xpose.msra.mxu0 0.0
        %753 = vmatprep.subr.mxu0 0.0
        %754 = vmatpush1.xpose.msra.mxu0 0.0
        %755 = vmatprep.subr.mxu0 0.0
        %756 = vmatpush1.xpose.msra.mxu0 0.0
        %757 = vmatprep.subr.mxu0 0.0
        %758 = vmatpush1.xpose.msra.mxu0 0.0
        %759 = vmatprep.subr.mxu0 0.0
        %760 = vmatpush1.xpose.msra.mxu0 0.0
        %761 = vmatprep.subr.mxu0 0.0
        %762 = vmatpush1.xpose.msra.mxu0 0.0
        %763 = vmatprep.subr.mxu0 0.0
        %764 = vmatpush1.xpose.msra.mxu0 0.0
        %765 = vmatprep.subr.mxu0 0.0
        %766 = vmatpush1.xpose.msra.mxu0 0.0
        %767 = vmatprep.subr.mxu0 0.0
        %768 = vmatpush1.xpose.msra.mxu0 0.0
        %769 = vmatprep.subr.mxu0 0.0
        %770 = vmatpush1.xpose.msra.mxu0 0.0
        %771 = vmatprep.subr.mxu0 0.0
        %772 = vmatpush1.xpose.msra.mxu0 0.0
        %773 = vmatprep.subr.mxu0 0.0
        %774 = vmatpush1.xpose.msra.mxu0 0.0
        %775 = vmatprep.subr.mxu0 0.0
        %776 = vmatpush1.xpose.msra.mxu0 0.0
        %777 = vmatprep.subr.mxu0 0.0
        %778 = vmatpush1.xpose.msra.mxu0 0.0
        %779 = vmatprep.subr.mxu0 0.0
        %780 = vmatpush1.xpose.msra.mxu0 0.0
        %781 = vmatprep.subr.mxu0 0.0
        %782 = vmatpush1.xpose.msra.mxu0 0.0
        %783 = vmatprep.subr.mxu0 0.0
        %784 = vmatpush1.xpose.msra.mxu0 0.0
        %785 = vmatprep.subr.mxu0 0.0
        %786 = vmatpush1.xpose.msra.mxu0 0.0
        %787 = vmatprep.subr.mxu0 0.0
        %788 = vmatpush1.xpose.msra.mxu0 0.0
        %789 = vmatprep.subr.mxu0 0.0
        %790 = vmatpush1.xpose.msra.mxu0 0.0
        %791 = vmatprep.subr.mxu0 0.0
        %792 = vmatpush1.xpose.msra.mxu0 0.0
        %793 = vmatprep.subr.mxu0 0.0
        %794 = vmatpush1.xpose.msra.mxu0 0.0
        %795 = vmatprep.subr.mxu0 0.0
        %796 = vmatpush1.xpose.msra.mxu0 0.0
        %797 = vmatprep.subr.mxu0 0.0
        %798 = vmatpush1.xpose.msra.mxu0 0.0
        %799 = vmatprep.subr.mxu0 0.0
        %800 = vmatpush1.xpose.msra.mxu0 0.0
        %801 = vmatprep.subr.mxu0 0.0
        %802 = vmatpush1.xpose.msra.mxu0 0.0
        %803 = vmatprep.subr.mxu0 0.0
        %804 = vmatpush1.xpose.msra.mxu0 0.0
        %805 = vmatprep.subr.mxu0 0.0
        %806 = vmatpush1.xpose.msra.mxu0 0.0
        %807 = vmatprep.subr.mxu0 0.0
        %808 = vmatpush1.xpose.msra.mxu0 0.0
        %809 = vmatprep.subr.mxu0 0.0
        %810 = vmatpush1.xpose.msra.mxu0 0.0
        %811 = vmatprep.subr.mxu0 0.0
        %812 = vmatpush1.xpose.msra.mxu0 0.0
        %813 = vmatprep.mubr.f32.mxu0 0.0
        %814 = vmatmul.mubr.f32.gmra.mrb[0].mxu0 %v745
        %v815 = vpop.f32.mrb[0].mxu0
        %v816 = vadd.f32 0.0, %v815
        %v817 = vpop.f32.mrb[0].mxu0
        %818 = vdwg.mxu0
        %v819 = vmul.f32 %v816, 0.25
        %v820 = vsel %vm549, %v819, -inf
        %821 = vmax.xlane.f32.xlu0 %v820
        %v822 = vpop.xlane.xlu0 %821
        %v823 = vsub.f32 %v819, %v822
        %v824 = vmul.f32 %v823, 1.442695
        %v825 = vpow.pop %v824
        %v826 = vsel %vm549, %v825, 0.0
        %827 = vadd.xlane.f32.xlu0 %v826
        %v828 = vpop.xlane.xlu0 %827
        %v829 = vrcp.pop %v828
        %v830 = vmul.f32 %v825, %v829
        %831 = vrot.lane.b32.xlu0 %v397, 64
        %v832 = vpop.permute.xlu0 %831
        %833 = vrot.lane.b32.xlu0 %v399, 64
        %v834 = vpop.permute.xlu0 %833
        %v835 = vsel %vm471, %v832, 0
        %v837 = vsel %vm471, %v834, 0
        %839 = vmatprep.subr.mxu0 0.0
        %840 = vmatpush1.xpose.msra.mxu0 %v837
        %841 = vmatprep.subr.mxu0 0.0
        %842 = vmatpush1.xpose.msra.mxu0 0.0
        %843 = vmatprep.subr.mxu0 0.0
        %844 = vmatpush1.xpose.msra.mxu0 0.0
        %845 = vmatprep.subr.mxu0 0.0
        %846 = vmatpush1.xpose.msra.mxu0 0.0
        %847 = vmatprep.subr.mxu0 0.0
        %848 = vmatpush1.xpose.msra.mxu0 0.0
        %849 = vmatprep.subr.mxu0 0.0
        %850 = vmatpush1.xpose.msra.mxu0 0.0
        %851 = vmatprep.subr.mxu0 0.0
        %852 = vmatpush1.xpose.msra.mxu0 0.0
        %853 = vmatprep.subr.mxu0 0.0
        %854 = vmatpush1.xpose.msra.mxu0 0.0
        %855 = vmatprep.subr.mxu0 0.0
        %856 = vmatpush1.xpose.msra.mxu0 0.0
        %857 = vmatprep.subr.mxu0 0.0
        %858 = vmatpush1.xpose.msra.mxu0 0.0
        %859 = vmatprep.subr.mxu0 0.0
        %860 = vmatpush1.xpose.msra.mxu0 0.0
        %861 = vmatprep.subr.mxu0 0.0
        %862 = vmatpush1.xpose.msra.mxu0 0.0
        %863 = vmatprep.subr.mxu0 0.0
        %864 = vmatpush1.xpose.msra.mxu0 0.0
        %865 = vmatprep.subr.mxu0 0.0
        %866 = vmatpush1.xpose.msra.mxu0 0.0
        %867 = vmatprep.subr.mxu0 0.0
        %868 = vmatpush1.xpose.msra.mxu0 0.0
        %869 = vmatprep.subr.mxu0 0.0
        %870 = vmatpush1.xpose.msra.mxu0 0.0
        %871 = vmatprep.subr.mxu0 0.0
        %872 = vmatpush1.xpose.msra.mxu0 0.0
        %873 = vmatprep.subr.mxu0 0.0
        %874 = vmatpush1.xpose.msra.mxu0 0.0
        %875 = vmatprep.subr.mxu0 0.0
        %876 = vmatpush1.xpose.msra.mxu0 0.0
        %877 = vmatprep.subr.mxu0 0.0
        %878 = vmatpush1.xpose.msra.mxu0 0.0
        %879 = vmatprep.subr.mxu0 0.0
        %880 = vmatpush1.xpose.msra.mxu0 0.0
        %881 = vmatprep.subr.mxu0 0.0
        %882 = vmatpush1.xpose.msra.mxu0 0.0
        %883 = vmatprep.subr.mxu0 0.0
        %884 = vmatpush1.xpose.msra.mxu0 0.0
        %885 = vmatprep.subr.mxu0 0.0
        %886 = vmatpush1.xpose.msra.mxu0 0.0
        %887 = vmatprep.subr.mxu0 0.0
        %888 = vmatpush1.xpose.msra.mxu0 0.0
        %889 = vmatprep.subr.mxu0 0.0
        %890 = vmatpush1.xpose.msra.mxu0 0.0
        %891 = vmatprep.subr.mxu0 0.0
        %892 = vmatpush1.xpose.msra.mxu0 0.0
        %893 = vmatprep.subr.mxu0 0.0
        %894 = vmatpush1.xpose.msra.mxu0 0.0
        %895 = vmatprep.subr.mxu0 0.0
        %896 = vmatpush1.xpose.msra.mxu0 0.0
        %897 = vmatprep.subr.mxu0 0.0
        %898 = vmatpush1.xpose.msra.mxu0 0.0
        %899 = vmatprep.subr.mxu0 0.0
        %900 = vmatpush1.xpose.msra.mxu0 0.0
        %901 = vmatprep.subr.mxu0 0.0
        %902 = vmatpush1.xpose.msra.mxu0 0.0
        %903 = vmatprep.mubr.f32.mxu0 0.0
        %904 = vmatmul.mubr.f32.gmra.mrb[0].mxu0 %v835
        %v905 = vpop.f32.mrb[0].mxu0
        %v906 = vadd.f32 0.0, %v905
        %v907 = vpop.f32.mrb[0].mxu0
        %908 = vdwg.mxu0
        %v909 = vmul.f32 %v906, 0.25
        %v910 = vsel %vm549, %v909, -inf
        %911 = vmax.xlane.f32.xlu0 %v910
        %v912 = vpop.xlane.xlu0 %911
        %v913 = vsub.f32 %v909, %v912
        %v914 = vmul.f32 %v913, 1.442695
        %v915 = vpow.pop %v914
        %v916 = vsel %vm549, %v915, 0.0
        %917 = vadd.xlane.f32.xlu0 %v916
        %v918 = vpop.xlane.xlu0 %917
        %v919 = vrcp.pop %v918
        %v920 = vmul.f32 %v915, %v919
        %921 = vrot.lane.b32.xlu0 %v397, 48
        %v922 = vpop.permute.xlu0 %921
        %923 = vrot.lane.b32.xlu0 %v399, 48
        %v924 = vpop.permute.xlu0 %923
        %v925 = vsel %vm471, %v922, 0
        %v927 = vsel %vm471, %v924, 0
        %929 = vmatprep.subr.mxu0 0.0
        %930 = vmatpush1.xpose.msra.mxu0 %v927
        %931 = vmatprep.subr.mxu0 0.0
        %932 = vmatpush1.xpose.msra.mxu0 0.0
        %933 = vmatprep.subr.mxu0 0.0
        %934 = vmatpush1.xpose.msra.mxu0 0.0
        %935 = vmatprep.subr.mxu0 0.0
        %936 = vmatpush1.xpose.msra.mxu0 0.0
        %937 = vmatprep.subr.mxu0 0.0
        %938 = vmatpush1.xpose.msra.mxu0 0.0
        %939 = vmatprep.subr.mxu0 0.0
        %940 = vmatpush1.xpose.msra.mxu0 0.0
        %941 = vmatprep.subr.mxu0 0.0
        %942 = vmatpush1.xpose.msra.mxu0 0.0
        %943 = vmatprep.subr.mxu0 0.0
        %944 = vmatpush1.xpose.msra.mxu0 0.0
        %945 = vmatprep.subr.mxu0 0.0
        %946 = vmatpush1.xpose.msra.mxu0 0.0
        %947 = vmatprep.subr.mxu0 0.0
        %948 = vmatpush1.xpose.msra.mxu0 0.0
        %949 = vmatprep.subr.mxu0 0.0
        %950 = vmatpush1.xpose.msra.mxu0 0.0
        %951 = vmatprep.subr.mxu0 0.0
        %952 = vmatpush1.xpose.msra.mxu0 0.0
        %953 = vmatprep.subr.mxu0 0.0
        %954 = vmatpush1.xpose.msra.mxu0 0.0
        %955 = vmatprep.subr.mxu0 0.0
        %956 = vmatpush1.xpose.msra.mxu0 0.0
        %957 = vmatprep.subr.mxu0 0.0
        %958 = vmatpush1.xpose.msra.mxu0 0.0
        %959 = vmatprep.subr.mxu0 0.0
        %960 = vmatpush1.xpose.msra.mxu0 0.0
        %961 = vmatprep.subr.mxu0 0.0
        %962 = vmatpush1.xpose.msra.mxu0 0.0
        %963 = vmatprep.subr.mxu0 0.0
        %964 = vmatpush1.xpose.msra.mxu0 0.0
        %965 = vmatprep.subr.mxu0 0.0
        %966 = vmatpush1.xpose.msra.mxu0 0.0
        %967 = vmatprep.subr.mxu0 0.0
        %968 = vmatpush1.xpose.msra.mxu0 0.0
        %969 = vmatprep.subr.mxu0 0.0
        %970 = vmatpush1.xpose.msra.mxu0 0.0
        %971 = vmatprep.subr.mxu0 0.0
        %972 = vmatpush1.xpose.msra.mxu0 0.0
        %973 = vmatprep.subr.mxu0 0.0
        %974 = vmatpush1.xpose.msra.mxu0 0.0
        %975 = vmatprep.subr.mxu0 0.0
        %976 = vmatpush1.xpose.msra.mxu0 0.0
        %977 = vmatprep.subr.mxu0 0.0
        %978 = vmatpush1.xpose.msra.mxu0 0.0
        %979 = vmatprep.subr.mxu0 0.0
        %980 = vmatpush1.xpose.msra.mxu0 0.0
        %981 = vmatprep.subr.mxu0 0.0
        %982 = vmatpush1.xpose.msra.mxu0 0.0
        %983 = vmatprep.subr.mxu0 0.0
        %984 = vmatpush1.xpose.msra.mxu0 0.0
        %985 = vmatprep.subr.mxu0 0.0
        %986 = vmatpush1.xpose.msra.mxu0 0.0
        %987 = vmatprep.subr.mxu0 0.0
        %988 = vmatpush1.xpose.msra.mxu0 0.0
        %989 = vmatprep.subr.mxu0 0.0
        %990 = vmatpush1.xpose.msra.mxu0 0.0
        %991 = vmatprep.subr.mxu0 0.0
        %992 = vmatpush1.xpose.msra.mxu0 0.0
        %993 = vmatprep.mubr.f32.mxu0 0.0
        %994 = vmatmul.mubr.f32.gmra.mrb[0].mxu0 %v925
        %v995 = vpop.f32.mrb[0].mxu0
        %v996 = vadd.f32 0.0, %v995
        %v997 = vpop.f32.mrb[0].mxu0
        %998 = vdwg.mxu0
        %v999 = vmul.f32 %v996, 0.25
        %v1000 = vsel %vm549, %v999, -inf
        %1001 = vmax.xlane.f32.xlu0 %v1000
        %v1002 = vpop.xlane.xlu0 %1001
        %v1003 = vsub.f32 %v999, %v1002
        %v1004 = vmul.f32 %v1003, 1.442695
        %v1005 = vpow.pop %v1004
        %v1006 = vsel %vm549, %v1005, 0.0
        %1007 = vadd.xlane.f32.xlu0 %v1006
        %v1008 = vpop.xlane.xlu0 %1007
        %v1009 = vrcp.pop %v1008
        %v1010 = vmul.f32 %v1005, %v1009
        %1011 = vrot.lane.b32.xlu0 %v397, 32
        %v1012 = vpop.permute.xlu0 %1011
        %1013 = vrot.lane.b32.xlu0 %v399, 32
        %v1014 = vpop.permute.xlu0 %1013
        %v1015 = vsel %vm471, %v1012, 0
        %v1017 = vsel %vm471, %v1014, 0
        %1019 = vmatprep.subr.mxu0 0.0
        %1020 = vmatpush1.xpose.msra.mxu0 %v1017
        %1021 = vmatprep.subr.mxu0 0.0
        %1022 = vmatpush1.xpose.msra.mxu0 0.0
        %1023 = vmatprep.subr.mxu0 0.0
        %1024 = vmatpush1.xpose.msra.mxu0 0.0
        %1025 = vmatprep.subr.mxu0 0.0
        %1026 = vmatpush1.xpose.msra.mxu0 0.0
        %1027 = vmatprep.subr.mxu0 0.0
        %1028 = vmatpush1.xpose.msra.mxu0 0.0
        %1029 = vmatprep.subr.mxu0 0.0
        %1030 = vmatpush1.xpose.msra.mxu0 0.0
        %1031 = vmatprep.subr.mxu0 0.0
        %1032 = vmatpush1.xpose.msra.mxu0 0.0
        %1033 = vmatprep.subr.mxu0 0.0
        %1034 = vmatpush1.xpose.msra.mxu0 0.0
        %1035 = vmatprep.subr.mxu0 0.0
        %1036 = vmatpush1.xpose.msra.mxu0 0.0
        %1037 = vmatprep.subr.mxu0 0.0
        %1038 = vmatpush1.xpose.msra.mxu0 0.0
        %1039 = vmatprep.subr.mxu0 0.0
        %1040 = vmatpush1.xpose.msra.mxu0 0.0
        %1041 = vmatprep.subr.mxu0 0.0
        %1042 = vmatpush1.xpose.msra.mxu0 0.0
        %1043 = vmatprep.subr.mxu0 0.0
        %1044 = vmatpush1.xpose.msra.mxu0 0.0
        %1045 = vmatprep.subr.mxu0 0.0
        %1046 = vmatpush1.xpose.msra.mxu0 0.0
        %1047 = vmatprep.subr.mxu0 0.0
        %1048 = vmatpush1.xpose.msra.mxu0 0.0
        %1049 = vmatprep.subr.mxu0 0.0
        %1050 = vmatpush1.xpose.msra.mxu0 0.0
        %1051 = vmatprep.subr.mxu0 0.0
        %1052 = vmatpush1.xpose.msra.mxu0 0.0
        %1053 = vmatprep.subr.mxu0 0.0
        %1054 = vmatpush1.xpose.msra.mxu0 0.0
        %1055 = vmatprep.subr.mxu0 0.0
        %1056 = vmatpush1.xpose.msra.mxu0 0.0
        %1057 = vmatprep.subr.mxu0 0.0
        %1058 = vmatpush1.xpose.msra.mxu0 0.0
        %1059 = vmatprep.subr.mxu0 0.0
        %1060 = vmatpush1.xpose.msra.mxu0 0.0
        %1061 = vmatprep.subr.mxu0 0.0
        %1062 = vmatpush1.xpose.msra.mxu0 0.0
        %1063 = vmatprep.subr.mxu0 0.0
        %1064 = vmatpush1.xpose.msra.mxu0 0.0
        %1065 = vmatprep.subr.mxu0 0.0
        %1066 = vmatpush1.xpose.msra.mxu0 0.0
        %1067 = vmatprep.subr.mxu0 0.0
        %1068 = vmatpush1.xpose.msra.mxu0 0.0
        %1069 = vmatprep.subr.mxu0 0.0
        %1070 = vmatpush1.xpose.msra.mxu0 0.0
        %1071 = vmatprep.subr.mxu0 0.0
        %1072 = vmatpush1.xpose.msra.mxu0 0.0
        %1073 = vmatprep.subr.mxu0 0.0
        %1074 = vmatpush1.xpose.msra.mxu0 0.0
        %1075 = vmatprep.subr.mxu0 0.0
        %1076 = vmatpush1.xpose.msra.mxu0 0.0
        %1077 = vmatprep.subr.mxu0 0.0
        %1078 = vmatpush1.xpose.msra.mxu0 0.0
        %1079 = vmatprep.subr.mxu0 0.0
        %1080 = vmatpush1.xpose.msra.mxu0 0.0
        %1081 = vmatprep.subr.mxu0 0.0
        %1082 = vmatpush1.xpose.msra.mxu0 0.0
        %1083 = vmatprep.mubr.f32.mxu0 0.0
        %1084 = vmatmul.mubr.f32.gmra.mrb[0].mxu0 %v1015
        %v1085 = vpop.f32.mrb[0].mxu0
        %v1086 = vadd.f32 0.0, %v1085
        %v1087 = vpop.f32.mrb[0].mxu0
        %1088 = vdwg.mxu0
        %v1089 = vmul.f32 %v1086, 0.25
        %v1090 = vsel %vm549, %v1089, -inf
        %1091 = vmax.xlane.f32.xlu0 %v1090
        %v1092 = vpop.xlane.xlu0 %1091
        %v1093 = vsub.f32 %v1089, %v1092
        %v1094 = vmul.f32 %v1093, 1.442695
        %v1095 = vpow.pop %v1094
        %v1096 = vsel %vm549, %v1095, 0.0
        %1097 = vadd.xlane.f32.xlu0 %v1096
        %v1098 = vpop.xlane.xlu0 %1097
        %v1099 = vrcp.pop %v1098
        %v1100 = vmul.f32 %v1095, %v1099
        %1101 = vrot.lane.b32.xlu0 %v397, 16
        %v1102 = vpop.permute.xlu0 %1101
        %1103 = vrot.lane.b32.xlu0 %v399, 16
        %v1104 = vpop.permute.xlu0 %1103
        %v1105 = vsel %vm471, %v1102, 0
        %v1107 = vsel %vm471, %v1104, 0
        %1109 = vmatprep.subr.mxu0 0.0
        %1110 = vmatpush1.xpose.msra.mxu0 %v1107
        %1111 = vmatprep.subr.mxu0 0.0
        %1112 = vmatpush1.xpose.msra.mxu0 0.0
        %1113 = vmatprep.subr.mxu0 0.0
        %1114 = vmatpush1.xpose.msra.mxu0 0.0
        %1115 = vmatprep.subr.mxu0 0.0
        %1116 = vmatpush1.xpose.msra.mxu0 0.0
        %1117 = vmatprep.subr.mxu0 0.0
        %1118 = vmatpush1.xpose.msra.mxu0 0.0
        %1119 = vmatprep.subr.mxu0 0.0
        %1120 = vmatpush1.xpose.msra.mxu0 0.0
        %1121 = vmatprep.subr.mxu0 0.0
        %1122 = vmatpush1.xpose.msra.mxu0 0.0
        %1123 = vmatprep.subr.mxu0 0.0
        %1124 = vmatpush1.xpose.msra.mxu0 0.0
        %1125 = vmatprep.subr.mxu0 0.0
        %1126 = vmatpush1.xpose.msra.mxu0 0.0
        %1127 = vmatprep.subr.mxu0 0.0
        %1128 = vmatpush1.xpose.msra.mxu0 0.0
        %1129 = vmatprep.subr.mxu0 0.0
        %1130 = vmatpush1.xpose.msra.mxu0 0.0
        %1131 = vmatprep.subr.mxu0 0.0
        %1132 = vmatpush1.xpose.msra.mxu0 0.0
        %1133 = vmatprep.subr.mxu0 0.0
        %1134 = vmatpush1.xpose.msra.mxu0 0.0
        %1135 = vmatprep.subr.mxu0 0.0
        %1136 = vmatpush1.xpose.msra.mxu0 0.0
        %1137 = vmatprep.subr.mxu0 0.0
        %1138 = vmatpush1.xpose.msra.mxu0 0.0
        %1139 = vmatprep.subr.mxu0 0.0
        %1140 = vmatpush1.xpose.msra.mxu0 0.0
        %1141 = vmatprep.subr.mxu0 0.0
        %1142 = vmatpush1.xpose.msra.mxu0 0.0
        %1143 = vmatprep.subr.mxu0 0.0
        %1144 = vmatpush1.xpose.msra.mxu0 0.0
        %1145 = vmatprep.subr.mxu0 0.0
        %1146 = vmatpush1.xpose.msra.mxu0 0.0
        %1147 = vmatprep.subr.mxu0 0.0
        %1148 = vmatpush1.xpose.msra.mxu0 0.0
        %1149 = vmatprep.subr.mxu0 0.0
        %1150 = vmatpush1.xpose.msra.mxu0 0.0
        %1151 = vmatprep.subr.mxu0 0.0
        %1152 = vmatpush1.xpose.msra.mxu0 0.0
        %1153 = vmatprep.subr.mxu0 0.0
        %1154 = vmatpush1.xpose.msra.mxu0 0.0
        %1155 = vmatprep.subr.mxu0 0.0
        %1156 = vmatpush1.xpose.msra.mxu0 0.0
        %1157 = vmatprep.subr.mxu0 0.0
        %1158 = vmatpush1.xpose.msra.mxu0 0.0
        %1159 = vmatprep.subr.mxu0 0.0
        %1160 = vmatpush1.xpose.msra.mxu0 0.0
        %1161 = vmatprep.subr.mxu0 0.0
        %1162 = vmatpush1.xpose.msra.mxu0 0.0
        %1163 = vmatprep.subr.mxu0 0.0
        %1164 = vmatpush1.xpose.msra.mxu0 0.0
        %1165 = vmatprep.subr.mxu0 0.0
        %1166 = vmatpush1.xpose.msra.mxu0 0.0
        %1167 = vmatprep.subr.mxu0 0.0
        %1168 = vmatpush1.xpose.msra.mxu0 0.0
        %1169 = vmatprep.subr.mxu0 0.0
        %1170 = vmatpush1.xpose.msra.mxu0 0.0
        %1171 = vmatprep.subr.mxu0 0.0
        %1172 = vmatpush1.xpose.msra.mxu0 0.0
        %1173 = vmatprep.mubr.f32.mxu0 0.0
        %1174 = vmatmul.mubr.f32.gmra.mrb[0].mxu0 %v1105
        %v1175 = vpop.f32.mrb[0].mxu0
        %v1176 = vadd.f32 0.0, %v1175
        %v1177 = vpop.f32.mrb[0].mxu0
        %1178 = vdwg.mxu0
        %v1179 = vmul.f32 %v1176, 0.25
        %v1180 = vsel %vm549, %v1179, -inf
        %1181 = vmax.xlane.f32.xlu0 %v1180
        %v1182 = vpop.xlane.xlu0 %1181
        %v1183 = vsub.f32 %v1179, %v1182
        %v1184 = vmul.f32 %v1183, 1.442695
        %v1185 = vpow.pop %v1184
        %v1186 = vsel %vm549, %v1185, 0.0
        %1187 = vadd.xlane.f32.xlu0 %v1186
        %v1188 = vpop.xlane.xlu0 %1187
        %v1189 = vrcp.pop %v1188
        %v1190 = vmul.f32 %v1185, %v1189
        %s1191 = sld [smem:[#allocation2]]
        %v1192 = vstv %s1191
        %v1193 = vmul.f32 %v560, %v1192
        %s1194 = sld [smem:[#allocation2 + $0x80]]
        %v1195 = vstv %s1194
        %v1196 = vmul.f32 %v650, %v1195
        %v1197 = vadd.f32 %v1193, %v1196
        %s1198 = sld [smem:[#allocation2 + $0x100]]
        %v1199 = vstv %s1198
        %v1200 = vmul.f32 %v740, %v1199
        %v1201 = vadd.f32 %v1197, %v1200
        %s1202 = sld [smem:[#allocation2 + $0x180]]
        %v1203 = vstv %s1202
        %v1204 = vmul.f32 %v830, %v1203
        %v1205 = vadd.f32 %v1201, %v1204
        %s1206 = sld [smem:[#allocation2 + $0x200]]
        %v1207 = vstv %s1206
        %v1208 = vmul.f32 %v920, %v1207
        %v1209 = vadd.f32 %v1205, %v1208
        %s1210 = sld [smem:[#allocation2 + $0x280]]
        %v1211 = vstv %s1210
        %v1212 = vmul.f32 %v1010, %v1211
        %v1213 = vadd.f32 %v1209, %v1212
        %s1214 = sld [smem:[#allocation2 + $0x300]]
        %v1215 = vstv %s1214
        %v1216 = vmul.f32 %v1100, %v1215
        %v1217 = vadd.f32 %v1213, %v1216
        %s1218 = sld [smem:[#allocation2 + $0x380]]
        %v1219 = vstv %s1218
        %v1220 = vmul.f32 %v1190, %v1219
        %v1221 = vadd.f32 %v1217, %v1220
        %s1222 = sld [smem:[#allocation2 + $0x1]]
        %v1223 = vstv %s1222
        %v1224 = vmul.f32 %v560, %v1223
        %s1225 = sld [smem:[#allocation2 + $0x81]]
        %v1226 = vstv %s1225
        %v1227 = vmul.f32 %v650, %v1226
        %v1228 = vadd.f32 %v1224, %v1227
        %s1229 = sld [smem:[#allocation2 + $0x101]]
        %v1230 = vstv %s1229
        %v1231 = vmul.f32 %v740, %v1230
        %v1232 = vadd.f32 %v1228, %v1231
        %s1233 = sld [smem:[#allocation2 + $0x181]]
        %v1234 = vstv %s1233
        %v1235 = vmul.f32 %v830, %v1234
        %v1236 = vadd.f32 %v1232, %v1235
        %s1237 = sld [smem:[#allocation2 + $0x201]]
        %v1238 = vstv %s1237
        %v1239 = vmul.f32 %v920, %v1238
        %v1240 = vadd.f32 %v1236, %v1239
        %s1241 = sld [smem:[#allocation2 + $0x281]]
        %v1242 = vstv %s1241
        %v1243 = vmul.f32 %v1010, %v1242
        %v1244 = vadd.f32 %v1240, %v1243
        %s1245 = sld [smem:[#allocation2 + $0x301]]
        %v1246 = vstv %s1245
        %v1247 = vmul.f32 %v1100, %v1246
        %v1248 = vadd.f32 %v1244, %v1247
        %s1249 = sld [smem:[#allocation2 + $0x381]]
        %v1250 = vstv %s1249
        %v1251 = vmul.f32 %v1190, %v1250
        %v1252 = vadd.f32 %v1248, %v1251
        %s1253 = sld [smem:[#allocation2 + $0x2]]
        %v1254 = vstv %s1253
        %v1255 = vmul.f32 %v560, %v1254
        %s1256 = sld [smem:[#allocation2 + $0x82]]
        %v1257 = vstv %s1256
        %v1258 = vmul.f32 %v650, %v1257
        %v1259 = vadd.f32 %v1255, %v1258
        %s1260 = sld [smem:[#allocation2 + $0x102]]
        %v1261 = vstv %s1260
        %v1262 = vmul.f32 %v740, %v1261
        %v1263 = vadd.f32 %v1259, %v1262
        %s1264 = sld [smem:[#allocation2 + $0x182]]
        %v1265 = vstv %s1264
        %v1266 = vmul.f32 %v830, %v1265
        %v1267 = vadd.f32 %v1263, %v1266
        %s1268 = sld [smem:[#allocation2 + $0x202]]
        %v1269 = vstv %s1268
        %v1270 = vmul.f32 %v920, %v1269
        %v1271 = vadd.f32 %v1267, %v1270
        %s1272 = sld [smem:[#allocation2 + $0x282]]
        %v1273 = vstv %s1272
        %v1274 = vmul.f32 %v1010, %v1273
        %v1275 = vadd.f32 %v1271, %v1274
        %s1276 = sld [smem:[#allocation2 + $0x302]]
        %v1277 = vstv %s1276
        %v1278 = vmul.f32 %v1100, %v1277
        %v1279 = vadd.f32 %v1275, %v1278
        %s1280 = sld [smem:[#allocation2 + $0x382]]
        %v1281 = vstv %s1280
        %v1282 = vmul.f32 %v1190, %v1281
        %v1283 = vadd.f32 %v1279, %v1282
        %s1284 = sld [smem:[#allocation2 + $0x3]]
        %v1285 = vstv %s1284
        %v1286 = vmul.f32 %v560, %v1285
        %s1287 = sld [smem:[#allocation2 + $0x83]]
        %v1288 = vstv %s1287
        %v1289 = vmul.f32 %v650, %v1288
        %v1290 = vadd.f32 %v1286, %v1289
        %s1291 = sld [smem:[#allocation2 + $0x103]]
        %v1292 = vstv %s1291
        %v1293 = vmul.f32 %v740, %v1292
        %v1294 = vadd.f32 %v1290, %v1293
        %s1295 = sld [smem:[#allocation2 + $0x183]]
        %v1296 = vstv %s1295
        %v1297 = vmul.f32 %v830, %v1296
        %v1298 = vadd.f32 %v1294, %v1297
        %s1299 = sld [smem:[#allocation2 + $0x203]]
        %v1300 = vstv %s1299
        %v1301 = vmul.f32 %v920, %v1300
        %v1302 = vadd.f32 %v1298, %v1301
        %s1303 = sld [smem:[#allocation2 + $0x283]]
        %v1304 = vstv %s1303
        %v1305 = vmul.f32 %v1010, %v1304
        %v1306 = vadd.f32 %v1302, %v1305
        %s1307 = sld [smem:[#allocation2 + $0x303]]
        %v1308 = vstv %s1307
        %v1309 = vmul.f32 %v1100, %v1308
        %v1310 = vadd.f32 %v1306, %v1309
        %s1311 = sld [smem:[#allocation2 + $0x383]]
        %v1312 = vstv %s1311
        %v1313 = vmul.f32 %v1190, %v1312
        %v1314 = vadd.f32 %v1310, %v1313
        %s1315 = sld [smem:[#allocation2 + $0x4]]
        %v1316 = vstv %s1315
        %v1317 = vmul.f32 %v560, %v1316
        %s1318 = sld [smem:[#allocation2 + $0x84]]
        %v1319 = vstv %s1318
        %v1320 = vmul.f32 %v650, %v1319
        %v1321 = vadd.f32 %v1317, %v1320
        %s1322 = sld [smem:[#allocation2 + $0x104]]
        %v1323 = vstv %s1322
        %v1324 = vmul.f32 %v740, %v1323
        %v1325 = vadd.f32 %v1321, %v1324
        %s1326 = sld [smem:[#allocation2 + $0x184]]
        %v1327 = vstv %s1326
        %v1328 = vmul.f32 %v830, %v1327
        %v1329 = vadd.f32 %v1325, %v1328
        %s1330 = sld [smem:[#allocation2 + $0x204]]
        %v1331 = vstv %s1330
        %v1332 = vmul.f32 %v920, %v1331
        %v1333 = vadd.f32 %v1329, %v1332
        %s1334 = sld [smem:[#allocation2 + $0x284]]
        %v1335 = vstv %s1334
        %v1336 = vmul.f32 %v1010, %v1335
        %v1337 = vadd.f32 %v1333, %v1336
        %s1338 = sld [smem:[#allocation2 + $0x304]]
        %v1339 = vstv %s1338
        %v1340 = vmul.f32 %v1100, %v1339
        %v1341 = vadd.f32 %v1337, %v1340
        %s1342 = sld [smem:[#allocation2 + $0x384]]
        %v1343 = vstv %s1342
        %v1344 = vmul.f32 %v1190, %v1343
        %v1345 = vadd.f32 %v1341, %v1344
        %s1346 = sld [smem:[#allocation2 + $0x5]]
        %v1347 = vstv %s1346
        %v1348 = vmul.f32 %v560, %v1347
        %s1349 = sld [smem:[#allocation2 + $0x85]]
        %v1350 = vstv %s1349
        %v1351 = vmul.f32 %v650, %v1350
        %v1352 = vadd.f32 %v1348, %v1351
        %s1353 = sld [smem:[#allocation2 + $0x105]]
        %v1354 = vstv %s1353
        %v1355 = vmul.f32 %v740, %v1354
        %v1356 = vadd.f32 %v1352, %v1355
        %s1357 = sld [smem:[#allocation2 + $0x185]]
        %v1358 = vstv %s1357
        %v1359 = vmul.f32 %v830, %v1358
        %v1360 = vadd.f32 %v1356, %v1359
        %s1361 = sld [smem:[#allocation2 + $0x205]]
        %v1362 = vstv %s1361
        %v1363 = vmul.f32 %v920, %v1362
        %v1364 = vadd.f32 %v1360, %v1363
        %s1365 = sld [smem:[#allocation2 + $0x285]]
        %v1366 = vstv %s1365
        %v1367 = vmul.f32 %v1010, %v1366
        %v1368 = vadd.f32 %v1364, %v1367
        %s1369 = sld [smem:[#allocation2 + $0x305]]
        %v1370 = vstv %s1369
        %v1371 = vmul.f32 %v1100, %v1370
        %v1372 = vadd.f32 %v1368, %v1371
        %s1373 = sld [smem:[#allocation2 + $0x385]]
        %v1374 = vstv %s1373
        %v1375 = vmul.f32 %v1190, %v1374
        %v1376 = vadd.f32 %v1372, %v1375
        %s1377 = sld [smem:[#allocation2 + $0x6]]
        %v1378 = vstv %s1377
        %v1379 = vmul.f32 %v560, %v1378
        %s1380 = sld [smem:[#allocation2 + $0x86]]
        %v1381 = vstv %s1380
        %v1382 = vmul.f32 %v650, %v1381
        %v1383 = vadd.f32 %v1379, %v1382
        %s1384 = sld [smem:[#allocation2 + $0x106]]
        %v1385 = vstv %s1384
        %v1386 = vmul.f32 %v740, %v1385
        %v1387 = vadd.f32 %v1383, %v1386
        %s1388 = sld [smem:[#allocation2 + $0x186]]
        %v1389 = vstv %s1388
        %v1390 = vmul.f32 %v830, %v1389
        %v1391 = vadd.f32 %v1387, %v1390
        %s1392 = sld [smem:[#allocation2 + $0x206]]
        %v1393 = vstv %s1392
        %v1394 = vmul.f32 %v920, %v1393
        %v1395 = vadd.f32 %v1391, %v1394
        %s1396 = sld [smem:[#allocation2 + $0x286]]
        %v1397 = vstv %s1396
        %v1398 = vmul.f32 %v1010, %v1397
        %v1399 = vadd.f32 %v1395, %v1398
        %s1400 = sld [smem:[#allocation2 + $0x306]]
        %v1401 = vstv %s1400
        %v1402 = vmul.f32 %v1100, %v1401
        %v1403 = vadd.f32 %v1399, %v1402
        %s1404 = sld [smem:[#allocation2 + $0x386]]
        %v1405 = vstv %s1404
        %v1406 = vmul.f32 %v1190, %v1405
        %v1407 = vadd.f32 %v1403, %v1406
        %s1408 = sld [smem:[#allocation2 + $0x7]]
        %v1409 = vstv %s1408
        %v1410 = vmul.f32 %v560, %v1409
        %s1411 = sld [smem:[#allocation2 + $0x87]]
        %v1412 = vstv %s1411
        %v1413 = vmul.f32 %v650, %v1412
        %v1414 = vadd.f32 %v1410, %v1413
        %s1415 = sld [smem:[#allocation2 + $0x107]]
        %v1416 = vstv %s1415
        %v1417 = vmul.f32 %v740, %v1416
        %v1418 = vadd.f32 %v1414, %v1417
        %s1419 = sld [smem:[#allocation2 + $0x187]]
        %v1420 = vstv %s1419
        %v1421 = vmul.f32 %v830, %v1420
        %v1422 = vadd.f32 %v1418, %v1421
        %s1423 = sld [smem:[#allocation2 + $0x207]]
        %v1424 = vstv %s1423
        %v1425 = vmul.f32 %v920, %v1424
        %v1426 = vadd.f32 %v1422, %v1425
        %s1427 = sld [smem:[#allocation2 + $0x287]]
        %v1428 = vstv %s1427
        %v1429 = vmul.f32 %v1010, %v1428
        %v1430 = vadd.f32 %v1426, %v1429
        %s1431 = sld [smem:[#allocation2 + $0x307]]
        %v1432 = vstv %s1431
        %v1433 = vmul.f32 %v1100, %v1432
        %v1434 = vadd.f32 %v1430, %v1433
        %s1435 = sld [smem:[#allocation2 + $0x387]]
        %v1436 = vstv %s1435
        %v1437 = vmul.f32 %v1190, %v1436
        %v1438 = vadd.f32 %v1434, %v1437
        %v1439 = vadd.f32 %v1221, %v1252
        %v1440 = vadd.f32 %v1439, %v1283
        %v1441 = vadd.f32 %v1440, %v1314
        %v1442 = vadd.f32 %v1441, %v1345
        %v1443 = vadd.f32 %v1442, %v1376
        %v1444 = vadd.f32 %v1443, %v1407
        %v1445 = vadd.f32 %v1444, %v1438
        %v1446 = vmul.f32 %v1445, 0.125
        %v1447 = vsub.f32 %v1221, %v1446
        %v1448 = vmul.f32 %v1447, %v1447
        %v1449 = vsub.f32 %v1252, %v1446
        %v1450 = vmul.f32 %v1449, %v1449
        %v1451 = vadd.f32 %v1448, %v1450
        %v1452 = vsub.f32 %v1283, %v1446
        %v1453 = vmul.f32 %v1452, %v1452
        %v1454 = vadd.f32 %v1451, %v1453
        %v1455 = vsub.f32 %v1314, %v1446
        %v1456 = vmul.f32 %v1455, %v1455
        %v1457 = vadd.f32 %v1454, %v1456
        %v1458 = vsub.f32 %v1345, %v1446
        %v1459 = vmul.f32 %v1458, %v1458
        %v1460 = vadd.f32 %v1457, %v1459
        %v1461 = vsub.f32 %v1376, %v1446
        %v1462 = vmul.f32 %v1461, %v1461
        %v1463 = vadd.f32 %v1460, %v1462
        %v1464 = vsub.f32 %v1407, %v1446
        %v1465 = vmul.f32 %v1464, %v1464
        %v1466 = vadd.f32 %v1463, %v1465
        %v1467 = vsub.f32 %v1438, %v1446
        %v1468 = vmul.f32 %v1467, %v1467
        %v1469 = vadd.f32 %v1466, %v1468
        %v1470 = vmul.f32 %v1469, 0.125
        %v1471 = vadd.f32 %v1470, 1e-05
        %v1472 = vrsqrt.pop %v1471
        %v1473 = vmul.f32 %v1447, %v1472
        %s1474 = sld [smem:[#allocation5]]
        %v1475 = vstv %s1474
        %v1476 = vmul.f32 %v1473, %v1475
        %s1477 = sld [smem:[#allocation7]]
        %v1478 = vstv %s1477
        %v1479 = vadd.f32 %v1476, %v1478
        %v1481 = vsel %vm549, %v1479, 0
        %1483 = vmatprep.subr.mxu0 0.0
        %1484 = vmatpush1.msra.mxu0 %v468
        %1485 = vmatprep.subr.mxu0 0.0
        %1486 = vmatpush1.msra.mxu0 0.0
        %1487 = vmatprep.subr.mxu0 0.0
        %1488 = vmatpush1.msra.mxu0 0.0
        %1489 = vmatprep.subr.mxu0 0.0
        %1490 = vmatpush1.msra.mxu0 0.0
        %1491 = vmatprep.subr.mxu0 0.0
        %1492 = vmatpush1.msra.mxu0 0.0
        %1493 = vmatprep.subr.mxu0 0.0
        %1494 = vmatpush1.msra.mxu0 0.0
        %1495 = vmatprep.subr.mxu0 0.0
        %1496 = vmatpush1.msra.mxu0 0.0
        %1497 = vmatprep.subr.mxu0 0.0
        %1498 = vmatpush1.msra.mxu0 0.0
        %1499 = vmatprep.subr.mxu0 0.0
        %1500 = vmatpush1.msra.mxu0 0.0
        %1501 = vmatprep.subr.mxu0 0.0
        %1502 = vmatpush1.msra.mxu0 0.0
        %1503 = vmatprep.subr.mxu0 0.0
        %1504 = vmatpush1.msra.mxu0 0.0
        %1505 = vmatprep.subr.mxu0 0.0
        %1506 = vmatpush1.msra.mxu0 0.0
        %1507 = vmatprep.subr.mxu0 0.0
        %1508 = vmatpush1.msra.mxu0 0.0
        %1509 = vmatprep.subr.mxu0 0.0
        %1510 = vmatpush1.msra.mxu0 0.0
        %1511 = vmatprep.subr.mxu0 0.0
        %1512 = vmatpush1.msra.mxu0 0.0
        %1513 = vmatprep.subr.mxu0 0.0
        %1514 = vmatpush1.msra.mxu0 0.0
        %1515 = vmatprep.subr.mxu0 0.0
        %1516 = vmatpush1.msra.mxu0 0.0
        %1517 = vmatprep.subr.mxu0 0.0
        %1518 = vmatpush1.msra.mxu0 0.0
        %1519 = vmatprep.subr.mxu0 0.0
        %1520 = vmatpush1.msra.mxu0 0.0
        %1521 = vmatprep.subr.mxu0 0.0
        %1522 = vmatpush1.msra.mxu0 0.0
        %1523 = vmatprep.subr.mxu0 0.0
        %1524 = vmatpush1.msra.mxu0 0.0
        %1525 = vmatprep.subr.mxu0 0.0
        %1526 = vmatpush1.msra.mxu0 0.0
        %1527 = vmatprep.subr.mxu0 0.0
        %1528 = vmatpush1.msra.mxu0 0.0
        %1529 = vmatprep.subr.mxu0 0.0
        %1530 = vmatpush1.msra.mxu0 0.0
        %1531 = vmatprep.subr.mxu0 0.0
        %1532 = vmatpush1.msra.mxu0 0.0
        %1533 = vmatprep.subr.mxu0 0.0
        %1534 = vmatpush1.msra.mxu0 0.0
        %1535 = vmatprep.subr.mxu0 0.0
        %1536 = vmatpush1.msra.mxu0 0.0
        %1537 = vmatprep.subr.mxu0 0.0
        %1538 = vmatpush1.msra.mxu0 0.0
        %1539 = vmatprep.subr.mxu0 0.0
        %1540 = vmatpush1.msra.mxu0 0.0
        %1541 = vmatprep.subr.mxu0 0.0
        %1542 = vmatpush1.msra.mxu0 0.0
        %1543 = vmatprep.subr.mxu0 0.0
        %1544 = vmatpush1.msra.mxu0 0.0
        %1545 = vmatprep.subr.mxu0 0.0
        %1546 = vmatpush1.msra.mxu0 0.0
        %1547 = vmatprep.mubr.f32.mxu0 0.0
        %1548 = vmatmul.mubr.f32.gmra.mrb[0].mxu0 %v1481
        %v1549 = vpop.f32.mrb[0].mxu0
        %v1550 = vadd.f32 0.0, %v1549
        %v1551 = vpop.f32.mrb[0].mxu0
        %1552 = vdwg.mxu0
        %v1553 = vld [vmem:[%s5] sm:$0xff]
        %v1554 = vld [vmem:[%s5 + $0x8] sm:$0xff]
        %v1555 = vmul.f32 %v1449, %v1472
        %s1556 = sld [smem:[#allocation5 + $0x1]]
        %v1557 = vstv %s1556
        %v1558 = vmul.f32 %v1555, %v1557
        %s1559 = sld [smem:[#allocation7 + $0x1]]
        %v1560 = vstv %s1559
        %v1561 = vadd.f32 %v1558, %v1560
        %1563 = vrot.lane.b32.xlu0 %v468, 112
        %v1564 = vpop.permute.xlu0 %1563
        %v1567 = vsel %vm549, %v1561, 0
        %1569 = vmatprep.subr.mxu0 0.0
        %1570 = vmatpush1.msra.mxu0 %v1564
        %1571 = vmatprep.subr.mxu0 0.0
        %1572 = vmatpush1.msra.mxu0 0.0
        %1573 = vmatprep.subr.mxu0 0.0
        %1574 = vmatpush1.msra.mxu0 0.0
        %1575 = vmatprep.subr.mxu0 0.0
        %1576 = vmatpush1.msra.mxu0 0.0
        %1577 = vmatprep.subr.mxu0 0.0
        %1578 = vmatpush1.msra.mxu0 0.0
        %1579 = vmatprep.subr.mxu0 0.0
        %1580 = vmatpush1.msra.mxu0 0.0
        %1581 = vmatprep.subr.mxu0 0.0
        %1582 = vmatpush1.msra.mxu0 0.0
        %1583 = vmatprep.subr.mxu0 0.0
        %1584 = vmatpush1.msra.mxu0 0.0
        %1585 = vmatprep.subr.mxu0 0.0
        %1586 = vmatpush1.msra.mxu0 0.0
        %1587 = vmatprep.subr.mxu0 0.0
        %1588 = vmatpush1.msra.mxu0 0.0
        %1589 = vmatprep.subr.mxu0 0.0
        %1590 = vmatpush1.msra.mxu0 0.0
        %1591 = vmatprep.subr.mxu0 0.0
        %1592 = vmatpush1.msra.mxu0 0.0
        %1593 = vmatprep.subr.mxu0 0.0
        %1594 = vmatpush1.msra.mxu0 0.0
        %1595 = vmatprep.subr.mxu0 0.0
        %1596 = vmatpush1.msra.mxu0 0.0
        %1597 = vmatprep.subr.mxu0 0.0
        %1598 = vmatpush1.msra.mxu0 0.0
        %1599 = vmatprep.subr.mxu0 0.0
        %1600 = vmatpush1.msra.mxu0 0.0
        %1601 = vmatprep.subr.mxu0 0.0
        %1602 = vmatpush1.msra.mxu0 0.0
        %1603 = vmatprep.subr.mxu0 0.0
        %1604 = vmatpush1.msra.mxu0 0.0
        %1605 = vmatprep.subr.mxu0 0.0
        %1606 = vmatpush1.msra.mxu0 0.0
        %1607 = vmatprep.subr.mxu0 0.0
        %1608 = vmatpush1.msra.mxu0 0.0
        %1609 = vmatprep.subr.mxu0 0.0
        %1610 = vmatpush1.msra.mxu0 0.0
        %1611 = vmatprep.subr.mxu0 0.0
        %1612 = vmatpush1.msra.mxu0 0.0
        %1613 = vmatprep.subr.mxu0 0.0
        %1614 = vmatpush1.msra.mxu0 0.0
        %1615 = vmatprep.subr.mxu0 0.0
        %1616 = vmatpush1.msra.mxu0 0.0
        %1617 = vmatprep.subr.mxu0 0.0
        %1618 = vmatpush1.msra.mxu0 0.0
        %1619 = vmatprep.subr.mxu0 0.0
        %1620 = vmatpush1.msra.mxu0 0.0
        %1621 = vmatprep.subr.mxu0 0.0
        %1622 = vmatpush1.msra.mxu0 0.0
        %1623 = vmatprep.subr.mxu0 0.0
        %1624 = vmatpush1.msra.mxu0 0.0
        %1625 = vmatprep.subr.mxu0 0.0
        %1626 = vmatpush1.msra.mxu0 0.0
        %1627 = vmatprep.subr.mxu0 0.0
        %1628 = vmatpush1.msra.mxu0 0.0
        %1629 = vmatprep.subr.mxu0 0.0
        %1630 = vmatpush1.msra.mxu0 0.0
        %1631 = vmatprep.subr.mxu0 0.0
        %1632 = vmatpush1.msra.mxu0 0.0
        %1633 = vmatprep.mubr.f32.mxu0 0.0
        %1634 = vmatmul.mubr.f32.gmra.mrb[0].mxu0 %v1567
        %v1635 = vpop.f32.mrb[0].mxu0
        %v1636 = vadd.f32 0.0, %v1635
        %v1637 = vpop.f32.mrb[0].mxu0
        %1638 = vdwg.mxu0
        %v1639 = vld [vmem:[%s5 + $0x10] sm:$0xff]
        %v1640 = vld [vmem:[%s5 + $0x18] sm:$0xff]
        %v1642 = vsel %vm471, %v1636, 0
        %1644 = vmatprep.subr.mxu0 0.0
        %1645 = vmatpush1.msra.mxu0 %v1639
        %1646 = vmatprep.subr.mxu0 0.0
        %1647 = vmatpush1.msra.mxu0 %v1640
        %1648 = vmatprep.subr.mxu0 0.0
        %1649 = vmatpush1.msra.mxu0 0.0
        %1650 = vmatprep.subr.mxu0 0.0
        %1651 = vmatpush1.msra.mxu0 0.0
        %1652 = vmatprep.subr.mxu0 0.0
        %1653 = vmatpush1.msra.mxu0 0.0
        %1654 = vmatprep.subr.mxu0 0.0
        %1655 = vmatpush1.msra.mxu0 0.0
        %1656 = vmatprep.subr.mxu0 0.0
        %1657 = vmatpush1.msra.mxu0 0.0
        %1658 = vmatprep.subr.mxu0 0.0
        %1659 = vmatpush1.msra.mxu0 0.0
        %1660 = vmatprep.subr.mxu0 0.0
        %1661 = vmatpush1.msra.mxu0 0.0
        %1662 = vmatprep.subr.mxu0 0.0
        %1663 = vmatpush1.msra.mxu0 0.0
        %1664 = vmatprep.subr.mxu0 0.0
        %1665 = vmatpush1.msra.mxu0 0.0
        %1666 = vmatprep.subr.mxu0 0.0
        %1667 = vmatpush1.msra.mxu0 0.0
        %1668 = vmatprep.subr.mxu0 0.0
        %1669 = vmatpush1.msra.mxu0 0.0
        %1670 = vmatprep.subr.mxu0 0.0
        %1671 = vmatpush1.msra.mxu0 0.0
        %1672 = vmatprep.subr.mxu0 0.0
        %1673 = vmatpush1.msra.mxu0 0.0
        %1674 = vmatprep.subr.mxu0 0.0
        %1675 = vmatpush1.msra.mxu0 0.0
        %1676 = vmatprep.subr.mxu0 0.0
        %1677 = vmatpush1.msra.mxu0 0.0
        %1678 = vmatprep.subr.mxu0 0.0
        %1679 = vmatpush1.msra.mxu0 0.0
        %1680 = vmatprep.subr.mxu0 0.0
        %1681 = vmatpush1.msra.mxu0 0.0
        %1682 = vmatprep.subr.mxu0 0.0
        %1683 = vmatpush1.msra.mxu0 0.0
        %1684 = vmatprep.subr.mxu0 0.0
        %1685 = vmatpush1.msra.mxu0 0.0
        %1686 = vmatprep.subr.mxu0 0.0
        %1687 = vmatpush1.msra.mxu0 0.0
        %1688 = vmatprep.subr.mxu0 0.0
        %1689 = vmatpush1.msra.mxu0 0.0
        %1690 = vmatprep.subr.mxu0 0.0
        %1691 = vmatpush1.msra.mxu0 0.0
        %1692 = vmatprep.subr.mxu0 0.0
        %1693 = vmatpush1.msra.mxu0 0.0
        %1694 = vmatprep.subr.mxu0 0.0
        %1695 = vmatpush1.msra.mxu0 0.0
        %1696 = vmatprep.subr.mxu0 0.0
        %1697 = vmatpush1.msra.mxu0 0.0
        %1698 = vmatprep.subr.mxu0 0.0
        %1699 = vmatpush1.msra.mxu0 0.0
        %1700 = vmatprep.subr.mxu0 0.0
        %1701 = vmatpush1.msra.mxu0 0.0
        %1702 = vmatprep.subr.mxu0 0.0
        %1703 = vmatpush1.msra.mxu0 0.0
        %1704 = vmatprep.subr.mxu0 0.0
        %1705 = vmatpush1.msra.mxu0 0.0
        %1706 = vmatprep.subr.mxu0 0.0
        %1707 = vmatpush1.msra.mxu0 0.0
        %1708 = vmatprep.mubr.f32.mxu0 0.0
        %1709 = vmatmul.mubr.f32.gmra.mrb[0].mxu0 %v1642
        %v1710 = vpop.f32.mrb[0].mxu0
        %v1711 = vadd.f32 0.0, %v1710
        %v1712 = vpop.f32.mrb[0].mxu0
        %1713 = vdwg.mxu0
        %v1715 = vsel %vm471, %v1550, 0
        %1717 = vmatprep.subr.mxu0 0.0
        %1718 = vmatpush1.msra.mxu0 %v1553
        %1719 = vmatprep.subr.mxu0 0.0
        %1720 = vmatpush1.msra.mxu0 %v1554
        %1721 = vmatprep.subr.mxu0 0.0
        %1722 = vmatpush1.msra.mxu0 0.0
        %1723 = vmatprep.subr.mxu0 0.0
        %1724 = vmatpush1.msra.mxu0 0.0
        %1725 = vmatprep.subr.mxu0 0.0
        %1726 = vmatpush1.msra.mxu0 0.0
        %1727 = vmatprep.subr.mxu0 0.0
        %1728 = vmatpush1.msra.mxu0 0.0
        %1729 = vmatprep.subr.mxu0 0.0
        %1730 = vmatpush1.msra.mxu0 0.0
        %1731 = vmatprep.subr.mxu0 0.0
        %1732 = vmatpush1.msra.mxu0 0.0
        %1733 = vmatprep.subr.mxu0 0.0
        %1734 = vmatpush1.msra.mxu0 0.0
        %1735 = vmatprep.subr.mxu0 0.0
        %1736 = vmatpush1.msra.mxu0 0.0
        %1737 = vmatprep.subr.mxu0 0.0
        %1738 = vmatpush1.msra.mxu0 0.0
        %1739 = vmatprep.subr.mxu0 0.0
        %1740 = vmatpush1.msra.mxu0 0.0
        %1741 = vmatprep.subr.mxu0 0.0
        %1742 = vmatpush1.msra.mxu0 0.0
        %1743 = vmatprep.subr.mxu0 0.0
        %1744 = vmatpush1.msra.mxu0 0.0
        %1745 = vmatprep.subr.mxu0 0.0
        %1746 = vmatpush1.msra.mxu0 0.0
        %1747 = vmatprep.subr.mxu0 0.0
        %1748 = vmatpush1.msra.mxu0 0.0
        %1749 = vmatprep.subr.mxu0 0.0
        %1750 = vmatpush1.msra.mxu0 0.0
        %1751 = vmatprep.subr.mxu0 0.0
        %1752 = vmatpush1.msra.mxu0 0.0
        %1753 = vmatprep.subr.mxu0 0.0
        %1754 = vmatpush1.msra.mxu0 0.0
        %1755 = vmatprep.subr.mxu0 0.0
        %1756 = vmatpush1.msra.mxu0 0.0
        %1757 = vmatprep.subr.mxu0 0.0
        %1758 = vmatpush1.msra.mxu0 0.0
        %1759 = vmatprep.subr.mxu0 0.0
        %1760 = vmatpush1.msra.mxu0 0.0
        %1761 = vmatprep.subr.mxu0 0.0
        %1762 = vmatpush1.msra.mxu0 0.0
        %1763 = vmatprep.subr.mxu0 0.0
        %1764 = vmatpush1.msra.mxu0 0.0
        %1765 = vmatprep.subr.mxu0 0.0
        %1766 = vmatpush1.msra.mxu0 0.0
        %1767 = vmatprep.subr.mxu0 0.0
        %1768 = vmatpush1.msra.mxu0 0.0
        %1769 = vmatprep.subr.mxu0 0.0
        %1770 = vmatpush1.msra.mxu0 0.0
        %1771 = vmatprep.subr.mxu0 0.0
        %1772 = vmatpush1.msra.mxu0 0.0
        %1773 = vmatprep.subr.mxu0 0.0
        %1774 = vmatpush1.msra.mxu0 0.0
        %1775 = vmatprep.subr.mxu0 0.0
        %1776 = vmatpush1.msra.mxu0 0.0
        %1777 = vmatprep.subr.mxu0 0.0
        %1778 = vmatpush1.msra.mxu0 0.0
        %1779 = vmatprep.subr.mxu0 0.0
        %1780 = vmatpush1.msra.mxu0 0.0
        %1781 = vmatprep.mubr.f32.mxu0 0.0
        %1782 = vmatmul.mubr.f32.gmra.mrb[0].mxu0 %v1715
        %v1783 = vpop.f32.mrb[0].mxu0
        %v1784 = vadd.f32 %v1711, %v1783
        %v1785 = vpop.f32.mrb[0].mxu0
        %1786 = vdwg.mxu0
        %v1787 = vmul.f32 %v1452, %v1472
        %s1788 = sld [smem:[#allocation5 + $0x2]]
        %v1789 = vstv %s1788
        %v1790 = vmul.f32 %v1787, %v1789
        %s1791 = sld [smem:[#allocation7 + $0x2]]
        %v1792 = vstv %s1791
        %v1793 = vadd.f32 %v1790, %v1792
        %1794 = vrot.lane.b32.xlu0 %v468, 96
        %v1795 = vpop.permute.xlu0 %1794
        %v1798 = vsel %vm549, %v1793, 0
        %1800 = vmatprep.subr.mxu0 0.0
        %1801 = vmatpush1.msra.mxu0 %v1795
        %1802 = vmatprep.subr.mxu0 0.0
        %1803 = vmatpush1.msra.mxu0 0.0
        %1804 = vmatprep.subr.mxu0 0.0
        %1805 = vmatpush1.msra.mxu0 0.0
        %1806 = vmatprep.subr.mxu0 0.0
        %1807 = vmatpush1.msra.mxu0 0.0
        %1808 = vmatprep.subr.mxu0 0.0
        %1809 = vmatpush1.msra.mxu0 0.0
        %1810 = vmatprep.subr.mxu0 0.0
        %1811 = vmatpush1.msra.mxu0 0.0
        %1812 = vmatprep.subr.mxu0 0.0
        %1813 = vmatpush1.msra.mxu0 0.0
        %1814 = vmatprep.subr.mxu0 0.0
        %1815 = vmatpush1.msra.mxu0 0.0
        %1816 = vmatprep.subr.mxu0 0.0
        %1817 = vmatpush1.msra.mxu0 0.0
        %1818 = vmatprep.subr.mxu0 0.0
        %1819 = vmatpush1.msra.mxu0 0.0
        %1820 = vmatprep.subr.mxu0 0.0
        %1821 = vmatpush1.msra.mxu0 0.0
        %1822 = vmatprep.subr.mxu0 0.0
        %1823 = vmatpush1.msra.mxu0 0.0
        %1824 = vmatprep.subr.mxu0 0.0
        %1825 = vmatpush1.msra.mxu0 0.0
        %1826 = vmatprep.subr.mxu0 0.0
        %1827 = vmatpush1.msra.mxu0 0.0
        %1828 = vmatprep.subr.mxu0 0.0
        %1829 = vmatpush1.msra.mxu0 0.0
        %1830 = vmatprep.subr.mxu0 0.0
        %1831 = vmatpush1.msra.mxu0 0.0
        %1832 = vmatprep.subr.mxu0 0.0
        %1833 = vmatpush1.msra.mxu0 0.0
        %1834 = vmatprep.subr.mxu0 0.0
        %1835 = vmatpush1.msra.mxu0 0.0
        %1836 = vmatprep.subr.mxu0 0.0
        %1837 = vmatpush1.msra.mxu0 0.0
        %1838 = vmatprep.subr.mxu0 0.0
        %1839 = vmatpush1.msra.mxu0 0.0
        %1840 = vmatprep.subr.mxu0 0.0
        %1841 = vmatpush1.msra.mxu0 0.0
        %1842 = vmatprep.subr.mxu0 0.0
        %1843 = vmatpush1.msra.mxu0 0.0
        %1844 = vmatprep.subr.mxu0 0.0
        %1845 = vmatpush1.msra.mxu0 0.0
        %1846 = vmatprep.subr.mxu0 0.0
        %1847 = vmatpush1.msra.mxu0 0.0
        %1848 = vmatprep.subr.mxu0 0.0
        %1849 = vmatpush1.msra.mxu0 0.0
        %1850 = vmatprep.subr.mxu0 0.0
        %1851 = vmatpush1.msra.mxu0 0.0
        %1852 = vmatprep.subr.mxu0 0.0
        %1853 = vmatpush1.msra.mxu0 0.0
        %1854 = vmatprep.subr.mxu0 0.0
        %1855 = vmatpush1.msra.mxu0 0.0
        %1856 = vmatprep.subr.mxu0 0.0
        %1857 = vmatpush1.msra.mxu0 0.0
        %1858 = vmatprep.subr.mxu0 0.0
        %1859 = vmatpush1.msra.mxu0 0.0
        %1860 = vmatprep.subr.mxu0 0.0
        %1861 = vmatpush1.msra.mxu0 0.0
        %1862 = vmatprep.subr.mxu0 0.0
        %1863 = vmatpush1.msra.mxu0 0.0
        %1864 = vmatprep.mubr.f32.mxu0 0.0
        %1865 = vmatmul.mubr.f32.gmra.mrb[0].mxu0 %v1798
        %v1866 = vpop.f32.mrb[0].mxu0
        %v1867 = vadd.f32 0.0, %v1866
        %v1868 = vpop.f32.mrb[0].mxu0
        %1869 = vdwg.mxu0
        %v1870 = vld [vmem:[%s5 + $0x20] sm:$0xff]
        %v1871 = vld [vmem:[%s5 + $0x28] sm:$0xff]
        %v1873 = vsel %vm471, %v1867, 0
        %1875 = vmatprep.subr.mxu0 0.0
        %1876 = vmatpush1.msra.mxu0 %v1870
        %1877 = vmatprep.subr.mxu0 0.0
        %1878 = vmatpush1.msra.mxu0 %v1871
        %1879 = vmatprep.subr.mxu0 0.0
        %1880 = vmatpush1.msra.mxu0 0.0
        %1881 = vmatprep.subr.mxu0 0.0
        %1882 = vmatpush1.msra.mxu0 0.0
        %1883 = vmatprep.subr.mxu0 0.0
        %1884 = vmatpush1.msra.mxu0 0.0
        %1885 = vmatprep.subr.mxu0 0.0
        %1886 = vmatpush1.msra.mxu0 0.0
        %1887 = vmatprep.subr.mxu0 0.0
        %1888 = vmatpush1.msra.mxu0 0.0
        %1889 = vmatprep.subr.mxu0 0.0
        %1890 = vmatpush1.msra.mxu0 0.0
        %1891 = vmatprep.subr.mxu0 0.0
        %1892 = vmatpush1.msra.mxu0 0.0
        %1893 = vmatprep.subr.mxu0 0.0
        %1894 = vmatpush1.msra.mxu0 0.0
        %1895 = vmatprep.subr.mxu0 0.0
        %1896 = vmatpush1.msra.mxu0 0.0
        %1897 = vmatprep.subr.mxu0 0.0
        %1898 = vmatpush1.msra.mxu0 0.0
        %1899 = vmatprep.subr.mxu0 0.0
        %1900 = vmatpush1.msra.mxu0 0.0
        %1901 = vmatprep.subr.mxu0 0.0
        %1902 = vmatpush1.msra.mxu0 0.0
        %1903 = vmatprep.subr.mxu0 0.0
        %1904 = vmatpush1.msra.mxu0 0.0
        %1905 = vmatprep.subr.mxu0 0.0
        %1906 = vmatpush1.msra.mxu0 0.0
        %1907 = vmatprep.subr.mxu0 0.0
        %1908 = vmatpush1.msra.mxu0 0.0
        %1909 = vmatprep.subr.mxu0 0.0
        %1910 = vmatpush1.msra.mxu0 0.0
        %1911 = vmatprep.subr.mxu0 0.0
        %1912 = vmatpush1.msra.mxu0 0.0
        %1913 = vmatprep.subr.mxu0 0.0
        %1914 = vmatpush1.msra.mxu0 0.0
        %1915 = vmatprep.subr.mxu0 0.0
        %1916 = vmatpush1.msra.mxu0 0.0
        %1917 = vmatprep.subr.mxu0 0.0
        %1918 = vmatpush1.msra.mxu0 0.0
        %1919 = vmatprep.subr.mxu0 0.0
        %1920 = vmatpush1.msra.mxu0 0.0
        %1921 = vmatprep.subr.mxu0 0.0
        %1922 = vmatpush1.msra.mxu0 0.0
        %1923 = vmatprep.subr.mxu0 0.0
        %1924 = vmatpush1.msra.mxu0 0.0
        %1925 = vmatprep.subr.mxu0 0.0
        %1926 = vmatpush1.msra.mxu0 0.0
        %1927 = vmatprep.subr.mxu0 0.0
        %1928 = vmatpush1.msra.mxu0 0.0
        %1929 = vmatprep.subr.mxu0 0.0
        %1930 = vmatpush1.msra.mxu0 0.0
        %1931 = vmatprep.subr.mxu0 0.0
        %1932 = vmatpush1.msra.mxu0 0.0
        %1933 = vmatprep.subr.mxu0 0.0
        %1934 = vmatpush1.msra.mxu0 0.0
        %1935 = vmatprep.subr.mxu0 0.0
        %1936 = vmatpush1.msra.mxu0 0.0
        %1937 = vmatprep.subr.mxu0 0.0
        %1938 = vmatpush1.msra.mxu0 0.0
        %1939 = vmatprep.mubr.f32.mxu0 0.0
        %1940 = vmatmul.mubr.f32.gmra.mrb[0].mxu0 %v1873
        %v1941 = vpop.f32.mrb[0].mxu0
        %v1942 = vadd.f32 0.0, %v1941
        %v1943 = vpop.f32.mrb[0].mxu0
        %1944 = vdwg.mxu0
        %v1945 = vadd.f32 %v1784, %v1942
        %v1946 = vmul.f32 %v1455, %v1472
        %s1947 = sld [smem:[#allocation5 + $0x3]]
        %v1948 = vstv %s1947
        %v1949 = vmul.f32 %v1946, %v1948
        %s1950 = sld [smem:[#allocation7 + $0x3]]
        %v1951 = vstv %s1950
        %v1952 = vadd.f32 %v1949, %v1951
        %1953 = vrot.lane.b32.xlu0 %v468, 80
        %v1954 = vpop.permute.xlu0 %1953
        %v1957 = vsel %vm549, %v1952, 0
        %1959 = vmatprep.subr.mxu0 0.0
        %1960 = vmatpush1.msra.mxu0 %v1954
        %1961 = vmatprep.subr.mxu0 0.0
        %1962 = vmatpush1.msra.mxu0 0.0
        %1963 = vmatprep.subr.mxu0 0.0
        %1964 = vmatpush1.msra.mxu0 0.0
        %1965 = vmatprep.subr.mxu0 0.0
        %1966 = vmatpush1.msra.mxu0 0.0
        %1967 = vmatprep.subr.mxu0 0.0
        %1968 = vmatpush1.msra.mxu0 0.0
        %1969 = vmatprep.subr.mxu0 0.0
        %1970 = vmatpush1.msra.mxu0 0.0
        %1971 = vmatprep.subr.mxu0 0.0
        %1972 = vmatpush1.msra.mxu0 0.0
        %1973 = vmatprep.subr.mxu0 0.0
        %1974 = vmatpush1.msra.mxu0 0.0
        %1975 = vmatprep.subr.mxu0 0.0
        %1976 = vmatpush1.msra.mxu0 0.0
        %1977 = vmatprep.subr.mxu0 0.0
        %1978 = vmatpush1.msra.mxu0 0.0
        %1979 = vmatprep.subr.mxu0 0.0
        %1980 = vmatpush1.msra.mxu0 0.0
        %1981 = vmatprep.subr.mxu0 0.0
        %1982 = vmatpush1.msra.mxu0 0.0
        %1983 = vmatprep.subr.mxu0 0.0
        %1984 = vmatpush1.msra.mxu0 0.0
        %1985 = vmatprep.subr.mxu0 0.0
        %1986 = vmatpush1.msra.mxu0 0.0
        %1987 = vmatprep.subr.mxu0 0.0
        %1988 = vmatpush1.msra.mxu0 0.0
        %1989 = vmatprep.subr.mxu0 0.0
        %1990 = vmatpush1.msra.mxu0 0.0
        %1991 = vmatprep.subr.mxu0 0.0
        %1992 = vmatpush1.msra.mxu0 0.0
        %1993 = vmatprep.subr.mxu0 0.0
        %1994 = vmatpush1.msra.mxu0 0.0
        %1995 = vmatprep.subr.mxu0 0.0
        %1996 = vmatpush1.msra.mxu0 0.0
        %1997 = vmatprep.subr.mxu0 0.0
        %1998 = vmatpush1.msra.mxu0 0.0
        %1999 = vmatprep.subr.mxu0 0.0
        %2000 = vmatpush1.msra.mxu0 0.0
        %2001 = vmatprep.subr.mxu0 0.0
        %2002 = vmatpush1.msra.mxu0 0.0
        %2003 = vmatprep.subr.mxu0 0.0
        %2004 = vmatpush1.msra.mxu0 0.0
        %2005 = vmatprep.subr.mxu0 0.0
        %2006 = vmatpush1.msra.mxu0 0.0
        %2007 = vmatprep.subr.mxu0 0.0
        %2008 = vmatpush1.msra.mxu0 0.0
        %2009 = vmatprep.subr.mxu0 0.0
        %2010 = vmatpush1.msra.mxu0 0.0
        %2011 = vmatprep.subr.mxu0 0.0
        %2012 = vmatpush1.msra.mxu0 0.0
        %2013 = vmatprep.subr.mxu0 0.0
        %2014 = vmatpush1.msra.mxu0 0.0
        %2015 = vmatprep.subr.mxu0 0.0
        %2016 = vmatpush1.msra.mxu0 0.0
        %2017 = vmatprep.subr.mxu0 0.0
        %2018 = vmatpush1.msra.mxu0 0.0
        %2019 = vmatprep.subr.mxu0 0.0
        %2020 = vmatpush1.msra.mxu0 0.0
        %2021 = vmatprep.subr.mxu0 0.0
        %2022 = vmatpush1.msra.mxu0 0.0
        %2023 = vmatprep.mubr.f32.mxu0 0.0
        %2024 = vmatmul.mubr.f32.gmra.mrb[0].mxu0 %v1957
        %v2025 = vpop.f32.mrb[0].mxu0
        %v2026 = vadd.f32 0.0, %v2025
        %v2027 = vpop.f32.mrb[0].mxu0
        %2028 = vdwg.mxu0
        %v2029 = vld [vmem:[%s5 + $0x30] sm:$0xff]
        %v2030 = vld [vmem:[%s5 + $0x38] sm:$0xff]
        %v2032 = vsel %vm471, %v2026, 0
        %2034 = vmatprep.subr.mxu0 0.0
        %2035 = vmatpush1.msra.mxu0 %v2029
        %2036 = vmatprep.subr.mxu0 0.0
        %2037 = vmatpush1.msra.mxu0 %v2030
        %2038 = vmatprep.subr.mxu0 0.0
        %2039 = vmatpush1.msra.mxu0 0.0
        %2040 = vmatprep.subr.mxu0 0.0
        %2041 = vmatpush1.msra.mxu0 0.0
        %2042 = vmatprep.subr.mxu0 0.0
        %2043 = vmatpush1.msra.mxu0 0.0
        %2044 = vmatprep.subr.mxu0 0.0
        %2045 = vmatpush1.msra.mxu0 0.0
        %2046 = vmatprep.subr.mxu0 0.0
        %2047 = vmatpush1.msra.mxu0 0.0
        %2048 = vmatprep.subr.mxu0 0.0
        %2049 = vmatpush1.msra.mxu0 0.0
        %2050 = vmatprep.subr.mxu0 0.0
        %2051 = vmatpush1.msra.mxu0 0.0
        %2052 = vmatprep.subr.mxu0 0.0
        %2053 = vmatpush1.msra.mxu0 0.0
        %2054 = vmatprep.subr.mxu0 0.0
        %2055 = vmatpush1.msra.mxu0 0.0
        %2056 = vmatprep.subr.mxu0 0.0
        %2057 = vmatpush1.msra.mxu0 0.0
        %2058 = vmatprep.subr.mxu0 0.0
        %2059 = vmatpush1.msra.mxu0 0.0
        %2060 = vmatprep.subr.mxu0 0.0
        %2061 = vmatpush1.msra.mxu0 0.0
        %2062 = vmatprep.subr.mxu0 0.0
        %2063 = vmatpush1.msra.mxu0 0.0
        %2064 = vmatprep.subr.mxu0 0.0
        %2065 = vmatpush1.msra.mxu0 0.0
        %2066 = vmatprep.subr.mxu0 0.0
        %2067 = vmatpush1.msra.mxu0 0.0
        %2068 = vmatprep.subr.mxu0 0.0
        %2069 = vmatpush1.msra.mxu0 0.0
        %2070 = vmatprep.subr.mxu0 0.0
        %2071 = vmatpush1.msra.mxu0 0.0
        %2072 = vmatprep.subr.mxu0 0.0
        %2073 = vmatpush1.msra.mxu0 0.0
        %2074 = vmatprep.subr.mxu0 0.0
        %2075 = vmatpush1.msra.mxu0 0.0
        %2076 = vmatprep.subr.mxu0 0.0
        %2077 = vmatpush1.msra.mxu0 0.0
        %2078 = vmatprep.subr.mxu0 0.0
        %2079 = vmatpush1.msra.mxu0 0.0
        %2080 = vmatprep.subr.mxu0 0.0
        %2081 = vmatpush1.msra.mxu0 0.0
        %2082 = vmatprep.subr.mxu0 0.0
        %2083 = vmatpush1.msra.mxu0 0.0
        %2084 = vmatprep.subr.mxu0 0.0
        %2085 = vmatpush1.msra.mxu0 0.0
        %2086 = vmatprep.subr.mxu0 0.0
        %2087 = vmatpush1.msra.mxu0 0.0
        %2088 = vmatprep.subr.mxu0 0.0
        %2089 = vmatpush1.msra.mxu0 0.0
        %2090 = vmatprep.subr.mxu0 0.0
        %2091 = vmatpush1.msra.mxu0 0.0
        %2092 = vmatprep.subr.mxu0 0.0
        %2093 = vmatpush1.msra.mxu0 0.0
        %2094 = vmatprep.subr.mxu0 0.0
        %2095 = vmatpush1.msra.mxu0 0.0
        %2096 = vmatprep.subr.mxu0 0.0
        %2097 = vmatpush1.msra.mxu0 0.0
        %2098 = vmatprep.mubr.f32.mxu0 0.0
        %2099 = vmatmul.mubr.f32.gmra.mrb[0].mxu0 %v2032
        %v2100 = vpop.f32.mrb[0].mxu0
        %v2101 = vadd.f32 0.0, %v2100
        %v2102 = vpop.f32.mrb[0].mxu0
        %2103 = vdwg.mxu0
        %v2104 = vadd.f32 %v1945, %v2101
        %v2105 = vmul.f32 %v1458, %v1472
        %s2106 = sld [smem:[#allocation5 + $0x4]]
        %v2107 = vstv %s2106
        %v2108 = vmul.f32 %v2105, %v2107
        %s2109 = sld [smem:[#allocation7 + $0x4]]
        %v2110 = vstv %s2109
        %v2111 = vadd.f32 %v2108, %v2110
        %2112 = vrot.lane.b32.xlu0 %v468, 64
        %v2113 = vpop.permute.xlu0 %2112
        %v2116 = vsel %vm549, %v2111, 0
        %2118 = vmatprep.subr.mxu0 0.0
        %2119 = vmatpush1.msra.mxu0 %v2113
        %2120 = vmatprep.subr.mxu0 0.0
        %2121 = vmatpush1.msra.mxu0 0.0
        %2122 = vmatprep.subr.mxu0 0.0
        %2123 = vmatpush1.msra.mxu0 0.0
        %2124 = vmatprep.subr.mxu0 0.0
        %2125 = vmatpush1.msra.mxu0 0.0
        %2126 = vmatprep.subr.mxu0 0.0
        %2127 = vmatpush1.msra.mxu0 0.0
        %2128 = vmatprep.subr.mxu0 0.0
        %2129 = vmatpush1.msra.mxu0 0.0
        %2130 = vmatprep.subr.mxu0 0.0
        %2131 = vmatpush1.msra.mxu0 0.0
        %2132 = vmatprep.subr.mxu0 0.0
        %2133 = vmatpush1.msra.mxu0 0.0
        %2134 = vmatprep.subr.mxu0 0.0
        %2135 = vmatpush1.msra.mxu0 0.0
        %2136 = vmatprep.subr.mxu0 0.0
        %2137 = vmatpush1.msra.mxu0 0.0
        %2138 = vmatprep.subr.mxu0 0.0
        %2139 = vmatpush1.msra.mxu0 0.0
        %2140 = vmatprep.subr.mxu0 0.0
        %2141 = vmatpush1.msra.mxu0 0.0
        %2142 = vmatprep.subr.mxu0 0.0
        %2143 = vmatpush1.msra.mxu0 0.0
        %2144 = vmatprep.subr.mxu0 0.0
        %2145 = vmatpush1.msra.mxu0 0.0
        %2146 = vmatprep.subr.mxu0 0.0
        %2147 = vmatpush1.msra.mxu0 0.0
        %2148 = vmatprep.subr.mxu0 0.0
        %2149 = vmatpush1.msra.mxu0 0.0
        %2150 = vmatprep.subr.mxu0 0.0
        %2151 = vmatpush1.msra.mxu0 0.0
        %2152 = vmatprep.subr.mxu0 0.0
        %2153 = vmatpush1.msra.mxu0 0.0
        %2154 = vmatprep.subr.mxu0 0.0
        %2155 = vmatpush1.msra.mxu0 0.0
        %2156 = vmatprep.subr.mxu0 0.0
        %2157 = vmatpush1.msra.mxu0 0.0
        %2158 = vmatprep.subr.mxu0 0.0
        %2159 = vmatpush1.msra.mxu0 0.0
        %2160 = vmatprep.subr.mxu0 0.0
        %2161 = vmatpush1.msra.mxu0 0.0
        %2162 = vmatprep.subr.mxu0 0.0
        %2163 = vmatpush1.msra.mxu0 0.0
        %2164 = vmatprep.subr.mxu0 0.0
        %2165 = vmatpush1.msra.mxu0 0.0
        %2166 = vmatprep.subr.mxu0 0.0
        %2167 = vmatpush1.msra.mxu0 0.0
        %2168 = vmatprep.subr.mxu0 0.0
        %2169 = vmatpush1.msra.mxu0 0.0
        %2170 = vmatprep.subr.mxu0 0.0
        %2171 = vmatpush1.msra.mxu0 0.0
        %2172 = vmatprep.subr.mxu0 0.0
        %2173 = vmatpush1.msra.mxu0 0.0
        %2174 = vmatprep.subr.mxu0 0.0
        %2175 = vmatpush1.msra.mxu0 0.0
        %2176 = vmatprep.subr.mxu0 0.0
        %2177 = vmatpush1.msra.mxu0 0.0
        %2178 = vmatprep.subr.mxu0 0.0
        %2179 = vmatpush1.msra.mxu0 0.0
        %2180 = vmatprep.subr.mxu0 0.0
        %2181 = vmatpush1.msra.mxu0 0.0
        %2182 = vmatprep.mubr.f32.mxu0 0.0
        %2183 = vmatmul.mubr.f32.gmra.mrb[0].mxu0 %v2116
        %v2184 = vpop.f32.mrb[0].mxu0
        %v2185 = vadd.f32 0.0, %v2184
        %v2186 = vpop.f32.mrb[0].mxu0
        %2187 = vdwg.mxu0
        %v2188 = vld [vmem:[%s5 + $0x40] sm:$0xff]
        %v2189 = vld [vmem:[%s5 + $0x48] sm:$0xff]
        %v2191 = vsel %vm471, %v2185, 0
        %2193 = vmatprep.subr.mxu0 0.0
        %2194 = vmatpush1.msra.mxu0 %v2188
        %2195 = vmatprep.subr.mxu0 0.0
        %2196 = vmatpush1.msra.mxu0 %v2189
        %2197 = vmatprep.subr.mxu0 0.0
        %2198 = vmatpush1.msra.mxu0 0.0
        %2199 = vmatprep.subr.mxu0 0.0
        %2200 = vmatpush1.msra.mxu0 0.0
        %2201 = vmatprep.subr.mxu0 0.0
        %2202 = vmatpush1.msra.mxu0 0.0
        %2203 = vmatprep.subr.mxu0 0.0
        %2204 = vmatpush1.msra.mxu0 0.0
        %2205 = vmatprep.subr.mxu0 0.0
        %2206 = vmatpush1.msra.mxu0 0.0
        %2207 = vmatprep.subr.mxu0 0.0
        %2208 = vmatpush1.msra.mxu0 0.0
        %2209 = vmatprep.subr.mxu0 0.0
        %2210 = vmatpush1.msra.mxu0 0.0
        %2211 = vmatprep.subr.mxu0 0.0
        %2212 = vmatpush1.msra.mxu0 0.0
        %2213 = vmatprep.subr.mxu0 0.0
        %2214 = vmatpush1.msra.mxu0 0.0
        %2215 = vmatprep.subr.mxu0 0.0
        %2216 = vmatpush1.msra.mxu0 0.0
        %2217 = vmatprep.subr.mxu0 0.0
        %2218 = vmatpush1.msra.mxu0 0.0
        %2219 = vmatprep.subr.mxu0 0.0
        %2220 = vmatpush1.msra.mxu0 0.0
        %2221 = vmatprep.subr.mxu0 0.0
        %2222 = vmatpush1.msra.mxu0 0.0
        %2223 = vmatprep.subr.mxu0 0.0
        %2224 = vmatpush1.msra.mxu0 0.0
        %2225 = vmatprep.subr.mxu0 0.0
        %2226 = vmatpush1.msra.mxu0 0.0
        %2227 = vmatprep.subr.mxu0 0.0
        %2228 = vmatpush1.msra.mxu0 0.0
        %2229 = vmatprep.subr.mxu0 0.0
        %2230 = vmatpush1.msra.mxu0 0.0
        %2231 = vmatprep.subr.mxu0 0.0
        %2232 = vmatpush1.msra.mxu0 0.0
        %2233 = vmatprep.subr.mxu0 0.0
        %2234 = vmatpush1.msra.mxu0 0.0
        %2235 = vmatprep.subr.mxu0 0.0
        %2236 = vmatpush1.msra.mxu0 0.0
        %2237 = vmatprep.subr.mxu0 0.0
        %2238 = vmatpush1.msra.mxu0 0.0
        %2239 = vmatprep.subr.mxu0 0.0
        %2240 = vmatpush1.msra.mxu0 0.0
        %2241 = vmatprep.subr.mxu0 0.0
        %2242 = vmatpush1.msra.mxu0 0.0
        %2243 = vmatprep.subr.mxu0 0.0
        %2244 = vmatpush1.msra.mxu0 0.0
        %2245 = vmatprep.subr.mxu0 0.0
        %2246 = vmatpush1.msra.mxu0 0.0
        %2247 = vmatprep.subr.mxu0 0.0
        %2248 = vmatpush1.msra.mxu0 0.0
        %2249 = vmatprep.subr.mxu0 0.0
        %2250 = vmatpush1.msra.mxu0 0.0
        %2251 = vmatprep.subr.mxu0 0.0
        %2252 = vmatpush1.msra.mxu0 0.0
        %2253 = vmatprep.subr.mxu0 0.0
        %2254 = vmatpush1.msra.mxu0 0.0
        %2255 = vmatprep.subr.mxu0 0.0
        %2256 = vmatpush1.msra.mxu0 0.0
        %2257 = vmatprep.mubr.f32.mxu0 0.0
        %2258 = vmatmul.mubr.f32.gmra.mrb[0].mxu0 %v2191
        %v2259 = vpop.f32.mrb[0].mxu0
        %v2260 = vadd.f32 0.0, %v2259
        %v2261 = vpop.f32.mrb[0].mxu0
        %2262 = vdwg.mxu0
        %v2263 = vadd.f32 %v2104, %v2260
        %v2264 = vmul.f32 %v1461, %v1472
        %s2265 = sld [smem:[#allocation5 + $0x5]]
        %v2266 = vstv %s2265
        %v2267 = vmul.f32 %v2264, %v2266
        %s2268 = sld [smem:[#allocation7 + $0x5]]
        %v2269 = vstv %s2268
        %v2270 = vadd.f32 %v2267, %v2269
        %2271 = vrot.lane.b32.xlu0 %v468, 48
        %v2272 = vpop.permute.xlu0 %2271
        %v2275 = vsel %vm549, %v2270, 0
        %2277 = vmatprep.subr.mxu0 0.0
        %2278 = vmatpush1.msra.mxu0 %v2272
        %2279 = vmatprep.subr.mxu0 0.0
        %2280 = vmatpush1.msra.mxu0 0.0
        %2281 = vmatprep.subr.mxu0 0.0
        %2282 = vmatpush1.msra.mxu0 0.0
        %2283 = vmatprep.subr.mxu0 0.0
        %2284 = vmatpush1.msra.mxu0 0.0
        %2285 = vmatprep.subr.mxu0 0.0
        %2286 = vmatpush1.msra.mxu0 0.0
        %2287 = vmatprep.subr.mxu0 0.0
        %2288 = vmatpush1.msra.mxu0 0.0
        %2289 = vmatprep.subr.mxu0 0.0
        %2290 = vmatpush1.msra.mxu0 0.0
        %2291 = vmatprep.subr.mxu0 0.0
        %2292 = vmatpush1.msra.mxu0 0.0
        %2293 = vmatprep.subr.mxu0 0.0
        %2294 = vmatpush1.msra.mxu0 0.0
        %2295 = vmatprep.subr.mxu0 0.0
        %2296 = vmatpush1.msra.mxu0 0.0
        %2297 = vmatprep.subr.mxu0 0.0
        %2298 = vmatpush1.msra.mxu0 0.0
        %2299 = vmatprep.subr.mxu0 0.0
        %2300 = vmatpush1.msra.mxu0 0.0
        %2301 = vmatprep.subr.mxu0 0.0
        %2302 = vmatpush1.msra.mxu0 0.0
        %2303 = vmatprep.subr.mxu0 0.0
        %2304 = vmatpush1.msra.mxu0 0.0
        %2305 = vmatprep.subr.mxu0 0.0
        %2306 = vmatpush1.msra.mxu0 0.0
        %2307 = vmatprep.subr.mxu0 0.0
        %2308 = vmatpush1.msra.mxu0 0.0
        %2309 = vmatprep.subr.mxu0 0.0
        %2310 = vmatpush1.msra.mxu0 0.0
        %2311 = vmatprep.subr.mxu0 0.0
        %2312 = vmatpush1.msra.mxu0 0.0
        %2313 = vmatprep.subr.mxu0 0.0
        %2314 = vmatpush1.msra.mxu0 0.0
        %2315 = vmatprep.subr.mxu0 0.0
        %2316 = vmatpush1.msra.mxu0 0.0
        %2317 = vmatprep.subr.mxu0 0.0
        %2318 = vmatpush1.msra.mxu0 0.0
        %2319 = vmatprep.subr.mxu0 0.0
        %2320 = vmatpush1.msra.mxu0 0.0
        %2321 = vmatprep.subr.mxu0 0.0
        %2322 = vmatpush1.msra.mxu0 0.0
        %2323 = vmatprep.subr.mxu0 0.0
        %2324 = vmatpush1.msra.mxu0 0.0
        %2325 = vmatprep.subr.mxu0 0.0
        %2326 = vmatpush1.msra.mxu0 0.0
        %2327 = vmatprep.subr.mxu0 0.0
        %2328 = vmatpush1.msra.mxu0 0.0
        %2329 = vmatprep.subr.mxu0 0.0
        %2330 = vmatpush1.msra.mxu0 0.0
        %2331 = vmatprep.subr.mxu0 0.0
        %2332 = vmatpush1.msra.mxu0 0.0
        %2333 = vmatprep.subr.mxu0 0.0
        %2334 = vmatpush1.msra.mxu0 0.0
        %2335 = vmatprep.subr.mxu0 0.0
        %2336 = vmatpush1.msra.mxu0 0.0
        %2337 = vmatprep.subr.mxu0 0.0
        %2338 = vmatpush1.msra.mxu0 0.0
        %2339 = vmatprep.subr.mxu0 0.0
        %2340 = vmatpush1.msra.mxu0 0.0
        %2341 = vmatprep.mubr.f32.mxu0 0.0
        %2342 = vmatmul.mubr.f32.gmra.mrb[0].mxu0 %v2275
        %v2343 = vpop.f32.mrb[0].mxu0
        %v2344 = vadd.f32 0.0, %v2343
        %v2345 = vpop.f32.mrb[0].mxu0
        %2346 = vdwg.mxu0
        %v2347 = vld [vmem:[%s5 + $0x50] sm:$0xff]
        %v2348 = vld [vmem:[%s5 + $0x58] sm:$0xff]
        %v2350 = vsel %vm471, %v2344, 0
        %2352 = vmatprep.subr.mxu0 0.0
        %2353 = vmatpush1.msra.mxu0 %v2347
        %2354 = vmatprep.subr.mxu0 0.0
        %2355 = vmatpush1.msra.mxu0 %v2348
        %2356 = vmatprep.subr.mxu0 0.0
        %2357 = vmatpush1.msra.mxu0 0.0
        %2358 = vmatprep.subr.mxu0 0.0
        %2359 = vmatpush1.msra.mxu0 0.0
        %2360 = vmatprep.subr.mxu0 0.0
        %2361 = vmatpush1.msra.mxu0 0.0
        %2362 = vmatprep.subr.mxu0 0.0
        %2363 = vmatpush1.msra.mxu0 0.0
        %2364 = vmatprep.subr.mxu0 0.0
        %2365 = vmatpush1.msra.mxu0 0.0
        %2366 = vmatprep.subr.mxu0 0.0
        %2367 = vmatpush1.msra.mxu0 0.0
        %2368 = vmatprep.subr.mxu0 0.0
        %2369 = vmatpush1.msra.mxu0 0.0
        %2370 = vmatprep.subr.mxu0 0.0
        %2371 = vmatpush1.msra.mxu0 0.0
        %2372 = vmatprep.subr.mxu0 0.0
        %2373 = vmatpush1.msra.mxu0 0.0
        %2374 = vmatprep.subr.mxu0 0.0
        %2375 = vmatpush1.msra.mxu0 0.0
        %2376 = vmatprep.subr.mxu0 0.0
        %2377 = vmatpush1.msra.mxu0 0.0
        %2378 = vmatprep.subr.mxu0 0.0
        %2379 = vmatpush1.msra.mxu0 0.0
        %2380 = vmatprep.subr.mxu0 0.0
        %2381 = vmatpush1.msra.mxu0 0.0
        %2382 = vmatprep.subr.mxu0 0.0
        %2383 = vmatpush1.msra.mxu0 0.0
        %2384 = vmatprep.subr.mxu0 0.0
        %2385 = vmatpush1.msra.mxu0 0.0
        %2386 = vmatprep.subr.mxu0 0.0
        %2387 = vmatpush1.msra.mxu0 0.0
        %2388 = vmatprep.subr.mxu0 0.0
        %2389 = vmatpush1.msra.mxu0 0.0
        %2390 = vmatprep.subr.mxu0 0.0
        %2391 = vmatpush1.msra.mxu0 0.0
        %2392 = vmatprep.subr.mxu0 0.0
        %2393 = vmatpush1.msra.mxu0 0.0
        %2394 = vmatprep.subr.mxu0 0.0
        %2395 = vmatpush1.msra.mxu0 0.0
        %2396 = vmatprep.subr.mxu0 0.0
        %2397 = vmatpush1.msra.mxu0 0.0
        %2398 = vmatprep.subr.mxu0 0.0
        %2399 = vmatpush1.msra.mxu0 0.0
        %2400 = vmatprep.subr.mxu0 0.0
        %2401 = vmatpush1.msra.mxu0 0.0
        %2402 = vmatprep.subr.mxu0 0.0
        %2403 = vmatpush1.msra.mxu0 0.0
        %2404 = vmatprep.subr.mxu0 0.0
        %2405 = vmatpush1.msra.mxu0 0.0
        %2406 = vmatprep.subr.mxu0 0.0
        %2407 = vmatpush1.msra.mxu0 0.0
        %2408 = vmatprep.subr.mxu0 0.0
        %2409 = vmatpush1.msra.mxu0 0.0
        %2410 = vmatprep.subr.mxu0 0.0
        %2411 = vmatpush1.msra.mxu0 0.0
        %2412 = vmatprep.subr.mxu0 0.0
        %2413 = vmatpush1.msra.mxu0 0.0
        %2414 = vmatprep.subr.mxu0 0.0
        %2415 = vmatpush1.msra.mxu0 0.0
        %2416 = vmatprep.mubr.f32.mxu0 0.0
        %2417 = vmatmul.mubr.f32.gmra.mrb[0].mxu0 %v2350
        %v2418 = vpop.f32.mrb[0].mxu0
        %v2419 = vadd.f32 0.0, %v2418
        %v2420 = vpop.f32.mrb[0].mxu0
        %2421 = vdwg.mxu0
        %v2422 = vadd.f32 %v2263, %v2419
        %v2423 = vmul.f32 %v1464, %v1472
        %s2424 = sld [smem:[#allocation5 + $0x6]]
        %v2425 = vstv %s2424
        %v2426 = vmul.f32 %v2423, %v2425
        %s2427 = sld [smem:[#allocation7 + $0x6]]
        %v2428 = vstv %s2427
        %v2429 = vadd.f32 %v2426, %v2428
        %2430 = vrot.lane.b32.xlu0 %v468, 32
        %v2431 = vpop.permute.xlu0 %2430
        %v2434 = vsel %vm549, %v2429, 0
        %2436 = vmatprep.subr.mxu0 0.0
        %2437 = vmatpush1.msra.mxu0 %v2431
        %2438 = vmatprep.subr.mxu0 0.0
        %2439 = vmatpush1.msra.mxu0 0.0
        %2440 = vmatprep.subr.mxu0 0.0
        %2441 = vmatpush1.msra.mxu0 0.0
        %2442 = vmatprep.subr.mxu0 0.0
        %2443 = vmatpush1.msra.mxu0 0.0
        %2444 = vmatprep.subr.mxu0 0.0
        %2445 = vmatpush1.msra.mxu0 0.0
        %2446 = vmatprep.subr.mxu0 0.0
        %2447 = vmatpush1.msra.mxu0 0.0
        %2448 = vmatprep.subr.mxu0 0.0
        %2449 = vmatpush1.msra.mxu0 0.0
        %2450 = vmatprep.subr.mxu0 0.0
        %2451 = vmatpush1.msra.mxu0 0.0
        %2452 = vmatprep.subr.mxu0 0.0
        %2453 = vmatpush1.msra.mxu0 0.0
        %2454 = vmatprep.subr.mxu0 0.0
        %2455 = vmatpush1.msra.mxu0 0.0
        %2456 = vmatprep.subr.mxu0 0.0
        %2457 = vmatpush1.msra.mxu0 0.0
        %2458 = vmatprep.subr.mxu0 0.0
        %2459 = vmatpush1.msra.mxu0 0.0
        %2460 = vmatprep.subr.mxu0 0.0
        %2461 = vmatpush1.msra.mxu0 0.0
        %2462 = vmatprep.subr.mxu0 0.0
        %2463 = vmatpush1.msra.mxu0 0.0
        %2464 = vmatprep.subr.mxu0 0.0
        %2465 = vmatpush1.msra.mxu0 0.0
        %2466 = vmatprep.subr.mxu0 0.0
        %2467 = vmatpush1.msra.mxu0 0.0
        %2468 = vmatprep.subr.mxu0 0.0
        %2469 = vmatpush1.msra.mxu0 0.0
        %2470 = vmatprep.subr.mxu0 0.0
        %2471 = vmatpush1.msra.mxu0 0.0
        %2472 = vmatprep.subr.mxu0 0.0
        %2473 = vmatpush1.msra.mxu0 0.0
        %2474 = vmatprep.subr.mxu0 0.0
        %2475 = vmatpush1.msra.mxu0 0.0
        %2476 = vmatprep.subr.mxu0 0.0
        %2477 = vmatpush1.msra.mxu0 0.0
        %2478 = vmatprep.subr.mxu0 0.0
        %2479 = vmatpush1.msra.mxu0 0.0
        %2480 = vmatprep.subr.mxu0 0.0
        %2481 = vmatpush1.msra.mxu0 0.0
        %2482 = vmatprep.subr.mxu0 0.0
        %2483 = vmatpush1.msra.mxu0 0.0
        %2484 = vmatprep.subr.mxu0 0.0
        %2485 = vmatpush1.msra.mxu0 0.0
        %2486 = vmatprep.subr.mxu0 0.0
        %2487 = vmatpush1.msra.mxu0 0.0
        %2488 = vmatprep.subr.mxu0 0.0
        %2489 = vmatpush1.msra.mxu0 0.0
        %2490 = vmatprep.subr.mxu0 0.0
        %2491 = vmatpush1.msra.mxu0 0.0
        %2492 = vmatprep.subr.mxu0 0.0
        %2493 = vmatpush1.msra.mxu0 0.0
        %2494 = vmatprep.subr.mxu0 0.0
        %2495 = vmatpush1.msra.mxu0 0.0
        %2496 = vmatprep.subr.mxu0 0.0
        %2497 = vmatpush1.msra.mxu0 0.0
        %2498 = vmatprep.subr.mxu0 0.0
        %2499 = vmatpush1.msra.mxu0 0.0
        %2500 = vmatprep.mubr.f32.mxu0 0.0
        %2501 = vmatmul.mubr.f32.gmra.mrb[0].mxu0 %v2434
        %v2502 = vpop.f32.mrb[0].mxu0
        %v2503 = vadd.f32 0.0, %v2502
        %v2504 = vpop.f32.mrb[0].mxu0
        %2505 = vdwg.mxu0
        %v2506 = vld [vmem:[%s5 + $0x60] sm:$0xff]
        %v2507 = vld [vmem:[%s5 + $0x68] sm:$0xff]
        %v2509 = vsel %vm471, %v2503, 0
        %2511 = vmatprep.subr.mxu0 0.0
        %2512 = vmatpush1.msra.mxu0 %v2506
        %2513 = vmatprep.subr.mxu0 0.0
        %2514 = vmatpush1.msra.mxu0 %v2507
        %2515 = vmatprep.subr.mxu0 0.0
        %2516 = vmatpush1.msra.mxu0 0.0
        %2517 = vmatprep.subr.mxu0 0.0
        %2518 = vmatpush1.msra.mxu0 0.0
        %2519 = vmatprep.subr.mxu0 0.0
        %2520 = vmatpush1.msra.mxu0 0.0
        %2521 = vmatprep.subr.mxu0 0.0
        %2522 = vmatpush1.msra.mxu0 0.0
        %2523 = vmatprep.subr.mxu0 0.0
        %2524 = vmatpush1.msra.mxu0 0.0
        %2525 = vmatprep.subr.mxu0 0.0
        %2526 = vmatpush1.msra.mxu0 0.0
        %2527 = vmatprep.subr.mxu0 0.0
        %2528 = vmatpush1.msra.mxu0 0.0
        %2529 = vmatprep.subr.mxu0 0.0
        %2530 = vmatpush1.msra.mxu0 0.0
        %2531 = vmatprep.subr.mxu0 0.0
        %2532 = vmatpush1.msra.mxu0 0.0
        %2533 = vmatprep.subr.mxu0 0.0
        %2534 = vmatpush1.msra.mxu0 0.0
        %2535 = vmatprep.subr.mxu0 0.0
        %2536 = vmatpush1.msra.mxu0 0.0
        %2537 = vmatprep.subr.mxu0 0.0
        %2538 = vmatpush1.msra.mxu0 0.0
        %2539 = vmatprep.subr.mxu0 0.0
        %2540 = vmatpush1.msra.mxu0 0.0
        %2541 = vmatprep.subr.mxu0 0.0
        %2542 = vmatpush1.msra.mxu0 0.0
        %2543 = vmatprep.subr.mxu0 0.0
        %2544 = vmatpush1.msra.mxu0 0.0
        %2545 = vmatprep.subr.mxu0 0.0
        %2546 = vmatpush1.msra.mxu0 0.0
        %2547 = vmatprep.subr.mxu0 0.0
        %2548 = vmatpush1.msra.mxu0 0.0
        %2549 = vmatprep.subr.mxu0 0.0
        %2550 = vmatpush1.msra.mxu0 0.0
        %2551 = vmatprep.subr.mxu0 0.0
        %2552 = vmatpush1.msra.mxu0 0.0
        %2553 = vmatprep.subr.mxu0 0.0
        %2554 = vmatpush1.msra.mxu0 0.0
        %2555 = vmatprep.subr.mxu0 0.0
        %2556 = vmatpush1.msra.mxu0 0.0
        %2557 = vmatprep.subr.mxu0 0.0
        %2558 = vmatpush1.msra.mxu0 0.0
        %2559 = vmatprep.subr.mxu0 0.0
        %2560 = vmatpush1.msra.mxu0 0.0
        %2561 = vmatprep.subr.mxu0 0.0
        %2562 = vmatpush1.msra.mxu0 0.0
        %2563 = vmatprep.subr.mxu0 0.0
        %2564 = vmatpush1.msra.mxu0 0.0
        %2565 = vmatprep.subr.mxu0 0.0
        %2566 = vmatpush1.msra.mxu0 0.0
        %2567 = vmatprep.subr.mxu0 0.0
        %2568 = vmatpush1.msra.mxu0 0.0
        %2569 = vmatprep.subr.mxu0 0.0
        %2570 = vmatpush1.msra.mxu0 0.0
        %2571 = vmatprep.subr.mxu0 0.0
        %2572 = vmatpush1.msra.mxu0 0.0
        %2573 = vmatprep.subr.mxu0 0.0
        %2574 = vmatpush1.msra.mxu0 0.0
        %2575 = vmatprep.mubr.f32.mxu0 0.0
        %2576 = vmatmul.mubr.f32.gmra.mrb[0].mxu0 %v2509
        %v2577 = vpop.f32.mrb[0].mxu0
        %v2578 = vadd.f32 0.0, %v2577
        %v2579 = vpop.f32.mrb[0].mxu0
        %2580 = vdwg.mxu0
        %v2581 = vadd.f32 %v2422, %v2578
        %v2582 = vmul.f32 %v1467, %v1472
        %s2583 = sld [smem:[#allocation5 + $0x7]]
        %v2584 = vstv %s2583
        %v2585 = vmul.f32 %v2582, %v2584
        %s2586 = sld [smem:[#allocation7 + $0x7]]
        %v2587 = vstv %s2586
        %v2588 = vadd.f32 %v2585, %v2587
        %2589 = vrot.lane.b32.xlu0 %v468, 16
        %v2590 = vpop.permute.xlu0 %2589
        %v2593 = vsel %vm549, %v2588, 0
        %2595 = vmatprep.subr.mxu0 0.0
        %2596 = vmatpush1.msra.mxu0 %v2590
        %2597 = vmatprep.subr.mxu0 0.0
        %2598 = vmatpush1.msra.mxu0 0.0
        %2599 = vmatprep.subr.mxu0 0.0
        %2600 = vmatpush1.msra.mxu0 0.0
        %2601 = vmatprep.subr.mxu0 0.0
        %2602 = vmatpush1.msra.mxu0 0.0
        %2603 = vmatprep.subr.mxu0 0.0
        %2604 = vmatpush1.msra.mxu0 0.0
        %2605 = vmatprep.subr.mxu0 0.0
        %2606 = vmatpush1.msra.mxu0 0.0
        %2607 = vmatprep.subr.mxu0 0.0
        %2608 = vmatpush1.msra.mxu0 0.0
        %2609 = vmatprep.subr.mxu0 0.0
        %2610 = vmatpush1.msra.mxu0 0.0
        %2611 = vmatprep.subr.mxu0 0.0
        %2612 = vmatpush1.msra.mxu0 0.0
        %2613 = vmatprep.subr.mxu0 0.0
        %2614 = vmatpush1.msra.mxu0 0.0
        %2615 = vmatprep.subr.mxu0 0.0
        %2616 = vmatpush1.msra.mxu0 0.0
        %2617 = vmatprep.subr.mxu0 0.0
        %2618 = vmatpush1.msra.mxu0 0.0
        %2619 = vmatprep.subr.mxu0 0.0
        %2620 = vmatpush1.msra.mxu0 0.0
        %2621 = vmatprep.subr.mxu0 0.0
        %2622 = vmatpush1.msra.mxu0 0.0
        %2623 = vmatprep.subr.mxu0 0.0
        %2624 = vmatpush1.msra.mxu0 0.0
        %2625 = vmatprep.subr.mxu0 0.0
        %2626 = vmatpush1.msra.mxu0 0.0
        %2627 = vmatprep.subr.mxu0 0.0
        %2628 = vmatpush1.msra.mxu0 0.0
        %2629 = vmatprep.subr.mxu0 0.0
        %2630 = vmatpush1.msra.mxu0 0.0
        %2631 = vmatprep.subr.mxu0 0.0
        %2632 = vmatpush1.msra.mxu0 0.0
        %2633 = vmatprep.subr.mxu0 0.0
        %2634 = vmatpush1.msra.mxu0 0.0
        %2635 = vmatprep.subr.mxu0 0.0
        %2636 = vmatpush1.msra.mxu0 0.0
        %2637 = vmatprep.subr.mxu0 0.0
        %2638 = vmatpush1.msra.mxu0 0.0
        %2639 = vmatprep.subr.mxu0 0.0
        %2640 = vmatpush1.msra.mxu0 0.0
        %2641 = vmatprep.subr.mxu0 0.0
        %2642 = vmatpush1.msra.mxu0 0.0
        %2643 = vmatprep.subr.mxu0 0.0
        %2644 = vmatpush1.msra.mxu0 0.0
        %2645 = vmatprep.subr.mxu0 0.0
        %2646 = vmatpush1.msra.mxu0 0.0
        %2647 = vmatprep.subr.mxu0 0.0
        %2648 = vmatpush1.msra.mxu0 0.0
        %2649 = vmatprep.subr.mxu0 0.0
        %2650 = vmatpush1.msra.mxu0 0.0
        %2651 = vmatprep.subr.mxu0 0.0
        %2652 = vmatpush1.msra.mxu0 0.0
        %2653 = vmatprep.subr.mxu0 0.0
        %2654 = vmatpush1.msra.mxu0 0.0
        %2655 = vmatprep.subr.mxu0 0.0
        %2656 = vmatpush1.msra.mxu0 0.0
        %2657 = vmatprep.subr.mxu0 0.0
        %2658 = vmatpush1.msra.mxu0 0.0
        %2659 = vmatprep.mubr.f32.mxu0 0.0
        %2660 = vmatmul.mubr.f32.gmra.mrb[0].mxu0 %v2593
        %v2661 = vpop.f32.mrb[0].mxu0
        %v2662 = vadd.f32 0.0, %v2661
        %v2663 = vpop.f32.mrb[0].mxu0
        %2664 = vdwg.mxu0
        %v2665 = vld [vmem:[%s5 + $0x70] sm:$0xff]
        %v2666 = vld [vmem:[%s5 + $0x78] sm:$0xff]
        %v2668 = vsel %vm471, %v2662, 0
        %2670 = vmatprep.subr.mxu0 0.0
        %2671 = vmatpush1.msra.mxu0 %v2665
        %2672 = vmatprep.subr.mxu0 0.0
        %2673 = vmatpush1.msra.mxu0 %v2666
        %2674 = vmatprep.subr.mxu0 0.0
        %2675 = vmatpush1.msra.mxu0 0.0
        %2676 = vmatprep.subr.mxu0 0.0
        %2677 = vmatpush1.msra.mxu0 0.0
        %2678 = vmatprep.subr.mxu0 0.0
        %2679 = vmatpush1.msra.mxu0 0.0
        %2680 = vmatprep.subr.mxu0 0.0
        %2681 = vmatpush1.msra.mxu0 0.0
        %2682 = vmatprep.subr.mxu0 0.0
        %2683 = vmatpush1.msra.mxu0 0.0
        %2684 = vmatprep.subr.mxu0 0.0
        %2685 = vmatpush1.msra.mxu0 0.0
        %2686 = vmatprep.subr.mxu0 0.0
        %2687 = vmatpush1.msra.mxu0 0.0
        %2688 = vmatprep.subr.mxu0 0.0
        %2689 = vmatpush1.msra.mxu0 0.0
        %2690 = vmatprep.subr.mxu0 0.0
        %2691 = vmatpush1.msra.mxu0 0.0
        %2692 = vmatprep.subr.mxu0 0.0
        %2693 = vmatpush1.msra.mxu0 0.0
        %2694 = vmatprep.subr.mxu0 0.0
        %2695 = vmatpush1.msra.mxu0 0.0
        %2696 = vmatprep.subr.mxu0 0.0
        %2697 = vmatpush1.msra.mxu0 0.0
        %2698 = vmatprep.subr.mxu0 0.0
        %2699 = vmatpush1.msra.mxu0 0.0
        %2700 = vmatprep.subr.mxu0 0.0
        %2701 = vmatpush1.msra.mxu0 0.0
        %2702 = vmatprep.subr.mxu0 0.0
        %2703 = vmatpush1.msra.mxu0 0.0
        %2704 = vmatprep.subr.mxu0 0.0
        %2705 = vmatpush1.msra.mxu0 0.0
        %2706 = vmatprep.subr.mxu0 0.0
        %2707 = vmatpush1.msra.mxu0 0.0
        %2708 = vmatprep.subr.mxu0 0.0
        %2709 = vmatpush1.msra.mxu0 0.0
        %2710 = vmatprep.subr.mxu0 0.0
        %2711 = vmatpush1.msra.mxu0 0.0
        %2712 = vmatprep.subr.mxu0 0.0
        %2713 = vmatpush1.msra.mxu0 0.0
        %2714 = vmatprep.subr.mxu0 0.0
        %2715 = vmatpush1.msra.mxu0 0.0
        %2716 = vmatprep.subr.mxu0 0.0
        %2717 = vmatpush1.msra.mxu0 0.0
        %2718 = vmatprep.subr.mxu0 0.0
        %2719 = vmatpush1.msra.mxu0 0.0
        %2720 = vmatprep.subr.mxu0 0.0
        %2721 = vmatpush1.msra.mxu0 0.0
        %2722 = vmatprep.subr.mxu0 0.0
        %2723 = vmatpush1.msra.mxu0 0.0
        %2724 = vmatprep.subr.mxu0 0.0
        %2725 = vmatpush1.msra.mxu0 0.0
        %2726 = vmatprep.subr.mxu0 0.0
        %2727 = vmatpush1.msra.mxu0 0.0
        %2728 = vmatprep.subr.mxu0 0.0
        %2729 = vmatpush1.msra.mxu0 0.0
        %2730 = vmatprep.subr.mxu0 0.0
        %2731 = vmatpush1.msra.mxu0 0.0
        %2732 = vmatprep.subr.mxu0 0.0
        %2733 = vmatpush1.msra.mxu0 0.0
        %2734 = vmatprep.mubr.f32.mxu0 0.0
        %2735 = vmatmul.mubr.f32.gmra.mrb[0].mxu0 %v2668
        %v2736 = vpop.f32.mrb[0].mxu0
        %v2737 = vadd.f32 0.0, %v2736
        %v2738 = vpop.f32.mrb[0].mxu0
        %2739 = vdwg.mxu0
        %v2740 = vadd.f32 %v2581, %v2737
        %v2741 = vld [vmem:[%s6] sm:$0x1]
        %v2743 = vlaneseq
        %v2744 = vshrl.u32 %v2743, 7
        %v2745 = vsub.s32 0, %v2744
        %v2746 = vrot.slane %v2741, %v2745
        %v2748 = vadd.f32 %v2740, %v2746
        %2749 = vst.msk [vmem:[%s308] sm:$0xff] %vm326, %v2748
        %s2750 = sand.u32 %s183, 1
        %s2751 = scalar_lea.sflag [#allocation3], %s2750
        %s2752 = sand.u32 %s183, 1
        %s2753 = smul.addr %s2752, 8
        %s2754 = scalar_lea.vmem [#allocation8], %s2753
        // Predicated region
        $region61: #{tpu_custom_call.1} parent=47 // pred_check
          %p2755 = pneg %p193
        $region62: #{tpu_custom_call.1} parent=47 // pred_check_branch
          %2757 = sbr.rel (%p2755) target = $region64
        $region63: #{tpu_custom_call.1} parent=47 // pred_region
          %s2759 = ssub.s32 128, 128
          %2760 = vsyncadd %s2751, %s2759
          %s2761 = smul.addr %s23, 128
          %s2762 = scalar_lea.hbm %s7, %s2761
          %s2764 = sshll.u32 %s2754, 4
          %s2765 = int_to_ptr.vmem [resolvable:$true] %s2764
          %2767 = dma.vmem_to_hbm [thread:$0]  %s2765, 128, %s2762, %s2751
        $region64: #{tpu_custom_call.1} parent=47 // pred_fallthru
          _
      $region48: #{tpu_custom_call.1} parent=5 // pred_fallthru
        _
      %p2768 = scmp.le.s32.totalorder 2, %s18
      // Predicated region
      $region65: #{tpu_custom_call.1} parent=5 // pred_check
        %p2769 = pneg %p2768
      $region66: #{tpu_custom_call.1} parent=5 // pred_check_branch
        %2771 = sbr.rel (%p2769) target = $region68
      $region67: #{tpu_custom_call.1} parent=5 // pred_region
        %s2772 = ssub.s32 %s18, 2
        // Predicated region
        $region69: #{tpu_custom_call.1} parent=67 // pred_check
          %p2773 = pneg %p199
        $region70: #{tpu_custom_call.1} parent=67 // pred_check_branch
          %2775 = sbr.rel (%p2773) target = $region72
        $region71: #{tpu_custom_call.1} parent=67 // pred_region
          %s2776 = sand.u32 %s184, 1
          %s2777 = scalar_lea.sflag [#allocation3], %s2776
          %s2778 = sand.u32 %s184, 1
          %s2779 = smul.addr %s2778, 8
          %s2780 = scalar_lea.vmem [#allocation8], %s2779
          %2781 = dma.done %s2777, 128
        $region72: #{tpu_custom_call.1} parent=67 // pred_fallthru
          _
      $region68: #{tpu_custom_call.1} parent=5 // pred_fallthru
        _
    $region6: #{tpu_custom_call.1} parent=1 // loop_footer
      %s22 = sadd.s32 1, %s18
    $region7: #{tpu_custom_call.1} parent=1 // loop_footer_branch
      %17 = sbr.rel target = $region3
    $region8: #{tpu_custom_call.1} parent=1 // loop_exit
      _
    %2782 = vsyncpa [#allocation3], 1
    %s2783 = scalar_lea.sflag [#allocation3], 1
    %2784 = vsyncpa %s2783, 1
    %2785 = vsyncpa [#allocation4], 1
    %s2786 = scalar_lea.sflag [#allocation4], 1
    %2787 = vsyncpa %s2786, 1
    %2788 = vsyncpa [#allocation6], 1

</llo_original>
